<compile_context>
chip_gen: v7x
topology: tpu7x:2x2x1
jax: 0.10.0
libtpu: 0.0.40
codegen_flags: <defaults>
</compile_context>

<pallas_src>
import jax
import jax.numpy as jnp
from jax.experimental import pallas as pl
from jax.experimental.pallas import tpu as pltpu

NODE_DIM = 4
HIDDEN = 128
NUM_LAYERS = 4
OUT_DIM = 1
BN_EPS = 1e-5


def gcn_block_kernel(adj_ref, x_ref, snorm_ref,
                     we_ref, be_ref,
                     wl_ref, bl_ref, gamma_ref, beta_ref,
                     hg_ref):
    """One grid step = a block of B graphs (each with N nodes)."""
    B, N, _ = adj_ref.shape            # (B, N, N) bf16 normalized adjacency
    BN = B * N

    adj = adj_ref[...]                 # (B, N, N)  bf16
    snorm = snorm_ref[...]             # (BN, 1)    f32   (DGL snorm_n)

    # embedding_h: one (B*N, 4) @ (4, 128) GEMM for the whole block.
    h = jnp.dot(x_ref[...], we_ref[...],
                preferred_element_type=jnp.float32) + be_ref[...]      # (BN, H) f32

    for l in range(NUM_LAYERS):        # static unroll over the 4 GCN layers
        # Feature transform: fused (B*N,128)@(128,128) bf16 GEMM, f32 accumulate.
        hw = jnp.dot(h.astype(jnp.bfloat16), wl_ref[l],
                     preferred_element_type=jnp.float32)               # (BN, H) f32
        # Neighborhood aggregation: batched A_hat @ (h W) over the B graphs.
        agg = jnp.einsum('gij,gjd->gid', adj,
                         hw.reshape(B, N, HIDDEN).astype(jnp.bfloat16),
                         preferred_element_type=jnp.float32)           # (B, N, H) f32
        h1 = agg.reshape(BN, HIDDEN) + bl_ref[l]                       # + bias (1, H)
        h1 = h1 * snorm                                                # graph norm
        # BatchNorm1d (eval mode); 1/sqrt(var+eps) already folded into gamma.
        h1 = h1 * gamma_ref[l] + beta_ref[l]
        h1 = jnp.maximum(h1, 0.0)                                      # ReLU
        h = h + h1                                                     # residual
        # dropout(p=0.0) -> identity

    # dgl.mean_nodes: mean over the N nodes of each graph -> lane-dense (B, H).
    # TODO(synk): assumes every graph has exactly N real nodes (no padding mask).
    hg_ref[...] = jnp.mean(h.reshape(B, N, HIDDEN), axis=1)


def my_gcn_net(adj, nodes_feat, edges_feat, nodes_num_norm_sqrt,
               edges_num_norm_sqrt, params, *, graphs_per_block=16):
    # edges_feat / edges_num_norm_sqrt are unused by this GraphConv-style
    # forward (see header TODO) — accepted only for interface fidelity.
    del edges_feat, edges_num_norm_sqrt
    we, be, wl, bl, gamma, beta, wr = params
    G, N, _ = adj.shape

    B = min(graphs_per_block, G)
    G_pad = ((G + B - 1) // B) * B
    if G_pad != G:
        pad = G_pad - G
        adj = jnp.pad(adj, ((0, pad), (0, 0), (0, 0)))
        nodes_feat = jnp.pad(nodes_feat, ((0, pad), (0, 0), (0, 0)))
        nodes_num_norm_sqrt = jnp.pad(nodes_num_norm_sqrt,
                                      ((0, pad), (0, 0), (0, 0)))

    # bf16 adjacency stream (halves the dominant HBM traffic), bf16 layer weights.
    adj_bf16 = adj.astype(jnp.bfloat16)
    wl_bf16 = wl.astype(jnp.bfloat16)
    # Flat node layouts so all elementwise work in-kernel is plain 2D.
    x_flat = nodes_feat.reshape(G_pad * N, NODE_DIM).astype(jnp.float32)
    snorm_flat = nodes_num_norm_sqrt.reshape(G_pad * N, 1).astype(jnp.float32)
    # Fold eval-mode BatchNorm (running mean=0, var=1) into gamma.
    # TODO(synk): trained running statistics would be folded here the same way.
    gamma_eff = (gamma / jnp.sqrt(1.0 + BN_EPS)).reshape(NUM_LAYERS, 1, HIDDEN)
    beta_r = beta.reshape(NUM_LAYERS, 1, HIDDEN)
    bl_r = bl.reshape(NUM_LAYERS, 1, HIDDEN)

    hg = pl.pallas_call(
        gcn_block_kernel,
        out_shape=jax.ShapeDtypeStruct((G_pad, HIDDEN), jnp.float32),
        grid_spec=pltpu.PrefetchScalarGridSpec(
            num_scalar_prefetch=0,
            grid=(G_pad // B,),
            in_specs=[
                pl.BlockSpec((B, N, N), lambda g: (g, 0, 0)),             # adj (bf16)
                pl.BlockSpec((B * N, NODE_DIM), lambda g: (g, 0)),        # node feats
                pl.BlockSpec((B * N, 1), lambda g: (g, 0)),               # snorm_n
                pl.BlockSpec((NODE_DIM, HIDDEN), lambda g: (0, 0)),       # We
                pl.BlockSpec((1, HIDDEN), lambda g: (0, 0)),              # be
                pl.BlockSpec((NUM_LAYERS, HIDDEN, HIDDEN),
                             lambda g: (0, 0, 0)),                        # Wl (bf16)
                pl.BlockSpec((NUM_LAYERS, 1, HIDDEN),
                             lambda g: (0, 0, 0)),                        # bl
                pl.BlockSpec((NUM_LAYERS, 1, HIDDEN),
                             lambda g: (0, 0, 0)),                        # gamma (folded)
                pl.BlockSpec((NUM_LAYERS, 1, HIDDEN),
                             lambda g: (0, 0, 0)),                        # beta
            ],
            out_specs=pl.BlockSpec((B, HIDDEN), lambda g: (g, 0)),        # hg (lane-dense)
        ),
        compiler_params=pltpu.CompilerParams(
            dimension_semantics=("parallel",)),
    )(adj_bf16, x_flat, snorm_flat, we, be, wl_bf16, bl_r, gamma_eff, beta_r)

    hg = hg[:G]                                   # drop padded graphs
    logits = jnp.dot(hg, wr)                      # readout_mlp (no bias) in XLA
    return logits


def init_params(key):
    ks = jax.random.split(key, 4 + 2 * NUM_LAYERS)
    we = jax.random.normal(ks[0], (NODE_DIM, HIDDEN), jnp.float32) * (1.0 / jnp.sqrt(NODE_DIM))
    be = jax.random.normal(ks[1], (1, HIDDEN), jnp.float32) * 0.01
    wl = jnp.stack([jax.random.normal(ks[2 + l], (HIDDEN, HIDDEN), jnp.float32)
                    * (1.0 / jnp.sqrt(HIDDEN)) for l in range(NUM_LAYERS)])
    bl = jnp.stack([jax.random.normal(ks[2 + NUM_LAYERS + l], (HIDDEN,), jnp.float32) * 0.01
                    for l in range(NUM_LAYERS)])
    gamma = jnp.ones((NUM_LAYERS, HIDDEN), jnp.float32)
    beta = jnp.zeros((NUM_LAYERS, HIDDEN), jnp.float32)
    wr = jax.random.normal(ks[2 + 2 * NUM_LAYERS], (HIDDEN, OUT_DIM), jnp.float32) \
        * (1.0 / jnp.sqrt(HIDDEN))
    return we, be, wl, bl, gamma, beta, wr


def make_graph_batch(key, G, N):
    """Deterministic synthetic batched graph: dense normalized adjacency."""
    k_adj, k_x, k_e = jax.random.split(key, 3)
    raw = jax.random.uniform(k_adj, (G, N, N)) < 0.3
    a = jnp.logical_or(raw, jnp.transpose(raw, (0, 2, 1))).astype(jnp.float32)
    a = a + jnp.eye(N, dtype=jnp.float32)[None]
    deg = jnp.sum(a, axis=-1)                                   # (G, N)
    d_inv_sqrt = 1.0 / jnp.sqrt(deg)
    adj = a * d_inv_sqrt[:, :, None] * d_inv_sqrt[:, None, :]   # D^-1/2 (A+I) D^-1/2
    nodes_feat = jax.random.normal(k_x, (G, N, NODE_DIM), jnp.float32)
    edges_feat = jax.random.normal(k_e, (G, N * N, 1), jnp.float32)  # unused
    nodes_num_norm_sqrt = jnp.full((G, N, 1), 1.0 / jnp.sqrt(N), jnp.float32)
    edges_num_norm_sqrt = jnp.full((G, N * N, 1), 1.0 / N, jnp.float32)  # unused
    return adj, nodes_feat, edges_feat, nodes_num_norm_sqrt, edges_num_norm_sqrt


if __name__ == "__main__":
    # 32 graphs of 16 nodes, 16 graphs per grid step -> 2 grid steps (even, so
    # both v7x TensorCores get a block; B*N = 256 rows fills the MXU).
    G, N, B = 32, 16, 16
    key = jax.random.PRNGKey(0)
    k_graph, k_param = jax.random.split(key)
    adj, nodes_feat, edges_feat, nn_norm, en_norm = make_graph_batch(k_graph, G, N)
    params = init_params(k_param)

    logits = my_gcn_net(adj, nodes_feat, edges_feat, nn_norm, en_norm, params,
                        graphs_per_block=B)
    jax.block_until_ready(logits)
    assert logits.shape == (G, OUT_DIM)
    assert bool(jnp.all(jnp.isfinite(logits)))
    print("KERNEL_OK")
</pallas_src>

<mosaic_0001>
module attributes {stable_mosaic.version = 11 : i64} {
  func.func @gcn_block_kernel(%arg0: i32, %arg1: memref<16x16x16xbf16, #tpu.memory_space<vmem>>, %arg2: memref<256x4xf32, #tpu.memory_space<vmem>>, %arg3: memref<256x1xf32, #tpu.memory_space<vmem>>, %arg4: memref<4x128xf32, #tpu.memory_space<vmem>>, %arg5: memref<1x128xf32, #tpu.memory_space<vmem>>, %arg6: memref<4x128x128xbf16, #tpu.memory_space<vmem>>, %arg7: memref<4x1x128xf32, #tpu.memory_space<vmem>>, %arg8: memref<4x1x128xf32, #tpu.memory_space<vmem>>, %arg9: memref<4x1x128xf32, #tpu.memory_space<vmem>>, %arg10: memref<16x128xf32, #tpu.memory_space<vmem>>) attributes {dimension_semantics = [#tpu.dimension_semantics<parallel>], iteration_bounds = array<i64: 2>, scalar_prefetch = 0 : i64, scratch_operands = 0 : i64, tpu.core_type = #tpu.core_type<tc>, window_params = [{transform_indices = @transform_0, window_bounds = array<i64: 16, 16, 16>}, {transform_indices = @transform_1, window_bounds = array<i64: 256, 4>}, {transform_indices = @transform_2, window_bounds = array<i64: 256, 1>}, {pipeline_mode = #tpu.pipeline_mode<synchronous>, transform_indices = @transform_3, window_bounds = array<i64: 4, 128>}, {pipeline_mode = #tpu.pipeline_mode<synchronous>, transform_indices = @transform_4, window_bounds = array<i64: 1, 128>}, {pipeline_mode = #tpu.pipeline_mode<synchronous>, transform_indices = @transform_5, window_bounds = array<i64: 4, 128, 128>}, {pipeline_mode = #tpu.pipeline_mode<synchronous>, transform_indices = @transform_6, window_bounds = array<i64: 4, 1, 128>}, {pipeline_mode = #tpu.pipeline_mode<synchronous>, transform_indices = @transform_7, window_bounds = array<i64: 4, 1, 128>}, {pipeline_mode = #tpu.pipeline_mode<synchronous>, transform_indices = @transform_8, window_bounds = array<i64: 4, 1, 128>}, {transform_indices = @transform_9, window_bounds = array<i64: 16, 128>}]} {
    %c0 = arith.constant 0 : index
    %c0_0 = arith.constant 0 : index
    %c0_1 = arith.constant 0 : index
    %0 = vector.load %arg1[%c0, %c0_0, %c0_1] : memref<16x16x16xbf16, #tpu.memory_space<vmem>>, vector<16x16x16xbf16>
    %c0_2 = arith.constant 0 : index
    %c0_3 = arith.constant 0 : index
    %1 = vector.load %arg3[%c0_2, %c0_3] : memref<256x1xf32, #tpu.memory_space<vmem>>, vector<256x1xf32>
    %c0_4 = arith.constant 0 : index
    %c0_5 = arith.constant 0 : index
    %2 = vector.load %arg2[%c0_4, %c0_5] : memref<256x4xf32, #tpu.memory_space<vmem>>, vector<256x4xf32>
    %c0_6 = arith.constant 0 : index
    %c0_7 = arith.constant 0 : index
    %3 = vector.load %arg4[%c0_6, %c0_7] : memref<4x128xf32, #tpu.memory_space<vmem>>, vector<4x128xf32>
    %cst = arith.constant dense<0.000000e+00> : vector<256x128xf32>
    %4 = tpu.matmul %2, %3, %cst {dimension_numbers = #tpu.dot_dimension_numbers<[1], [0], [0], [1], [0, 0, 1, 1], [], []>} : vector<256x4xf32>, vector<4x128xf32>, vector<256x128xf32> -> vector<256x128xf32>
    %c0_8 = arith.constant 0 : index
    %c0_9 = arith.constant 0 : index
    %5 = vector.load %arg5[%c0_8, %c0_9] : memref<1x128xf32, #tpu.memory_space<vmem>>, vector<1x128xf32>
    %6 = vector.broadcast %5 : vector<1x128xf32> to vector<256x128xf32>
    %7 = arith.addf %4, %6 : vector<256x128xf32>
    %8 = arith.truncf %7 : vector<256x128xf32> to vector<256x128xbf16>
    %c0_10 = arith.constant 0 : index
    %c0_11 = arith.constant 0 : index
    %c0_12 = arith.constant 0 : index
    %9 = vector.load %arg6[%c0_10, %c0_11, %c0_12] : memref<4x128x128xbf16, #tpu.memory_space<vmem>>, vector<1x128x128xbf16>
    %10 = vector.shape_cast %9 : vector<1x128x128xbf16> to vector<128x128xbf16>
    %cst_13 = arith.constant dense<0.000000e+00> : vector<256x128xf32>
    %11 = tpu.matmul %8, %10, %cst_13 {dimension_numbers = #tpu.dot_dimension_numbers<[1], [0], [0], [1], [0, 0, 1, 1], [], []>} : vector<256x128xbf16>, vector<128x128xbf16>, vector<256x128xf32> -> vector<256x128xf32>
    %12 = vector.shape_cast %11 : vector<256x128xf32> to vector<16x16x128xf32>
    %13 = arith.truncf %12 : vector<16x16x128xf32> to vector<16x16x128xbf16>
    "tpu.trace_start"() <{level = 10 : i32, message = "gij,gjd->gid"}> : () -> ()
    %cst_14 = arith.constant dense<0.000000e+00> : vector<16x16x128xf32>
    %14 = tpu.matmul %0, %13, %cst_14 {dimension_numbers = #tpu.dot_dimension_numbers<[2], [1], [1], [2], [0, 0, 0, 1, 1, 2], [0], [0]>} : vector<16x16x16xbf16>, vector<16x16x128xbf16>, vector<16x16x128xf32> -> vector<16x16x128xf32>
    "tpu.trace_stop"() : () -> ()
    %15 = vector.shape_cast %14 : vector<16x16x128xf32> to vector<256x128xf32>
    %c0_15 = arith.constant 0 : index
    %c0_16 = arith.constant 0 : index
    %c0_17 = arith.constant 0 : index
    %16 = vector.load %arg7[%c0_15, %c0_16, %c0_17] : memref<4x1x128xf32, #tpu.memory_space<vmem>>, vector<1x1x128xf32>
    %17 = vector.shape_cast %16 : vector<1x1x128xf32> to vector<1x128xf32>
    %18 = vector.broadcast %17 : vector<1x128xf32> to vector<256x128xf32>
    %19 = arith.addf %15, %18 : vector<256x128xf32>
    %20 = vector.broadcast %1 : vector<256x1xf32> to vector<256x128xf32>
    %21 = arith.mulf %19, %20 : vector<256x128xf32>
    %c0_18 = arith.constant 0 : index
    %c0_19 = arith.constant 0 : index
    %c0_20 = arith.constant 0 : index
    %22 = vector.load %arg8[%c0_18, %c0_19, %c0_20] : memref<4x1x128xf32, #tpu.memory_space<vmem>>, vector<1x1x128xf32>
    %23 = vector.shape_cast %22 : vector<1x1x128xf32> to vector<1x128xf32>
    %24 = vector.broadcast %23 : vector<1x128xf32> to vector<256x128xf32>
    %25 = arith.mulf %21, %24 : vector<256x128xf32>
    %c0_21 = arith.constant 0 : index
    %c0_22 = arith.constant 0 : index
    %c0_23 = arith.constant 0 : index
    %26 = vector.load %arg9[%c0_21, %c0_22, %c0_23] : memref<4x1x128xf32, #tpu.memory_space<vmem>>, vector<1x1x128xf32>
    %27 = vector.shape_cast %26 : vector<1x1x128xf32> to vector<1x128xf32>
    %28 = vector.broadcast %27 : vector<1x128xf32> to vector<256x128xf32>
    %29 = arith.addf %25, %28 : vector<256x128xf32>
    %cst_24 = arith.constant 0.000000e+00 : f32
    %30 = vector.broadcast %cst_24 : f32 to vector<256x128xf32>
    %31 = arith.maximumf %29, %30 : vector<256x128xf32>
    %32 = arith.addf %7, %31 : vector<256x128xf32>
    %33 = arith.truncf %32 : vector<256x128xf32> to vector<256x128xbf16>
    %c1 = arith.constant 1 : index
    %c0_25 = arith.constant 0 : index
    %c0_26 = arith.constant 0 : index
    %34 = vector.load %arg6[%c1, %c0_25, %c0_26] : memref<4x128x128xbf16, #tpu.memory_space<vmem>>, vector<1x128x128xbf16>
    %35 = vector.shape_cast %34 : vector<1x128x128xbf16> to vector<128x128xbf16>
    %cst_27 = arith.constant dense<0.000000e+00> : vector<256x128xf32>
    %36 = tpu.matmul %33, %35, %cst_27 {dimension_numbers = #tpu.dot_dimension_numbers<[1], [0], [0], [1], [0, 0, 1, 1], [], []>} : vector<256x128xbf16>, vector<128x128xbf16>, vector<256x128xf32> -> vector<256x128xf32>
    %37 = vector.shape_cast %36 : vector<256x128xf32> to vector<16x16x128xf32>
    %38 = arith.truncf %37 : vector<16x16x128xf32> to vector<16x16x128xbf16>
    "tpu.trace_start"() <{level = 10 : i32, message = "gij,gjd->gid"}> : () -> ()
    %cst_28 = arith.constant dense<0.000000e+00> : vector<16x16x128xf32>
    %39 = tpu.matmul %0, %38, %cst_28 {dimension_numbers = #tpu.dot_dimension_numbers<[2], [1], [1], [2], [0, 0, 0, 1, 1, 2], [0], [0]>} : vector<16x16x16xbf16>, vector<16x16x128xbf16>, vector<16x16x128xf32> -> vector<16x16x128xf32>
    "tpu.trace_stop"() : () -> ()
    %40 = vector.shape_cast %39 : vector<16x16x128xf32> to vector<256x128xf32>
    %c1_29 = arith.constant 1 : index
    %c0_30 = arith.constant 0 : index
    %c0_31 = arith.constant 0 : index
    %41 = vector.load %arg7[%c1_29, %c0_30, %c0_31] : memref<4x1x128xf32, #tpu.memory_space<vmem>>, vector<1x1x128xf32>
    %42 = vector.shape_cast %41 : vector<1x1x128xf32> to vector<1x128xf32>
    %43 = vector.broadcast %42 : vector<1x128xf32> to vector<256x128xf32>
    %44 = arith.addf %40, %43 : vector<256x128xf32>
    %45 = vector.broadcast %1 : vector<256x1xf32> to vector<256x128xf32>
    %46 = arith.mulf %44, %45 : vector<256x128xf32>
    %c1_32 = arith.constant 1 : index
    %c0_33 = arith.constant 0 : index
    %c0_34 = arith.constant 0 : index
    %47 = vector.load %arg8[%c1_32, %c0_33, %c0_34] : memref<4x1x128xf32, #tpu.memory_space<vmem>>, vector<1x1x128xf32>
    %48 = vector.shape_cast %47 : vector<1x1x128xf32> to vector<1x128xf32>
    %49 = vector.broadcast %48 : vector<1x128xf32> to vector<256x128xf32>
    %50 = arith.mulf %46, %49 : vector<256x128xf32>
    %c1_35 = arith.constant 1 : index
    %c0_36 = arith.constant 0 : index
    %c0_37 = arith.constant 0 : index
    %51 = vector.load %arg9[%c1_35, %c0_36, %c0_37] : memref<4x1x128xf32, #tpu.memory_space<vmem>>, vector<1x1x128xf32>
    %52 = vector.shape_cast %51 : vector<1x1x128xf32> to vector<1x128xf32>
    %53 = vector.broadcast %52 : vector<1x128xf32> to vector<256x128xf32>
    %54 = arith.addf %50, %53 : vector<256x128xf32>
    %cst_38 = arith.constant 0.000000e+00 : f32
    %55 = vector.broadcast %cst_38 : f32 to vector<256x128xf32>
    %56 = arith.maximumf %54, %55 : vector<256x128xf32>
    %57 = arith.addf %32, %56 : vector<256x128xf32>
    %58 = arith.truncf %57 : vector<256x128xf32> to vector<256x128xbf16>
    %c2 = arith.constant 2 : index
    %c0_39 = arith.constant 0 : index
    %c0_40 = arith.constant 0 : index
    %59 = vector.load %arg6[%c2, %c0_39, %c0_40] : memref<4x128x128xbf16, #tpu.memory_space<vmem>>, vector<1x128x128xbf16>
    %60 = vector.shape_cast %59 : vector<1x128x128xbf16> to vector<128x128xbf16>
    %cst_41 = arith.constant dense<0.000000e+00> : vector<256x128xf32>
    %61 = tpu.matmul %58, %60, %cst_41 {dimension_numbers = #tpu.dot_dimension_numbers<[1], [0], [0], [1], [0, 0, 1, 1], [], []>} : vector<256x128xbf16>, vector<128x128xbf16>, vector<256x128xf32> -> vector<256x128xf32>
    %62 = vector.shape_cast %61 : vector<256x128xf32> to vector<16x16x128xf32>
    %63 = arith.truncf %62 : vector<16x16x128xf32> to vector<16x16x128xbf16>
    "tpu.trace_start"() <{level = 10 : i32, message = "gij,gjd->gid"}> : () -> ()
    %cst_42 = arith.constant dense<0.000000e+00> : vector<16x16x128xf32>
    %64 = tpu.matmul %0, %63, %cst_42 {dimension_numbers = #tpu.dot_dimension_numbers<[2], [1], [1], [2], [0, 0, 0, 1, 1, 2], [0], [0]>} : vector<16x16x16xbf16>, vector<16x16x128xbf16>, vector<16x16x128xf32> -> vector<16x16x128xf32>
    "tpu.trace_stop"() : () -> ()
    %65 = vector.shape_cast %64 : vector<16x16x128xf32> to vector<256x128xf32>
    %c2_43 = arith.constant 2 : index
    %c0_44 = arith.constant 0 : index
    %c0_45 = arith.constant 0 : index
    %66 = vector.load %arg7[%c2_43, %c0_44, %c0_45] : memref<4x1x128xf32, #tpu.memory_space<vmem>>, vector<1x1x128xf32>
    %67 = vector.shape_cast %66 : vector<1x1x128xf32> to vector<1x128xf32>
    %68 = vector.broadcast %67 : vector<1x128xf32> to vector<256x128xf32>
    %69 = arith.addf %65, %68 : vector<256x128xf32>
    %70 = vector.broadcast %1 : vector<256x1xf32> to vector<256x128xf32>
    %71 = arith.mulf %69, %70 : vector<256x128xf32>
    %c2_46 = arith.constant 2 : index
    %c0_47 = arith.constant 0 : index
    %c0_48 = arith.constant 0 : index
    %72 = vector.load %arg8[%c2_46, %c0_47, %c0_48] : memref<4x1x128xf32, #tpu.memory_space<vmem>>, vector<1x1x128xf32>
    %73 = vector.shape_cast %72 : vector<1x1x128xf32> to vector<1x128xf32>
    %74 = vector.broadcast %73 : vector<1x128xf32> to vector<256x128xf32>
    %75 = arith.mulf %71, %74 : vector<256x128xf32>
    %c2_49 = arith.constant 2 : index
    %c0_50 = arith.constant 0 : index
    %c0_51 = arith.constant 0 : index
    %76 = vector.load %arg9[%c2_49, %c0_50, %c0_51] : memref<4x1x128xf32, #tpu.memory_space<vmem>>, vector<1x1x128xf32>
    %77 = vector.shape_cast %76 : vector<1x1x128xf32> to vector<1x128xf32>
    %78 = vector.broadcast %77 : vector<1x128xf32> to vector<256x128xf32>
    %79 = arith.addf %75, %78 : vector<256x128xf32>
    %cst_52 = arith.constant 0.000000e+00 : f32
    %80 = vector.broadcast %cst_52 : f32 to vector<256x128xf32>
    %81 = arith.maximumf %79, %80 : vector<256x128xf32>
    %82 = arith.addf %57, %81 : vector<256x128xf32>
    %83 = arith.truncf %82 : vector<256x128xf32> to vector<256x128xbf16>
    %c3 = arith.constant 3 : index
    %c0_53 = arith.constant 0 : index
    %c0_54 = arith.constant 0 : index
    %84 = vector.load %arg6[%c3, %c0_53, %c0_54] : memref<4x128x128xbf16, #tpu.memory_space<vmem>>, vector<1x128x128xbf16>
    %85 = vector.shape_cast %84 : vector<1x128x128xbf16> to vector<128x128xbf16>
    %cst_55 = arith.constant dense<0.000000e+00> : vector<256x128xf32>
    %86 = tpu.matmul %83, %85, %cst_55 {dimension_numbers = #tpu.dot_dimension_numbers<[1], [0], [0], [1], [0, 0, 1, 1], [], []>} : vector<256x128xbf16>, vector<128x128xbf16>, vector<256x128xf32> -> vector<256x128xf32>
    %87 = vector.shape_cast %86 : vector<256x128xf32> to vector<16x16x128xf32>
    %88 = arith.truncf %87 : vector<16x16x128xf32> to vector<16x16x128xbf16>
    "tpu.trace_start"() <{level = 10 : i32, message = "gij,gjd->gid"}> : () -> ()
    %cst_56 = arith.constant dense<0.000000e+00> : vector<16x16x128xf32>
    %89 = tpu.matmul %0, %88, %cst_56 {dimension_numbers = #tpu.dot_dimension_numbers<[2], [1], [1], [2], [0, 0, 0, 1, 1, 2], [0], [0]>} : vector<16x16x16xbf16>, vector<16x16x128xbf16>, vector<16x16x128xf32> -> vector<16x16x128xf32>
    "tpu.trace_stop"() : () -> ()
    %90 = vector.shape_cast %89 : vector<16x16x128xf32> to vector<256x128xf32>
    %c3_57 = arith.constant 3 : index
    %c0_58 = arith.constant 0 : index
    %c0_59 = arith.constant 0 : index
    %91 = vector.load %arg7[%c3_57, %c0_58, %c0_59] : memref<4x1x128xf32, #tpu.memory_space<vmem>>, vector<1x1x128xf32>
    %92 = vector.shape_cast %91 : vector<1x1x128xf32> to vector<1x128xf32>
    %93 = vector.broadcast %92 : vector<1x128xf32> to vector<256x128xf32>
    %94 = arith.addf %90, %93 : vector<256x128xf32>
    %95 = vector.broadcast %1 : vector<256x1xf32> to vector<256x128xf32>
    %96 = arith.mulf %94, %95 : vector<256x128xf32>
    %c3_60 = arith.constant 3 : index
    %c0_61 = arith.constant 0 : index
    %c0_62 = arith.constant 0 : index
    %97 = vector.load %arg8[%c3_60, %c0_61, %c0_62] : memref<4x1x128xf32, #tpu.memory_space<vmem>>, vector<1x1x128xf32>
    %98 = vector.shape_cast %97 : vector<1x1x128xf32> to vector<1x128xf32>
    %99 = vector.broadcast %98 : vector<1x128xf32> to vector<256x128xf32>
    %100 = arith.mulf %96, %99 : vector<256x128xf32>
    %c3_63 = arith.constant 3 : index
    %c0_64 = arith.constant 0 : index
    %c0_65 = arith.constant 0 : index
    %101 = vector.load %arg9[%c3_63, %c0_64, %c0_65] : memref<4x1x128xf32, #tpu.memory_space<vmem>>, vector<1x1x128xf32>
    %102 = vector.shape_cast %101 : vector<1x1x128xf32> to vector<1x128xf32>
    %103 = vector.broadcast %102 : vector<1x128xf32> to vector<256x128xf32>
    %104 = arith.addf %100, %103 : vector<256x128xf32>
    %cst_66 = arith.constant 0.000000e+00 : f32
    %105 = vector.broadcast %cst_66 : f32 to vector<256x128xf32>
    %106 = arith.maximumf %104, %105 : vector<256x128xf32>
    %107 = arith.addf %82, %106 : vector<256x128xf32>
    %108 = vector.shape_cast %107 : vector<256x128xf32> to vector<16x16x128xf32>
    %cst_67 = arith.constant dense<0.000000e+00> : vector<16x128xf32>
    %109 = vector.multi_reduction <add>, %108, %cst_67 [1] : vector<16x16x128xf32> to vector<16x128xf32>
    %cst_68 = arith.constant 1.600000e+01 : f32
    %110 = vector.broadcast %cst_68 : f32 to vector<16x128xf32>
    %111 = arith.divf %109, %110 : vector<16x128xf32>
    %c0_69 = arith.constant 0 : index
    %c0_70 = arith.constant 0 : index
    %112 = vector.load %arg10[%c0_69, %c0_70] : memref<16x128xf32, #tpu.memory_space<vmem>>, vector<16x128xf32>
    tpu.vector_store %arg10[%c0_69, %c0_70], %111 {strides = array<i32>} : memref<16x128xf32, #tpu.memory_space<vmem>>, vector<16x128xf32>,
    return
  }
  func.func @transform_0(%arg0: i32) -> (i32, i32, i32) {
    %c0_i32 = arith.constant 0 : i32
    %c0_i32_0 = arith.constant 0 : i32
    %c0_i32_1 = arith.constant 0 : i32
    return %arg0, %c0_i32, %c0_i32_0 : i32, i32, i32
  }
  func.func @transform_1(%arg0: i32) -> (i32, i32) {
    %c0_i32 = arith.constant 0 : i32
    %c0_i32_0 = arith.constant 0 : i32
    return %arg0, %c0_i32 : i32, i32
  }
  func.func @transform_2(%arg0: i32) -> (i32, i32) {
    %c0_i32 = arith.constant 0 : i32
    %c0_i32_0 = arith.constant 0 : i32
    return %arg0, %c0_i32 : i32, i32
  }
  func.func @transform_3(%arg0: i32) -> (i32, i32) {
    %c0_i32 = arith.constant 0 : i32
    %c0_i32_0 = arith.constant 0 : i32
    %c0_i32_1 = arith.constant 0 : i32
    return %c0_i32, %c0_i32_0 : i32, i32
  }
  func.func @transform_4(%arg0: i32) -> (i32, i32) {
    %c0_i32 = arith.constant 0 : i32
    %c0_i32_0 = arith.constant 0 : i32
    %c0_i32_1 = arith.constant 0 : i32
    return %c0_i32, %c0_i32_0 : i32, i32
  }
  func.func @transform_5(%arg0: i32) -> (i32, i32, i32) {
    %c0_i32 = arith.constant 0 : i32
    %c0_i32_0 = arith.constant 0 : i32
    %c0_i32_1 = arith.constant 0 : i32
    %c0_i32_2 = arith.constant 0 : i32
    return %c0_i32, %c0_i32_0, %c0_i32_1 : i32, i32, i32
  }
  func.func @transform_6(%arg0: i32) -> (i32, i32, i32) {
    %c0_i32 = arith.constant 0 : i32
    %c0_i32_0 = arith.constant 0 : i32
    %c0_i32_1 = arith.constant 0 : i32
    %c0_i32_2 = arith.constant 0 : i32
    return %c0_i32, %c0_i32_0, %c0_i32_1 : i32, i32, i32
  }
  func.func @transform_7(%arg0: i32) -> (i32, i32, i32) {
    %c0_i32 = arith.constant 0 : i32
    %c0_i32_0 = arith.constant 0 : i32
    %c0_i32_1 = arith.constant 0 : i32
    %c0_i32_2 = arith.constant 0 : i32
    return %c0_i32, %c0_i32_0, %c0_i32_1 : i32, i32, i32
  }
  func.func @transform_8(%arg0: i32) -> (i32, i32, i32) {
    %c0_i32 = arith.constant 0 : i32
    %c0_i32_0 = arith.constant 0 : i32
    %c0_i32_1 = arith.constant 0 : i32
    %c0_i32_2 = arith.constant 0 : i32
    return %c0_i32, %c0_i32_0, %c0_i32_1 : i32, i32, i32
  }
  func.func @transform_9(%arg0: i32) -> (i32, i32) {
    %c0_i32 = arith.constant 0 : i32
    %c0_i32_0 = arith.constant 0 : i32
    return %arg0, %c0_i32 : i32, i32
  }
}

</mosaic_0001>

<llo_original>
// kernel: tpu_custom_call.1
$region0: #{tpu_custom_call.1}
  #allocation0 [shape = 'u32[]', space=smem, size = 0x4, offset = 0x4, fixed_abs, tag = 'smem constant byte address 0x4 - core index']
  #allocation1 [shape = 'u32[144,128]{1,0:T(1,128)}', space=vmem, size = 0x12000, scoped, tag = 'internal scratch']
  %s0 = inlined_call_operand.vmem [shape: bf16[32,16,16], index: 0, kind: input, shape index: {}]
  %s1 = inlined_call_operand.vmem [shape: f32[512,4], index: 1, kind: input, shape index: {}]
  %s2 = inlined_call_operand.vmem [shape: f32[512,1], index: 2, kind: input, shape index: {}]
  %s3 = inlined_call_operand.vmem [shape: f32[4,128], index: 3, kind: input, shape index: {}]
  %s4 = inlined_call_operand.vmem [shape: f32[1,128], index: 4, kind: input, shape index: {}]
  %s5 = inlined_call_operand.vmem [shape: bf16[4,128,128], index: 5, kind: input, shape index: {}]
  %s6 = inlined_call_operand.vmem [shape: f32[4,1,128], index: 6, kind: input, shape index: {}]
  %s7 = inlined_call_operand.vmem [shape: f32[4,1,128], index: 7, kind: input, shape index: {}]
  %s8 = inlined_call_operand.vmem [shape: f32[4,1,128], index: 8, kind: input, shape index: {}]
  %s9 = inlined_call_operand.hbm [shape: f32[32,128], index: 9, kind: output, shape index: {}]
  %s10 = sld [smem:[#allocation0]]
  $region69: #{tpu_custom_call.1} parent=0
    _
  %s12 = ssub.s32 1, %s10
  %s13 = scalar_select 0, %s12, %s10
  $region1: #{tpu_custom_call.1} parent=0
    #allocation2 [shape = 'u8[16384]{0}', space=vmem, size = 0x4000, scoped, tag = 'output window, operand 0']
    #allocation3 [shape = 's32[2]{0}', space=sflag, size = 0x8, scoped, tag = 'scoped memory for tpu_custom_call.1']
    %14 = vsyncpa [#allocation3], 0
    %s15 = scalar_lea.sflag [#allocation3], 1
    %16 = vsyncpa %s15, 0
    loop: start=0, step=1, limit=4
    $region2: #{tpu_custom_call.1} parent=1 // loop_pre_header
      _
    $region3: #{tpu_custom_call.1} parent=1 // loop_header
      %s18 = sphi 0, %s22
      %p19 = scmp.ge.s32.totalorder %s18, 4
      %s28 = sphi 0, %s30
      %s31 = sphi 0, %s28
      %s32 = sphi 0, %s31
      %s48 = sphi 0, %s32
      %s54 = sphi 0, %s56
      %s57 = sphi 0, %s54
      %s58 = sphi 0, %s57
      %s74 = sphi 0, %s58
      %s80 = sphi 0, %s82
      %s83 = sphi 0, %s80
      %s84 = sphi 0, %s83
      %s100 = sphi 0, %s84
      %s104 = sphi 0, %s104
      %s106 = sphi 0, %s104
      %s107 = sphi 0, %s106
      %s121 = sphi 0, %s107
      %s125 = sphi 0, %s125
      %s127 = sphi 0, %s125
      %s128 = sphi 0, %s127
      %s142 = sphi 0, %s128
      %s146 = sphi 0, %s146
      %s148 = sphi 0, %s146
      %s149 = sphi 0, %s148
      %s163 = sphi 0, %s149
      %s167 = sphi 0, %s167
      %s169 = sphi 0, %s167
      %s170 = sphi 0, %s169
      %s184 = sphi 0, %s170
      %s188 = sphi 0, %s188
      %s190 = sphi 0, %s188
      %s191 = sphi 0, %s190
      %s205 = sphi 0, %s191
      %s209 = sphi 0, %s209
      %s211 = sphi 0, %s209
      %s212 = sphi 0, %s211
      %s226 = sphi 0, %s212
      %s232 = sphi 0, %s234
      %s235 = sphi 0, %s232
      %s236 = sphi 0, %s235
      %s252 = sphi 0, %s236
    $region4: #{tpu_custom_call.1} parent=1 // loop_header_branch
      %21 = sbr.rel (%p19) target = $region8
    $region5: #{tpu_custom_call.1} parent=1 // loop_body
      %s23 = ssub.s32 %s18, 1
      %s24 = ssub.s32 %s18, 2
      %s25 = sadd.s32 %s18, 1
      %s26 = ssub.s32 %s18, %s25
      %p27 = scmp.eq.s32.totalorder %s26, 0
      %s29 = sadd.s32 %s28, 1
      %s30 = scalar_select %p27, %s28, %s29
      %p33 = pneg %p27
      %p34 = scmp.eq.s32.totalorder %s18, 1
      %p35 = por %p33, %p34
      %p36 = scmp.ne.s32.totalorder %s28, %s31
      %p37 = scmp.eq.s32.totalorder %s18, 0
      %p38 = por %p36, %p37
      %p39 = scmp.ne.s32.totalorder %s28, %s31
      %p40 = scmp.eq.s32.totalorder %s23, 1
      %p41 = por %p39, %p40
      %p42 = scmp.ne.s32.totalorder %s31, %s32
      %p43 = scmp.eq.s32.totalorder %s23, 0
      %p44 = por %p42, %p43
      %p45 = scmp.ne.s32.totalorder %s31, %s32
      %p46 = scmp.eq.s32.totalorder %s24, 1
      %p47 = por %p45, %p46
      %p49 = scmp.ne.s32.totalorder %s32, %s48
      %p50 = scmp.eq.s32.totalorder %s24, 0
      %p51 = por %p49, %p50
      %s52 = ssub.s32 %s18, %s25
      %p53 = scmp.eq.s32.totalorder %s52, 0
      %s55 = sadd.s32 %s54, 1
      %s56 = scalar_select %p53, %s54, %s55
      %p59 = pneg %p53
      %p60 = scmp.eq.s32.totalorder %s18, 1
      %p61 = por %p59, %p60
      %p62 = scmp.ne.s32.totalorder %s54, %s57
      %p63 = scmp.eq.s32.totalorder %s18, 0
      %p64 = por %p62, %p63
      %p65 = scmp.ne.s32.totalorder %s54, %s57
      %p66 = scmp.eq.s32.totalorder %s23, 1
      %p67 = por %p65, %p66
      %p68 = scmp.ne.s32.totalorder %s57, %s58
      %p69 = scmp.eq.s32.totalorder %s23, 0
      %p70 = por %p68, %p69
      %p71 = scmp.ne.s32.totalorder %s57, %s58
      %p72 = scmp.eq.s32.totalorder %s24, 1
      %p73 = por %p71, %p72
      %p75 = scmp.ne.s32.totalorder %s58, %s74
      %p76 = scmp.eq.s32.totalorder %s24, 0
      %p77 = por %p75, %p76
      %s78 = ssub.s32 %s18, %s25
      %p79 = scmp.eq.s32.totalorder %s78, 0
      %s81 = sadd.s32 %s80, 1
      %s82 = scalar_select %p79, %s80, %s81
      %p85 = pneg %p79
      %p86 = scmp.eq.s32.totalorder %s18, 1
      %p87 = por %p85, %p86
      %p88 = scmp.ne.s32.totalorder %s80, %s83
      %p89 = scmp.eq.s32.totalorder %s18, 0
      %p90 = por %p88, %p89
      %p91 = scmp.ne.s32.totalorder %s80, %s83
      %p92 = scmp.eq.s32.totalorder %s23, 1
      %p93 = por %p91, %p92
      %p94 = scmp.ne.s32.totalorder %s83, %s84
      %p95 = scmp.eq.s32.totalorder %s23, 0
      %p96 = por %p94, %p95
      %p97 = scmp.ne.s32.totalorder %s83, %s84
      %p98 = scmp.eq.s32.totalorder %s24, 1
      %p99 = por %p97, %p98
      %p101 = scmp.ne.s32.totalorder %s84, %s100
      %p102 = scmp.eq.s32.totalorder %s24, 0
      %p103 = por %p101, %p102
      %s105 = sadd.s32 %s104, 1
      %p108 = scmp.eq.s32.totalorder %s18, 1
      %p109 = scmp.ne.s32.totalorder %s104, %s106
      %p110 = scmp.eq.s32.totalorder %s18, 0
      %p111 = por %p109, %p110
      %p112 = scmp.ne.s32.totalorder %s104, %s106
      %p113 = scmp.eq.s32.totalorder %s23, 1
      %p114 = por %p112, %p113
      %p115 = scmp.ne.s32.totalorder %s106, %s107
      %p116 = scmp.eq.s32.totalorder %s23, 0
      %p117 = por %p115, %p116
      %p118 = scmp.ne.s32.totalorder %s106, %s107
      %p119 = scmp.eq.s32.totalorder %s24, 1
      %p120 = por %p118, %p119
      %p122 = scmp.ne.s32.totalorder %s107, %s121
      %p123 = scmp.eq.s32.totalorder %s24, 0
      %p124 = por %p122, %p123
      %s126 = sadd.s32 %s125, 1
      %p129 = scmp.eq.s32.totalorder %s18, 1
      %p130 = scmp.ne.s32.totalorder %s125, %s127
      %p131 = scmp.eq.s32.totalorder %s18, 0
      %p132 = por %p130, %p131
      %p133 = scmp.ne.s32.totalorder %s125, %s127
      %p134 = scmp.eq.s32.totalorder %s23, 1
      %p135 = por %p133, %p134
      %p136 = scmp.ne.s32.totalorder %s127, %s128
      %p137 = scmp.eq.s32.totalorder %s23, 0
      %p138 = por %p136, %p137
      %p139 = scmp.ne.s32.totalorder %s127, %s128
      %p140 = scmp.eq.s32.totalorder %s24, 1
      %p141 = por %p139, %p140
      %p143 = scmp.ne.s32.totalorder %s128, %s142
      %p144 = scmp.eq.s32.totalorder %s24, 0
      %p145 = por %p143, %p144
      %s147 = sadd.s32 %s146, 1
      %p150 = scmp.eq.s32.totalorder %s18, 1
      %p151 = scmp.ne.s32.totalorder %s146, %s148
      %p152 = scmp.eq.s32.totalorder %s18, 0
      %p153 = por %p151, %p152
      %p154 = scmp.ne.s32.totalorder %s146, %s148
      %p155 = scmp.eq.s32.totalorder %s23, 1
      %p156 = por %p154, %p155
      %p157 = scmp.ne.s32.totalorder %s148, %s149
      %p158 = scmp.eq.s32.totalorder %s23, 0
      %p159 = por %p157, %p158
      %p160 = scmp.ne.s32.totalorder %s148, %s149
      %p161 = scmp.eq.s32.totalorder %s24, 1
      %p162 = por %p160, %p161
      %p164 = scmp.ne.s32.totalorder %s149, %s163
      %p165 = scmp.eq.s32.totalorder %s24, 0
      %p166 = por %p164, %p165
      %s168 = sadd.s32 %s167, 1
      %p171 = scmp.eq.s32.totalorder %s18, 1
      %p172 = scmp.ne.s32.totalorder %s167, %s169
      %p173 = scmp.eq.s32.totalorder %s18, 0
      %p174 = por %p172, %p173
      %p175 = scmp.ne.s32.totalorder %s167, %s169
      %p176 = scmp.eq.s32.totalorder %s23, 1
      %p177 = por %p175, %p176
      %p178 = scmp.ne.s32.totalorder %s169, %s170
      %p179 = scmp.eq.s32.totalorder %s23, 0
      %p180 = por %p178, %p179
      %p181 = scmp.ne.s32.totalorder %s169, %s170
      %p182 = scmp.eq.s32.totalorder %s24, 1
      %p183 = por %p181, %p182
      %p185 = scmp.ne.s32.totalorder %s170, %s184
      %p186 = scmp.eq.s32.totalorder %s24, 0
      %p187 = por %p185, %p186
      %s189 = sadd.s32 %s188, 1
      %p192 = scmp.eq.s32.totalorder %s18, 1
      %p193 = scmp.ne.s32.totalorder %s188, %s190
      %p194 = scmp.eq.s32.totalorder %s18, 0
      %p195 = por %p193, %p194
      %p196 = scmp.ne.s32.totalorder %s188, %s190
      %p197 = scmp.eq.s32.totalorder %s23, 1
      %p198 = por %p196, %p197
      %p199 = scmp.ne.s32.totalorder %s190, %s191
      %p200 = scmp.eq.s32.totalorder %s23, 0
      %p201 = por %p199, %p200
      %p202 = scmp.ne.s32.totalorder %s190, %s191
      %p203 = scmp.eq.s32.totalorder %s24, 1
      %p204 = por %p202, %p203
      %p206 = scmp.ne.s32.totalorder %s191, %s205
      %p207 = scmp.eq.s32.totalorder %s24, 0
      %p208 = por %p206, %p207
      %s210 = sadd.s32 %s209, 1
      %p213 = scmp.eq.s32.totalorder %s18, 1
      %p214 = scmp.ne.s32.totalorder %s209, %s211
      %p215 = scmp.eq.s32.totalorder %s18, 0
      %p216 = por %p214, %p215
      %p217 = scmp.ne.s32.totalorder %s209, %s211
      %p218 = scmp.eq.s32.totalorder %s23, 1
      %p219 = por %p217, %p218
      %p220 = scmp.ne.s32.totalorder %s211, %s212
      %p221 = scmp.eq.s32.totalorder %s23, 0
      %p222 = por %p220, %p221
      %p223 = scmp.ne.s32.totalorder %s211, %s212
      %p224 = scmp.eq.s32.totalorder %s24, 1
      %p225 = por %p223, %p224
      %p227 = scmp.ne.s32.totalorder %s212, %s226
      %p228 = scmp.eq.s32.totalorder %s24, 0
      %p229 = por %p227, %p228
      %s230 = ssub.s32 %s18, %s25
      %p231 = scmp.eq.s32.totalorder %s230, 0
      %s233 = sadd.s32 %s232, 1
      %s234 = scalar_select %p231, %s232, %s233
      %p237 = pneg %p231
      %p238 = scmp.eq.s32.totalorder %s18, 1
      %p239 = por %p237, %p238
      %p240 = scmp.ne.s32.totalorder %s232, %s235
      %p241 = scmp.eq.s32.totalorder %s18, 0
      %p242 = por %p240, %p241
      %p243 = scmp.ne.s32.totalorder %s232, %s235
      %p244 = scmp.eq.s32.totalorder %s23, 1
      %p245 = por %p243, %p244
      %p246 = scmp.ne.s32.totalorder %s235, %s236
      %p247 = scmp.eq.s32.totalorder %s23, 0
      %p248 = por %p246, %p247
      %p249 = scmp.ne.s32.totalorder %s235, %s236
      %p250 = scmp.eq.s32.totalorder %s24, 1
      %p251 = por %p249, %p250
      %p253 = scmp.ne.s32.totalorder %s236, %s252
      %p254 = scmp.eq.s32.totalorder %s24, 0
      %p255 = por %p253, %p254
      %p256 = scmp.le.s32.totalorder 1, %s18
      %p257 = scmp.lt.s32.totalorder %s18, 3
      %p258 = pnand %p256, %p257
      %p259 = pneg %p258
      // Predicated region
      $region9: #{tpu_custom_call.1} parent=5 // pred_check
        _
      $region10: #{tpu_custom_call.1} parent=5 // pred_check_branch
        %261 = sbr.rel (%p258) target = $region12
      $region11: #{tpu_custom_call.1} parent=5 // pred_region
        %s262 = ssub.s32 %s18, 1
        // Predicated region
        $region13: #{tpu_custom_call.1} parent=11 // pred_check
          %p263 = pneg %p117
        $region14: #{tpu_custom_call.1} parent=11 // pred_check_branch
          %265 = sbr.rel (%p263) target = $region16
        $region15: #{tpu_custom_call.1} parent=11 // pred_region
          _
        $region16: #{tpu_custom_call.1} parent=11 // pred_fallthru
          _
        // Predicated region
        $region17: #{tpu_custom_call.1} parent=11 // pred_check
          %p266 = pneg %p138
        $region18: #{tpu_custom_call.1} parent=11 // pred_check_branch
          %268 = sbr.rel (%p266) target = $region20
        $region19: #{tpu_custom_call.1} parent=11 // pred_region
          _
        $region20: #{tpu_custom_call.1} parent=11 // pred_fallthru
          _
        // Predicated region
        $region21: #{tpu_custom_call.1} parent=11 // pred_check
          %p269 = pneg %p159
        $region22: #{tpu_custom_call.1} parent=11 // pred_check_branch
          %271 = sbr.rel (%p269) target = $region24
        $region23: #{tpu_custom_call.1} parent=11 // pred_region
          _
        $region24: #{tpu_custom_call.1} parent=11 // pred_fallthru
          _
        // Predicated region
        $region25: #{tpu_custom_call.1} parent=11 // pred_check
          %p272 = pneg %p180
        $region26: #{tpu_custom_call.1} parent=11 // pred_check_branch
          %274 = sbr.rel (%p272) target = $region28
        $region27: #{tpu_custom_call.1} parent=11 // pred_region
          _
        $region28: #{tpu_custom_call.1} parent=11 // pred_fallthru
          _
        // Predicated region
        $region29: #{tpu_custom_call.1} parent=11 // pred_check
          %p275 = pneg %p201
        $region30: #{tpu_custom_call.1} parent=11 // pred_check_branch
          %277 = sbr.rel (%p275) target = $region32
        $region31: #{tpu_custom_call.1} parent=11 // pred_region
          _
        $region32: #{tpu_custom_call.1} parent=11 // pred_fallthru
          _
        // Predicated region
        $region33: #{tpu_custom_call.1} parent=11 // pred_check
          %p278 = pneg %p222
        $region34: #{tpu_custom_call.1} parent=11 // pred_check_branch
          %280 = sbr.rel (%p278) target = $region36
        $region35: #{tpu_custom_call.1} parent=11 // pred_region
          _
        $region36: #{tpu_custom_call.1} parent=11 // pred_fallthru
          _
      $region12: #{tpu_custom_call.1} parent=5 // pred_fallthru
        _
      %p281 = scmp.lt.s32.totalorder %s18, 2
      // Predicated region
      $region37: #{tpu_custom_call.1} parent=5 // pred_check
        %p282 = pneg %p281
      $region38: #{tpu_custom_call.1} parent=5 // pred_check_branch
        %284 = sbr.rel (%p282) target = $region40
      $region39: #{tpu_custom_call.1} parent=5 // pred_region
        // Predicated region
        $region41: #{tpu_custom_call.1} parent=39 // pred_check
          %p285 = pneg %p38
        $region42: #{tpu_custom_call.1} parent=39 // pred_check_branch
          %287 = sbr.rel (%p285) target = $region44
        $region43: #{tpu_custom_call.1} parent=39 // pred_region
          %s288 = smul.u32 16, %s18
          %p289 = scmp.lt.s32.totalorder %s288, 31
          %s290 = scalar_select %p289, %s288, 31
          %s291 = smul.addr %s290, 2
          %s292 = smul.addr %s291, 4
          %s293 = scalar_lea.vmem %s0, %s292
          %s294 = smul.u32 16, %s18
        $region44: #{tpu_custom_call.1} parent=39 // pred_fallthru
          _
        // Predicated region
        $region45: #{tpu_custom_call.1} parent=39 // pred_check
          %p295 = pneg %p64
        $region46: #{tpu_custom_call.1} parent=39 // pred_check_branch
          %297 = sbr.rel (%p295) target = $region48
        $region47: #{tpu_custom_call.1} parent=39 // pred_region
          %s298 = smul.u32 32, %s18
          %p299 = scmp.lt.s32.totalorder %s298, 63
          %s300 = scalar_select %p299, %s298, 63
          %s301 = smul.addr %s300, 8
          %s302 = scalar_lea.vmem %s1, %s301
          %s303 = smul.u32 32, %s18
        $region48: #{tpu_custom_call.1} parent=39 // pred_fallthru
          _
        // Predicated region
        $region49: #{tpu_custom_call.1} parent=39 // pred_check
          %p304 = pneg %p90
        $region50: #{tpu_custom_call.1} parent=39 // pred_check_branch
          %306 = sbr.rel (%p304) target = $region52
        $region51: #{tpu_custom_call.1} parent=39 // pred_region
          %s307 = smul.u32 32, %s18
          %p308 = scmp.lt.s32.totalorder %s307, 63
          %s309 = scalar_select %p308, %s307, 63
          %s310 = smul.addr %s309, 8
          %s311 = scalar_lea.vmem %s2, %s310
          %s312 = smul.u32 32, %s18
        $region52: #{tpu_custom_call.1} parent=39 // pred_fallthru
          _
      $region40: #{tpu_custom_call.1} parent=5 // pred_fallthru
        _
      %p313 = scmp.le.s32.totalorder 1, %s18
      %p314 = scmp.lt.s32.totalorder %s18, 3
      %p315 = pnand %p313, %p314
      %p316 = pneg %p315
      // Predicated region
      $region53: #{tpu_custom_call.1} parent=5 // pred_check
        _
      $region54: #{tpu_custom_call.1} parent=5 // pred_check_branch
        %318 = sbr.rel (%p315) target = $region56
      $region55: #{tpu_custom_call.1} parent=5 // pred_region
        %s319 = ssub.s32 %s18, 1
        %s320 = smul.u32 16, %s23
        %p321 = scmp.lt.s32.totalorder %s320, 31
        %s322 = scalar_select %p321, %s320, 31
        %s323 = smul.addr %s322, 2
        %s324 = smul.addr %s323, 4
        %s325 = scalar_lea.vmem %s0, %s324
        %p326 = pneg %p44
        %p327 = pneg %p41
        %s328 = smul.u32 32, %s23
        %p329 = scmp.lt.s32.totalorder %s328, 63
        %s330 = scalar_select %p329, %s328, 63
        %s331 = smul.addr %s330, 8
        %s332 = scalar_lea.vmem %s1, %s331
        %p333 = pneg %p70
        %p334 = pneg %p67
        %s335 = smul.u32 32, %s23
        %p336 = scmp.lt.s32.totalorder %s335, 63
        %s337 = scalar_select %p336, %s335, 63
        %s338 = smul.addr %s337, 8
        %s339 = scalar_lea.vmem %s2, %s338
        %p340 = pneg %p96
        %p341 = pneg %p93
        %p342 = pneg %p117
        %p343 = pneg %p114
        %p344 = pneg %p138
        %p345 = pneg %p135
        %p346 = pneg %p159
        %p347 = pneg %p156
        %p348 = pneg %p180
        %p349 = pneg %p177
        %p350 = pneg %p201
        %p351 = pneg %p198
        %p352 = pneg %p222
        %p353 = pneg %p219
        %p354 = pneg %p248
        %p355 = pneg %p245
        %s356 = sand.u32 %s235, 1
        %s357 = scalar_lea.sflag [#allocation3], %s356
        %s358 = sand.u32 %s235, 1
        %s359 = smul.addr %s358, 16
        %s360 = scalar_lea.vmem [#allocation2], %s359
        %s361 = smul.u32 16, %s23
        %p362 = scmp.lt.s32.totalorder %s361, 31
        %s363 = scalar_select %p362, %s361, 31
        %s364 = smul.addr %s363, 2
        %s365 = smul.addr %s364, 4
        %s366 = scalar_lea.vmem %s0, %s365
        %s367 = smul.u32 16, %s23
        %s368 = smul.u32 32, %s23
        %p369 = scmp.lt.s32.totalorder %s368, 63
        %s370 = scalar_select %p369, %s368, 63
        %s371 = smul.addr %s370, 8
        %s372 = scalar_lea.vmem %s1, %s371
        %s373 = smul.u32 32, %s23
        %s374 = smul.u32 32, %s23
        %p375 = scmp.lt.s32.totalorder %s374, 63
        %s376 = scalar_select %p375, %s374, 63
        %s377 = smul.addr %s376, 8
        %s378 = scalar_lea.vmem %s2, %s377
        %s379 = smul.u32 32, %s23
        %s380 = smul.u32 2, %s23
        %v382 = vld [vmem:[%s366] sm:$0xf]
        %v383 = vld [vmem:[%s366 + $0x4] sm:$0xf]
        %v384 = vld [vmem:[%s366 + $0x8] sm:$0xf]
        %v385 = vld [vmem:[%s366 + $0xc] sm:$0xf]
        %v386 = vld [vmem:[%s366 + $0x10] sm:$0xf]
        %v387 = vld [vmem:[%s366 + $0x14] sm:$0xf]
        %v388 = vld [vmem:[%s366 + $0x18] sm:$0xf]
        %v389 = vld [vmem:[%s366 + $0x1c] sm:$0xf]
        %v390 = vld [vmem:[%s366 + $0x20] sm:$0xf]
        %v391 = vld [vmem:[%s366 + $0x24] sm:$0xf]
        %v392 = vld [vmem:[%s366 + $0x28] sm:$0xf]
        %v393 = vld [vmem:[%s366 + $0x2c] sm:$0xf]
        %v394 = vld [vmem:[%s366 + $0x30] sm:$0xf]
        %v395 = vld [vmem:[%s366 + $0x34] sm:$0xf]
        %v396 = vld [vmem:[%s366 + $0x38] sm:$0xf]
        %v397 = vld [vmem:[%s366 + $0x3c] sm:$0xf]
        %v398 = vld [vmem:[%s366 + $0x40] sm:$0xf]
        %v399 = vld [vmem:[%s366 + $0x44] sm:$0xf]
        %v400 = vld [vmem:[%s366 + $0x48] sm:$0xf]
        %v401 = vld [vmem:[%s366 + $0x4c] sm:$0xf]
        %v402 = vld [vmem:[%s366 + $0x50] sm:$0xf]
        %v403 = vld [vmem:[%s366 + $0x54] sm:$0xf]
        %v404 = vld [vmem:[%s366 + $0x58] sm:$0xf]
        %v405 = vld [vmem:[%s366 + $0x5c] sm:$0xf]
        %v406 = vld [vmem:[%s366 + $0x60] sm:$0xf]
        %v407 = vld [vmem:[%s366 + $0x64] sm:$0xf]
        %v408 = vld [vmem:[%s366 + $0x68] sm:$0xf]
        %v409 = vld [vmem:[%s366 + $0x6c] sm:$0xf]
        %v410 = vld [vmem:[%s366 + $0x70] sm:$0xf]
        %v411 = vld [vmem:[%s366 + $0x74] sm:$0xf]
        %v412 = vld [vmem:[%s366 + $0x78] sm:$0xf]
        %v413 = vld [vmem:[%s366 + $0x7c] sm:$0xf]
        %v414 = vld [vmem:[%s378] sm:$0xff]
        %v415 = vld [vmem:[%s378 + $0x8] sm:$0xff]
        %v416 = vld [vmem:[%s378 + $0x10] sm:$0xff]
        %v417 = vld [vmem:[%s378 + $0x18] sm:$0xff]
        %v418 = vld [vmem:[%s378 + $0x20] sm:$0xff]
        %v419 = vld [vmem:[%s378 + $0x28] sm:$0xff]
        %v420 = vld [vmem:[%s378 + $0x30] sm:$0xff]
        %v421 = vld [vmem:[%s378 + $0x38] sm:$0xff]
        %v422 = vld [vmem:[%s378 + $0x40] sm:$0xff]
        %v423 = vld [vmem:[%s378 + $0x48] sm:$0xff]
        %v424 = vld [vmem:[%s378 + $0x50] sm:$0xff]
        %v425 = vld [vmem:[%s378 + $0x58] sm:$0xff]
        %v426 = vld [vmem:[%s378 + $0x60] sm:$0xff]
        %v427 = vld [vmem:[%s378 + $0x68] sm:$0xff]
        %v428 = vld [vmem:[%s378 + $0x70] sm:$0xff]
        %v429 = vld [vmem:[%s378 + $0x78] sm:$0xff]
        %v430 = vld [vmem:[%s378 + $0x80] sm:$0xff]
        %v431 = vld [vmem:[%s378 + $0x88] sm:$0xff]
        %v432 = vld [vmem:[%s378 + $0x90] sm:$0xff]
        %v433 = vld [vmem:[%s378 + $0x98] sm:$0xff]
        %v434 = vld [vmem:[%s378 + $0xa0] sm:$0xff]
        %v435 = vld [vmem:[%s378 + $0xa8] sm:$0xff]
        %v436 = vld [vmem:[%s378 + $0xb0] sm:$0xff]
        %v437 = vld [vmem:[%s378 + $0xb8] sm:$0xff]
        %v438 = vld [vmem:[%s378 + $0xc0] sm:$0xff]
        %v439 = vld [vmem:[%s378 + $0xc8] sm:$0xff]
        %v440 = vld [vmem:[%s378 + $0xd0] sm:$0xff]
        %v441 = vld [vmem:[%s378 + $0xd8] sm:$0xff]
        %v442 = vld [vmem:[%s378 + $0xe0] sm:$0xff]
        %v443 = vld [vmem:[%s378 + $0xe8] sm:$0xff]
        %v444 = vld [vmem:[%s378 + $0xf0] sm:$0xff]
        %v445 = vld [vmem:[%s378 + $0xf8] sm:$0xff]
        %v446 = vld [vmem:[%s372] sm:$0xff]
        %v447 = vld [vmem:[%s372 + $0x8] sm:$0xff]
        %v448 = vld [vmem:[%s372 + $0x10] sm:$0xff]
        %v449 = vld [vmem:[%s372 + $0x18] sm:$0xff]
        %v450 = vld [vmem:[%s372 + $0x20] sm:$0xff]
        %v451 = vld [vmem:[%s372 + $0x28] sm:$0xff]
        %v452 = vld [vmem:[%s372 + $0x30] sm:$0xff]
        %v453 = vld [vmem:[%s372 + $0x38] sm:$0xff]
        %v454 = vld [vmem:[%s372 + $0x40] sm:$0xff]
        %v455 = vld [vmem:[%s372 + $0x48] sm:$0xff]
        %v456 = vld [vmem:[%s372 + $0x50] sm:$0xff]
        %v457 = vld [vmem:[%s372 + $0x58] sm:$0xff]
        %v458 = vld [vmem:[%s372 + $0x60] sm:$0xff]
        %v459 = vld [vmem:[%s372 + $0x68] sm:$0xff]
        %v460 = vld [vmem:[%s372 + $0x70] sm:$0xff]
        %v461 = vld [vmem:[%s372 + $0x78] sm:$0xff]
        %v462 = vld [vmem:[%s372 + $0x80] sm:$0xff]
        %v463 = vld [vmem:[%s372 + $0x88] sm:$0xff]
        %v464 = vld [vmem:[%s372 + $0x90] sm:$0xff]
        %v465 = vld [vmem:[%s372 + $0x98] sm:$0xff]
        %v466 = vld [vmem:[%s372 + $0xa0] sm:$0xff]
        %v467 = vld [vmem:[%s372 + $0xa8] sm:$0xff]
        %v468 = vld [vmem:[%s372 + $0xb0] sm:$0xff]
        %v469 = vld [vmem:[%s372 + $0xb8] sm:$0xff]
        %v470 = vld [vmem:[%s372 + $0xc0] sm:$0xff]
        %v471 = vld [vmem:[%s372 + $0xc8] sm:$0xff]
        %v472 = vld [vmem:[%s372 + $0xd0] sm:$0xff]
        %v473 = vld [vmem:[%s372 + $0xd8] sm:$0xff]
        %v474 = vld [vmem:[%s372 + $0xe0] sm:$0xff]
        %v475 = vld [vmem:[%s372 + $0xe8] sm:$0xff]
        %v476 = vld [vmem:[%s372 + $0xf0] sm:$0xff]
        %v477 = vld [vmem:[%s372 + $0xf8] sm:$0xff]
        %v478 = vld [vmem:[%s3] sm:$0xf]
        %v479 = vld [vmem:[%s4] sm:$0x1]
        %v481 = vlaneseq
        %v482 = vshrl.u32 %v481, 7
        %v483 = vsub.s32 0, %v482
        %v484 = vrot.slane %v479, %v483
        %vm486 = vcmask 31744
        %v488 = vsel %vm486, %v446, 0
        %v491 = vsel %vm486, %v447, 0
        %v494 = vsel %vm486, %v448, 0
        %v497 = vsel %vm486, %v449, 0
        %v500 = vsel %vm486, %v450, 0
        %v503 = vsel %vm486, %v451, 0
        %v506 = vsel %vm486, %v452, 0
        %v509 = vsel %vm486, %v453, 0
        %v512 = vsel %vm486, %v454, 0
        %v515 = vsel %vm486, %v455, 0
        %v518 = vsel %vm486, %v456, 0
        %v521 = vsel %vm486, %v457, 0
        %v524 = vsel %vm486, %v458, 0
        %v527 = vsel %vm486, %v459, 0
        %v530 = vsel %vm486, %v460, 0
        %v533 = vsel %vm486, %v461, 0
        %v536 = vsel %vm486, %v462, 0
        %v539 = vsel %vm486, %v463, 0
        %v542 = vsel %vm486, %v464, 0
        %v545 = vsel %vm486, %v465, 0
        %v548 = vsel %vm486, %v466, 0
        %v551 = vsel %vm486, %v467, 0
        %v554 = vsel %vm486, %v468, 0
        %v557 = vsel %vm486, %v469, 0
        %v560 = vsel %vm486, %v470, 0
        %v563 = vsel %vm486, %v471, 0
        %v566 = vsel %vm486, %v472, 0
        %v569 = vsel %vm486, %v473, 0
        %v572 = vsel %vm486, %v474, 0
        %v575 = vsel %vm486, %v475, 0
        %v578 = vsel %vm486, %v476, 0
        %v581 = vsel %vm486, %v477, 0
        %vm583 = vcmask 1043456
        %v585 = vsel %vm583, %v478, 0
        %587 = vmatprep.subr.mxu0 0.0
        %588 = vmatpush1.msra.mxu0 %v585
        %589 = vmatprep.subr.mxu0 0.0
        %590 = vmatpush1.msra.mxu0 0.0
        %591 = vmatprep.subr.mxu0 0.0
        %592 = vmatpush1.msra.mxu0 0.0
        %593 = vmatprep.subr.mxu0 0.0
        %594 = vmatpush1.msra.mxu0 0.0
        %595 = vmatprep.subr.mxu0 0.0
        %596 = vmatpush1.msra.mxu0 0.0
        %597 = vmatprep.subr.mxu0 0.0
        %598 = vmatpush1.msra.mxu0 0.0
        %599 = vmatprep.subr.mxu0 0.0
        %600 = vmatpush1.msra.mxu0 0.0
        %601 = vmatprep.subr.mxu0 0.0
        %602 = vmatpush1.msra.mxu0 0.0
        %603 = vmatprep.subr.mxu0 0.0
        %604 = vmatpush1.msra.mxu0 0.0
        %605 = vmatprep.subr.mxu0 0.0
        %606 = vmatpush1.msra.mxu0 0.0
        %607 = vmatprep.subr.mxu0 0.0
        %608 = vmatpush1.msra.mxu0 0.0
        %609 = vmatprep.subr.mxu0 0.0
        %610 = vmatpush1.msra.mxu0 0.0
        %611 = vmatprep.subr.mxu0 0.0
        %612 = vmatpush1.msra.mxu0 0.0
        %613 = vmatprep.subr.mxu0 0.0
        %614 = vmatpush1.msra.mxu0 0.0
        %615 = vmatprep.subr.mxu0 0.0
        %616 = vmatpush1.msra.mxu0 0.0
        %617 = vmatprep.subr.mxu0 0.0
        %618 = vmatpush1.msra.mxu0 0.0
        %619 = vmatprep.subr.mxu0 0.0
        %620 = vmatpush1.msra.mxu0 0.0
        %621 = vmatprep.subr.mxu0 0.0
        %622 = vmatpush1.msra.mxu0 0.0
        %623 = vmatprep.subr.mxu0 0.0
        %624 = vmatpush1.msra.mxu0 0.0
        %625 = vmatprep.subr.mxu0 0.0
        %626 = vmatpush1.msra.mxu0 0.0
        %627 = vmatprep.subr.mxu0 0.0
        %628 = vmatpush1.msra.mxu0 0.0
        %629 = vmatprep.subr.mxu0 0.0
        %630 = vmatpush1.msra.mxu0 0.0
        %631 = vmatprep.subr.mxu0 0.0
        %632 = vmatpush1.msra.mxu0 0.0
        %633 = vmatprep.subr.mxu0 0.0
        %634 = vmatpush1.msra.mxu0 0.0
        %635 = vmatprep.subr.mxu0 0.0
        %636 = vmatpush1.msra.mxu0 0.0
        %637 = vmatprep.subr.mxu0 0.0
        %638 = vmatpush1.msra.mxu0 0.0
        %639 = vmatprep.subr.mxu0 0.0
        %640 = vmatpush1.msra.mxu0 0.0
        %641 = vmatprep.subr.mxu0 0.0
        %642 = vmatpush1.msra.mxu0 0.0
        %643 = vmatprep.subr.mxu0 0.0
        %644 = vmatpush1.msra.mxu0 0.0
        %645 = vmatprep.subr.mxu0 0.0
        %646 = vmatpush1.msra.mxu0 0.0
        %647 = vmatprep.subr.mxu0 0.0
        %648 = vmatpush1.msra.mxu0 0.0
        %649 = vmatprep.subr.mxu0 0.0
        %650 = vmatpush1.msra.mxu0 0.0
        %651 = vmatprep.mubr.f32.mxu0 0.0
        %652 = vmatmul.mubr.f32.gmra.mrb[0].mxu0 %v488
        %v653 = vpop.f32.mrb[0].mxu0
        %v654 = vadd.f32 %v484, %v653
        %v655 = vpop.f32.mrb[0].mxu0
        %656 = vmatprep.mubr.f32.mxu0 0.0
        %657 = vmatmul.mubr.f32.gmra.mrb[0].mxu0 %v491
        %v658 = vpop.f32.mrb[0].mxu0
        %v659 = vadd.f32 %v484, %v658
        %v660 = vpop.f32.mrb[0].mxu0
        %661 = vmatprep.mubr.f32.mxu0 0.0
        %662 = vmatmul.mubr.f32.gmra.mrb[0].mxu0 %v494
        %v663 = vpop.f32.mrb[0].mxu0
        %v664 = vadd.f32 %v484, %v663
        %v665 = vpop.f32.mrb[0].mxu0
        %666 = vmatprep.mubr.f32.mxu0 0.0
        %667 = vmatmul.mubr.f32.gmra.mrb[0].mxu0 %v497
        %v668 = vpop.f32.mrb[0].mxu0
        %v669 = vadd.f32 %v484, %v668
        %v670 = vpop.f32.mrb[0].mxu0
        %671 = vmatprep.mubr.f32.mxu0 0.0
        %672 = vmatmul.mubr.f32.gmra.mrb[0].mxu0 %v500
        %v673 = vpop.f32.mrb[0].mxu0
        %v674 = vadd.f32 %v484, %v673
        %v675 = vpop.f32.mrb[0].mxu0
        %676 = vmatprep.mubr.f32.mxu0 0.0
        %677 = vmatmul.mubr.f32.gmra.mrb[0].mxu0 %v503
        %v678 = vpop.f32.mrb[0].mxu0
        %v679 = vadd.f32 %v484, %v678
        %v680 = vpop.f32.mrb[0].mxu0
        %681 = vmatprep.mubr.f32.mxu0 0.0
        %682 = vmatmul.mubr.f32.gmra.mrb[0].mxu0 %v506
        %v683 = vpop.f32.mrb[0].mxu0
        %v684 = vadd.f32 %v484, %v683
        %v685 = vpop.f32.mrb[0].mxu0
        %686 = vmatprep.mubr.f32.mxu0 0.0
        %687 = vmatmul.mubr.f32.gmra.mrb[0].mxu0 %v509
        %v688 = vpop.f32.mrb[0].mxu0
        %v689 = vadd.f32 %v484, %v688
        %v690 = vpop.f32.mrb[0].mxu0
        %691 = vmatprep.mubr.f32.mxu0 0.0
        %692 = vmatmul.mubr.f32.gmra.mrb[0].mxu0 %v512
        %v693 = vpop.f32.mrb[0].mxu0
        %v694 = vadd.f32 %v484, %v693
        %v695 = vpop.f32.mrb[0].mxu0
        %696 = vmatprep.mubr.f32.mxu0 0.0
        %697 = vmatmul.mubr.f32.gmra.mrb[0].mxu0 %v515
        %v698 = vpop.f32.mrb[0].mxu0
        %v699 = vadd.f32 %v484, %v698
        %v700 = vpop.f32.mrb[0].mxu0
        %701 = vmatprep.mubr.f32.mxu0 0.0
        %702 = vmatmul.mubr.f32.gmra.mrb[0].mxu0 %v518
        %v703 = vpop.f32.mrb[0].mxu0
        %v704 = vadd.f32 %v484, %v703
        %v705 = vpop.f32.mrb[0].mxu0
        %706 = vmatprep.mubr.f32.mxu0 0.0
        %707 = vmatmul.mubr.f32.gmra.mrb[0].mxu0 %v521
        %v708 = vpop.f32.mrb[0].mxu0
        %v709 = vadd.f32 %v484, %v708
        %v710 = vpop.f32.mrb[0].mxu0
        %711 = vmatprep.mubr.f32.mxu0 0.0
        %712 = vmatmul.mubr.f32.gmra.mrb[0].mxu0 %v524
        %v713 = vpop.f32.mrb[0].mxu0
        %v714 = vadd.f32 %v484, %v713
        %v715 = vpop.f32.mrb[0].mxu0
        %716 = vmatprep.mubr.f32.mxu0 0.0
        %717 = vmatmul.mubr.f32.gmra.mrb[0].mxu0 %v527
        %v718 = vpop.f32.mrb[0].mxu0
        %v719 = vadd.f32 %v484, %v718
        %v720 = vpop.f32.mrb[0].mxu0
        %721 = vmatprep.mubr.f32.mxu0 0.0
        %722 = vmatmul.mubr.f32.gmra.mrb[0].mxu0 %v530
        %v723 = vpop.f32.mrb[0].mxu0
        %v724 = vadd.f32 %v484, %v723
        %v725 = vpop.f32.mrb[0].mxu0
        %726 = vmatprep.mubr.f32.mxu0 0.0
        %727 = vmatmul.mubr.f32.gmra.mrb[0].mxu0 %v533
        %v728 = vpop.f32.mrb[0].mxu0
        %v729 = vadd.f32 %v484, %v728
        %v730 = vpop.f32.mrb[0].mxu0
        %731 = vmatprep.mubr.f32.mxu0 0.0
        %732 = vmatmul.mubr.f32.gmra.mrb[0].mxu0 %v536
        %v733 = vpop.f32.mrb[0].mxu0
        %v734 = vadd.f32 %v484, %v733
        %v735 = vpop.f32.mrb[0].mxu0
        %736 = vmatprep.mubr.f32.mxu0 0.0
        %737 = vmatmul.mubr.f32.gmra.mrb[0].mxu0 %v539
        %v738 = vpop.f32.mrb[0].mxu0
        %v739 = vadd.f32 %v484, %v738
        %v740 = vpop.f32.mrb[0].mxu0
        %741 = vmatprep.mubr.f32.mxu0 0.0
        %742 = vmatmul.mubr.f32.gmra.mrb[0].mxu0 %v542
        %v743 = vpop.f32.mrb[0].mxu0
        %v744 = vadd.f32 %v484, %v743
        %v745 = vpop.f32.mrb[0].mxu0
        %746 = vmatprep.mubr.f32.mxu0 0.0
        %747 = vmatmul.mubr.f32.gmra.mrb[0].mxu0 %v545
        %v748 = vpop.f32.mrb[0].mxu0
        %v749 = vadd.f32 %v484, %v748
        %v750 = vpop.f32.mrb[0].mxu0
        %751 = vmatprep.mubr.f32.mxu0 0.0
        %752 = vmatmul.mubr.f32.gmra.mrb[0].mxu0 %v548
        %v753 = vpop.f32.mrb[0].mxu0
        %v754 = vadd.f32 %v484, %v753
        %v755 = vpop.f32.mrb[0].mxu0
        %756 = vmatprep.mubr.f32.mxu0 0.0
        %757 = vmatmul.mubr.f32.gmra.mrb[0].mxu0 %v551
        %v758 = vpop.f32.mrb[0].mxu0
        %v759 = vadd.f32 %v484, %v758
        %v760 = vpop.f32.mrb[0].mxu0
        %761 = vmatprep.mubr.f32.mxu0 0.0
        %762 = vmatmul.mubr.f32.gmra.mrb[0].mxu0 %v554
        %v763 = vpop.f32.mrb[0].mxu0
        %v764 = vadd.f32 %v484, %v763
        %v765 = vpop.f32.mrb[0].mxu0
        %766 = vmatprep.mubr.f32.mxu0 0.0
        %767 = vmatmul.mubr.f32.gmra.mrb[0].mxu0 %v557
        %v768 = vpop.f32.mrb[0].mxu0
        %v769 = vadd.f32 %v484, %v768
        %v770 = vpop.f32.mrb[0].mxu0
        %771 = vmatprep.mubr.f32.mxu0 0.0
        %772 = vmatmul.mubr.f32.gmra.mrb[0].mxu0 %v560
        %v773 = vpop.f32.mrb[0].mxu0
        %v774 = vadd.f32 %v484, %v773
        %v775 = vpop.f32.mrb[0].mxu0
        %776 = vmatprep.mubr.f32.mxu0 0.0
        %777 = vmatmul.mubr.f32.gmra.mrb[0].mxu0 %v563
        %v778 = vpop.f32.mrb[0].mxu0
        %v779 = vadd.f32 %v484, %v778
        %v780 = vpop.f32.mrb[0].mxu0
        %781 = vmatprep.mubr.f32.mxu0 0.0
        %782 = vmatmul.mubr.f32.gmra.mrb[0].mxu0 %v566
        %v783 = vpop.f32.mrb[0].mxu0
        %v784 = vadd.f32 %v484, %v783
        %v785 = vpop.f32.mrb[0].mxu0
        %786 = vmatprep.mubr.f32.mxu0 0.0
        %787 = vmatmul.mubr.f32.gmra.mrb[0].mxu0 %v569
        %v788 = vpop.f32.mrb[0].mxu0
        %v789 = vadd.f32 %v484, %v788
        %v790 = vpop.f32.mrb[0].mxu0
        %791 = vmatprep.mubr.f32.mxu0 0.0
        %792 = vmatmul.mubr.f32.gmra.mrb[0].mxu0 %v572
        %v793 = vpop.f32.mrb[0].mxu0
        %v794 = vadd.f32 %v484, %v793
        %v795 = vpop.f32.mrb[0].mxu0
        %796 = vmatprep.mubr.f32.mxu0 0.0
        %797 = vmatmul.mubr.f32.gmra.mrb[0].mxu0 %v575
        %v798 = vpop.f32.mrb[0].mxu0
        %v799 = vadd.f32 %v484, %v798
        %v800 = vpop.f32.mrb[0].mxu0
        %801 = vmatprep.mubr.f32.mxu0 0.0
        %802 = vmatmul.mubr.f32.gmra.mrb[0].mxu0 %v578
        %v803 = vpop.f32.mrb[0].mxu0
        %v804 = vadd.f32 %v484, %v803
        %v805 = vpop.f32.mrb[0].mxu0
        %806 = vmatprep.mubr.f32.mxu0 0.0
        %807 = vmatmul.mubr.f32.gmra.mrb[0].mxu0 %v581
        %v808 = vpop.f32.mrb[0].mxu0
        %v809 = vadd.f32 %v484, %v808
        %v810 = vpop.f32.mrb[0].mxu0
        %811 = vdwg.mxu0
        %v812 = vpack.c.bf16 %v659, %v654
        %v813 = vpack.c.bf16 %v669, %v664
        %v814 = vpack.c.bf16 %v679, %v674
        %v815 = vpack.c.bf16 %v689, %v684
        %v816 = vpack.c.bf16 %v699, %v694
        %v817 = vpack.c.bf16 %v709, %v704
        %v818 = vpack.c.bf16 %v719, %v714
        %v819 = vpack.c.bf16 %v729, %v724
        %v820 = vpack.c.bf16 %v739, %v734
        %v821 = vpack.c.bf16 %v749, %v744
        %v822 = vpack.c.bf16 %v759, %v754
        %v823 = vpack.c.bf16 %v769, %v764
        %v824 = vpack.c.bf16 %v779, %v774
        %v825 = vpack.c.bf16 %v789, %v784
        %v826 = vpack.c.bf16 %v799, %v794
        %v827 = vpack.c.bf16 %v809, %v804
        %v828 = vld [vmem:[%s5] sm:$0xf]
        %v829 = vld [vmem:[%s5 + $0x4] sm:$0xf]
        %v830 = vld [vmem:[%s5 + $0x8] sm:$0xf]
        %v831 = vld [vmem:[%s5 + $0xc] sm:$0xf]
        %v832 = vld [vmem:[%s5 + $0x10] sm:$0xf]
        %v833 = vld [vmem:[%s5 + $0x14] sm:$0xf]
        %v834 = vld [vmem:[%s5 + $0x18] sm:$0xf]
        %v835 = vld [vmem:[%s5 + $0x1c] sm:$0xf]
        %v836 = vld [vmem:[%s5 + $0x20] sm:$0xf]
        %v837 = vld [vmem:[%s5 + $0x24] sm:$0xf]
        %v838 = vld [vmem:[%s5 + $0x28] sm:$0xf]
        %v839 = vld [vmem:[%s5 + $0x2c] sm:$0xf]
        %v840 = vld [vmem:[%s5 + $0x30] sm:$0xf]
        %v841 = vld [vmem:[%s5 + $0x34] sm:$0xf]
        %v842 = vld [vmem:[%s5 + $0x38] sm:$0xf]
        %v843 = vld [vmem:[%s5 + $0x3c] sm:$0xf]
        %v860 = vunpack.c.l.b16 %v828
        %v861 = vunpack.c.l.b16 %v829
        %v862 = vunpack.c.l.b16 %v830
        %v863 = vunpack.c.l.b16 %v831
        %v864 = vunpack.c.l.b16 %v832
        %v865 = vunpack.c.l.b16 %v833
        %v866 = vunpack.c.l.b16 %v834
        %v867 = vunpack.c.l.b16 %v835
        %v868 = vunpack.c.l.b16 %v836
        %v869 = vunpack.c.l.b16 %v837
        %v870 = vunpack.c.l.b16 %v838
        %v871 = vunpack.c.l.b16 %v839
        %v872 = vunpack.c.l.b16 %v840
        %v873 = vunpack.c.l.b16 %v841
        %v874 = vunpack.c.l.b16 %v842
        %v875 = vunpack.c.l.b16 %v843
        %v876 = vpack.c.b16 %v861, %v860
        %v877 = vpack.c.b16 %v863, %v862
        %v878 = vpack.c.b16 %v865, %v864
        %v879 = vpack.c.b16 %v867, %v866
        %v880 = vpack.c.b16 %v869, %v868
        %v881 = vpack.c.b16 %v871, %v870
        %v882 = vpack.c.b16 %v873, %v872
        %v883 = vpack.c.b16 %v875, %v874
        %892 = vmatprep.subr.bf16.mxu0 0
        %893 = vmatpush1.bf16.msra.mxu0 %v876
        %894 = vmatprep.subr.bf16.mxu0 0
        %895 = vmatpush1.bf16.msra.mxu0 %v877
        %896 = vmatprep.subr.bf16.mxu0 0
        %897 = vmatpush1.bf16.msra.mxu0 %v878
        %898 = vmatprep.subr.bf16.mxu0 0
        %899 = vmatpush1.bf16.msra.mxu0 %v879
        %900 = vmatprep.subr.bf16.mxu0 0
        %901 = vmatpush1.bf16.msra.mxu0 %v880
        %902 = vmatprep.subr.bf16.mxu0 0
        %903 = vmatpush1.bf16.msra.mxu0 %v881
        %904 = vmatprep.subr.bf16.mxu0 0
        %905 = vmatpush1.bf16.msra.mxu0 %v882
        %906 = vmatprep.subr.bf16.mxu0 0
        %907 = vmatpush1.bf16.msra.mxu0 %v883
        %908 = vmatprep.subr.bf16.mxu0 0
        %909 = vmatpush1.bf16.msra.mxu0 0
        %910 = vmatprep.subr.bf16.mxu0 0
        %911 = vmatpush1.bf16.msra.mxu0 0
        %912 = vmatprep.subr.bf16.mxu0 0
        %913 = vmatpush1.bf16.msra.mxu0 0
        %914 = vmatprep.subr.bf16.mxu0 0
        %915 = vmatpush1.bf16.msra.mxu0 0
        %916 = vmatprep.subr.bf16.mxu0 0
        %917 = vmatpush1.bf16.msra.mxu0 0
        %918 = vmatprep.subr.bf16.mxu0 0
        %919 = vmatpush1.bf16.msra.mxu0 0
        %920 = vmatprep.subr.bf16.mxu0 0
        %921 = vmatpush1.bf16.msra.mxu0 0
        %922 = vmatprep.subr.bf16.mxu0 0
        %923 = vmatpush1.bf16.msra.mxu0 0
        %924 = vmatprep.mubr.bf16.mxu0 0
        %925 = vmatmul.mubr.bf16.gmra.mrb[0].mxu0 %v812
        %v926 = vpop.f32.mrb[0].mxu0
        %v927 = vadd.f32 0.0, %v926
        %v928 = vpop.f32.mrb[0].mxu0
        %v929 = vpop.f32.mrb[0].mxu0
        %v930 = vadd.f32 0.0, %v929
        %v931 = vpop.f32.mrb[0].mxu0
        %932 = vmatprep.mubr.bf16.mxu0 0
        %933 = vmatmul.mubr.bf16.gmra.mrb[0].mxu0 %v813
        %v934 = vpop.f32.mrb[0].mxu0
        %v935 = vadd.f32 0.0, %v934
        %v936 = vpop.f32.mrb[0].mxu0
        %v937 = vpop.f32.mrb[0].mxu0
        %v938 = vadd.f32 0.0, %v937
        %v939 = vpop.f32.mrb[0].mxu0
        %940 = vmatprep.mubr.bf16.mxu0 0
        %941 = vmatmul.mubr.bf16.gmra.mrb[0].mxu0 %v814
        %v942 = vpop.f32.mrb[0].mxu0
        %v943 = vadd.f32 0.0, %v942
        %v944 = vpop.f32.mrb[0].mxu0
        %v945 = vpop.f32.mrb[0].mxu0
        %v946 = vadd.f32 0.0, %v945
        %v947 = vpop.f32.mrb[0].mxu0
        %948 = vmatprep.mubr.bf16.mxu0 0
        %949 = vmatmul.mubr.bf16.gmra.mrb[0].mxu0 %v815
        %v950 = vpop.f32.mrb[0].mxu0
        %v951 = vadd.f32 0.0, %v950
        %v952 = vpop.f32.mrb[0].mxu0
        %v953 = vpop.f32.mrb[0].mxu0
        %v954 = vadd.f32 0.0, %v953
        %v955 = vpop.f32.mrb[0].mxu0
        %956 = vmatprep.mubr.bf16.mxu0 0
        %957 = vmatmul.mubr.bf16.gmra.mrb[0].mxu0 %v816
        %v958 = vpop.f32.mrb[0].mxu0
        %v959 = vadd.f32 0.0, %v958
        %v960 = vpop.f32.mrb[0].mxu0
        %v961 = vpop.f32.mrb[0].mxu0
        %v962 = vadd.f32 0.0, %v961
        %v963 = vpop.f32.mrb[0].mxu0
        %964 = vmatprep.mubr.bf16.mxu0 0
        %965 = vmatmul.mubr.bf16.gmra.mrb[0].mxu0 %v817
        %v966 = vpop.f32.mrb[0].mxu0
        %v967 = vadd.f32 0.0, %v966
        %v968 = vpop.f32.mrb[0].mxu0
        %v969 = vpop.f32.mrb[0].mxu0
        %v970 = vadd.f32 0.0, %v969
        %v971 = vpop.f32.mrb[0].mxu0
        %972 = vmatprep.mubr.bf16.mxu0 0
        %973 = vmatmul.mubr.bf16.gmra.mrb[0].mxu0 %v818
        %v974 = vpop.f32.mrb[0].mxu0
        %v975 = vadd.f32 0.0, %v974
        %v976 = vpop.f32.mrb[0].mxu0
        %v977 = vpop.f32.mrb[0].mxu0
        %v978 = vadd.f32 0.0, %v977
        %v979 = vpop.f32.mrb[0].mxu0
        %980 = vmatprep.mubr.bf16.mxu0 0
        %981 = vmatmul.mubr.bf16.gmra.mrb[0].mxu0 %v819
        %v982 = vpop.f32.mrb[0].mxu0
        %v983 = vadd.f32 0.0, %v982
        %v984 = vpop.f32.mrb[0].mxu0
        %v985 = vpop.f32.mrb[0].mxu0
        %v986 = vadd.f32 0.0, %v985
        %v987 = vpop.f32.mrb[0].mxu0
        %988 = vmatprep.mubr.bf16.mxu0 0
        %989 = vmatmul.mubr.bf16.gmra.mrb[0].mxu0 %v820
        %v990 = vpop.f32.mrb[0].mxu0
        %v991 = vadd.f32 0.0, %v990
        %v992 = vpop.f32.mrb[0].mxu0
        %v993 = vpop.f32.mrb[0].mxu0
        %v994 = vadd.f32 0.0, %v993
        %v995 = vpop.f32.mrb[0].mxu0
        %996 = vmatprep.mubr.bf16.mxu0 0
        %997 = vmatmul.mubr.bf16.gmra.mrb[0].mxu0 %v821
        %v998 = vpop.f32.mrb[0].mxu0
        %v999 = vadd.f32 0.0, %v998
        %v1000 = vpop.f32.mrb[0].mxu0
        %v1001 = vpop.f32.mrb[0].mxu0
        %v1002 = vadd.f32 0.0, %v1001
        %v1003 = vpop.f32.mrb[0].mxu0
        %1004 = vmatprep.mubr.bf16.mxu0 0
        %1005 = vmatmul.mubr.bf16.gmra.mrb[0].mxu0 %v822
        %v1006 = vpop.f32.mrb[0].mxu0
        %v1007 = vadd.f32 0.0, %v1006
        %v1008 = vpop.f32.mrb[0].mxu0
        %v1009 = vpop.f32.mrb[0].mxu0
        %v1010 = vadd.f32 0.0, %v1009
        %v1011 = vpop.f32.mrb[0].mxu0
        %1012 = vmatprep.mubr.bf16.mxu0 0
        %1013 = vmatmul.mubr.bf16.gmra.mrb[0].mxu0 %v823
        %v1014 = vpop.f32.mrb[0].mxu0
        %v1015 = vadd.f32 0.0, %v1014
        %v1016 = vpop.f32.mrb[0].mxu0
        %v1017 = vpop.f32.mrb[0].mxu0
        %v1018 = vadd.f32 0.0, %v1017
        %v1019 = vpop.f32.mrb[0].mxu0
        %1020 = vmatprep.mubr.bf16.mxu0 0
        %1021 = vmatmul.mubr.bf16.gmra.mrb[0].mxu0 %v824
        %v1022 = vpop.f32.mrb[0].mxu0
        %v1023 = vadd.f32 0.0, %v1022
        %v1024 = vpop.f32.mrb[0].mxu0
        %v1025 = vpop.f32.mrb[0].mxu0
        %v1026 = vadd.f32 0.0, %v1025
        %v1027 = vpop.f32.mrb[0].mxu0
        %1028 = vmatprep.mubr.bf16.mxu0 0
        %1029 = vmatmul.mubr.bf16.gmra.mrb[0].mxu0 %v825
        %v1030 = vpop.f32.mrb[0].mxu0
        %v1031 = vadd.f32 0.0, %v1030
        %v1032 = vpop.f32.mrb[0].mxu0
        %v1033 = vpop.f32.mrb[0].mxu0
        %v1034 = vadd.f32 0.0, %v1033
        %v1035 = vpop.f32.mrb[0].mxu0
        %1036 = vmatprep.mubr.bf16.mxu0 0
        %1037 = vmatmul.mubr.bf16.gmra.mrb[0].mxu0 %v826
        %v1038 = vpop.f32.mrb[0].mxu0
        %v1039 = vadd.f32 0.0, %v1038
        %v1040 = vpop.f32.mrb[0].mxu0
        %v1041 = vpop.f32.mrb[0].mxu0
        %v1042 = vadd.f32 0.0, %v1041
        %v1043 = vpop.f32.mrb[0].mxu0
        %1044 = vmatprep.mubr.bf16.mxu0 0
        %1045 = vmatmul.mubr.bf16.gmra.mrb[0].mxu0 %v827
        %v1046 = vpop.f32.mrb[0].mxu0
        %v1047 = vadd.f32 0.0, %v1046
        %v1048 = vpop.f32.mrb[0].mxu0
        %v1049 = vpop.f32.mrb[0].mxu0
        %v1050 = vadd.f32 0.0, %v1049
        %v1051 = vpop.f32.mrb[0].mxu0
        %1052 = vdwg.mxu0
        %v1053 = vpack.c.bf16 %v930, %v927
        %v1054 = vpack.c.bf16 %v938, %v935
        %v1055 = vpack.c.bf16 %v946, %v943
        %v1056 = vpack.c.bf16 %v954, %v951
        %v1057 = vpack.c.bf16 %v962, %v959
        %v1058 = vpack.c.bf16 %v970, %v967
        %v1059 = vpack.c.bf16 %v978, %v975
        %v1060 = vpack.c.bf16 %v986, %v983
        %v1061 = vpack.c.bf16 %v994, %v991
        %v1062 = vpack.c.bf16 %v1002, %v999
        %v1063 = vpack.c.bf16 %v1010, %v1007
        %v1064 = vpack.c.bf16 %v1018, %v1015
        %v1065 = vpack.c.bf16 %v1026, %v1023
        %v1066 = vpack.c.bf16 %v1034, %v1031
        %v1067 = vpack.c.bf16 %v1042, %v1039
        %v1068 = vpack.c.bf16 %v1050, %v1047
        %v1071 = vunpack.c.l.b16 %v382
        %v1072 = vunpack.c.l.b16 %v383
        %v1073 = vpack.c.b16 %v1072, %v1071
        %vm1074 = vcmask 130048
        %v1076 = vsel %vm1074, %v1073, 0
        %1078 = vmatprep.subr.bf16.mxu0 0
        %1079 = vmatpush1.bf16.msra.mxu0 %v1053
        %1080 = vmatprep.subr.bf16.mxu0 0
        %1081 = vmatpush1.bf16.msra.mxu0 0
        %1082 = vmatprep.subr.bf16.mxu0 0
        %1083 = vmatpush1.bf16.msra.mxu0 0
        %1084 = vmatprep.subr.bf16.mxu0 0
        %1085 = vmatpush1.bf16.msra.mxu0 0
        %1086 = vmatprep.subr.bf16.mxu0 0
        %1087 = vmatpush1.bf16.msra.mxu0 0
        %1088 = vmatprep.subr.bf16.mxu0 0
        %1089 = vmatpush1.bf16.msra.mxu0 0
        %1090 = vmatprep.subr.bf16.mxu0 0
        %1091 = vmatpush1.bf16.msra.mxu0 0
        %1092 = vmatprep.subr.bf16.mxu0 0
        %1093 = vmatpush1.bf16.msra.mxu0 0
        %1094 = vmatprep.subr.bf16.mxu0 0
        %1095 = vmatpush1.bf16.msra.mxu0 0
        %1096 = vmatprep.subr.bf16.mxu0 0
        %1097 = vmatpush1.bf16.msra.mxu0 0
        %1098 = vmatprep.subr.bf16.mxu0 0
        %1099 = vmatpush1.bf16.msra.mxu0 0
        %1100 = vmatprep.subr.bf16.mxu0 0
        %1101 = vmatpush1.bf16.msra.mxu0 0
        %1102 = vmatprep.subr.bf16.mxu0 0
        %1103 = vmatpush1.bf16.msra.mxu0 0
        %1104 = vmatprep.subr.bf16.mxu0 0
        %1105 = vmatpush1.bf16.msra.mxu0 0
        %1106 = vmatprep.subr.bf16.mxu0 0
        %1107 = vmatpush1.bf16.msra.mxu0 0
        %1108 = vmatprep.subr.bf16.mxu0 0
        %1109 = vmatpush1.bf16.msra.mxu0 0
        %1110 = vmatprep.mubr.bf16.mxu0 0
        %1111 = vmatmul.mubr.bf16.gmra.mrb[0].mxu0 %v1076
        %v1112 = vpop.f32.mrb[0].mxu0
        %v1113 = vadd.f32 0.0, %v1112
        %v1114 = vpop.f32.mrb[0].mxu0
        %v1115 = vpop.f32.mrb[0].mxu0
        %v1116 = vadd.f32 0.0, %v1115
        %v1117 = vpop.f32.mrb[0].mxu0
        %1118 = vdwg.mxu0
        %v1121 = vunpack.c.l.b16 %v384
        %v1122 = vunpack.c.l.b16 %v385
        %v1123 = vpack.c.b16 %v1122, %v1121
        %v1125 = vsel %vm1074, %v1123, 0
        %1127 = vmatprep.subr.bf16.mxu0 0
        %1128 = vmatpush1.bf16.msra.mxu0 %v1054
        %1129 = vmatprep.subr.bf16.mxu0 0
        %1130 = vmatpush1.bf16.msra.mxu0 0
        %1131 = vmatprep.subr.bf16.mxu0 0
        %1132 = vmatpush1.bf16.msra.mxu0 0
        %1133 = vmatprep.subr.bf16.mxu0 0
        %1134 = vmatpush1.bf16.msra.mxu0 0
        %1135 = vmatprep.subr.bf16.mxu0 0
        %1136 = vmatpush1.bf16.msra.mxu0 0
        %1137 = vmatprep.subr.bf16.mxu0 0
        %1138 = vmatpush1.bf16.msra.mxu0 0
        %1139 = vmatprep.subr.bf16.mxu0 0
        %1140 = vmatpush1.bf16.msra.mxu0 0
        %1141 = vmatprep.subr.bf16.mxu0 0
        %1142 = vmatpush1.bf16.msra.mxu0 0
        %1143 = vmatprep.subr.bf16.mxu0 0
        %1144 = vmatpush1.bf16.msra.mxu0 0
        %1145 = vmatprep.subr.bf16.mxu0 0
        %1146 = vmatpush1.bf16.msra.mxu0 0
        %1147 = vmatprep.subr.bf16.mxu0 0
        %1148 = vmatpush1.bf16.msra.mxu0 0
        %1149 = vmatprep.subr.bf16.mxu0 0
        %1150 = vmatpush1.bf16.msra.mxu0 0
        %1151 = vmatprep.subr.bf16.mxu0 0
        %1152 = vmatpush1.bf16.msra.mxu0 0
        %1153 = vmatprep.subr.bf16.mxu0 0
        %1154 = vmatpush1.bf16.msra.mxu0 0
        %1155 = vmatprep.subr.bf16.mxu0 0
        %1156 = vmatpush1.bf16.msra.mxu0 0
        %1157 = vmatprep.subr.bf16.mxu0 0
        %1158 = vmatpush1.bf16.msra.mxu0 0
        %1159 = vmatprep.mubr.bf16.mxu0 0
        %1160 = vmatmul.mubr.bf16.gmra.mrb[0].mxu0 %v1125
        %v1161 = vpop.f32.mrb[0].mxu0
        %v1162 = vadd.f32 0.0, %v1161
        %v1163 = vpop.f32.mrb[0].mxu0
        %v1164 = vpop.f32.mrb[0].mxu0
        %v1165 = vadd.f32 0.0, %v1164
        %v1166 = vpop.f32.mrb[0].mxu0
        %1167 = vdwg.mxu0
        %v1170 = vunpack.c.l.b16 %v386
        %v1171 = vunpack.c.l.b16 %v387
        %v1172 = vpack.c.b16 %v1171, %v1170
        %v1174 = vsel %vm1074, %v1172, 0
        %1176 = vmatprep.subr.bf16.mxu0 0
        %1177 = vmatpush1.bf16.msra.mxu0 %v1055
        %1178 = vmatprep.subr.bf16.mxu0 0
        %1179 = vmatpush1.bf16.msra.mxu0 0
        %1180 = vmatprep.subr.bf16.mxu0 0
        %1181 = vmatpush1.bf16.msra.mxu0 0
        %1182 = vmatprep.subr.bf16.mxu0 0
        %1183 = vmatpush1.bf16.msra.mxu0 0
        %1184 = vmatprep.subr.bf16.mxu0 0
        %1185 = vmatpush1.bf16.msra.mxu0 0
        %1186 = vmatprep.subr.bf16.mxu0 0
        %1187 = vmatpush1.bf16.msra.mxu0 0
        %1188 = vmatprep.subr.bf16.mxu0 0
        %1189 = vmatpush1.bf16.msra.mxu0 0
        %1190 = vmatprep.subr.bf16.mxu0 0
        %1191 = vmatpush1.bf16.msra.mxu0 0
        %1192 = vmatprep.subr.bf16.mxu0 0
        %1193 = vmatpush1.bf16.msra.mxu0 0
        %1194 = vmatprep.subr.bf16.mxu0 0
        %1195 = vmatpush1.bf16.msra.mxu0 0
        %1196 = vmatprep.subr.bf16.mxu0 0
        %1197 = vmatpush1.bf16.msra.mxu0 0
        %1198 = vmatprep.subr.bf16.mxu0 0
        %1199 = vmatpush1.bf16.msra.mxu0 0
        %1200 = vmatprep.subr.bf16.mxu0 0
        %1201 = vmatpush1.bf16.msra.mxu0 0
        %1202 = vmatprep.subr.bf16.mxu0 0
        %1203 = vmatpush1.bf16.msra.mxu0 0
        %1204 = vmatprep.subr.bf16.mxu0 0
        %1205 = vmatpush1.bf16.msra.mxu0 0
        %1206 = vmatprep.subr.bf16.mxu0 0
        %1207 = vmatpush1.bf16.msra.mxu0 0
        %1208 = vmatprep.mubr.bf16.mxu0 0
        %1209 = vmatmul.mubr.bf16.gmra.mrb[0].mxu0 %v1174
        %v1210 = vpop.f32.mrb[0].mxu0
        %v1211 = vadd.f32 0.0, %v1210
        %v1212 = vpop.f32.mrb[0].mxu0
        %v1213 = vpop.f32.mrb[0].mxu0
        %v1214 = vadd.f32 0.0, %v1213
        %v1215 = vpop.f32.mrb[0].mxu0
        %1216 = vdwg.mxu0
        %v1219 = vunpack.c.l.b16 %v388
        %v1220 = vunpack.c.l.b16 %v389
        %v1221 = vpack.c.b16 %v1220, %v1219
        %v1223 = vsel %vm1074, %v1221, 0
        %1225 = vmatprep.subr.bf16.mxu0 0
        %1226 = vmatpush1.bf16.msra.mxu0 %v1056
        %1227 = vmatprep.subr.bf16.mxu0 0
        %1228 = vmatpush1.bf16.msra.mxu0 0
        %1229 = vmatprep.subr.bf16.mxu0 0
        %1230 = vmatpush1.bf16.msra.mxu0 0
        %1231 = vmatprep.subr.bf16.mxu0 0
        %1232 = vmatpush1.bf16.msra.mxu0 0
        %1233 = vmatprep.subr.bf16.mxu0 0
        %1234 = vmatpush1.bf16.msra.mxu0 0
        %1235 = vmatprep.subr.bf16.mxu0 0
        %1236 = vmatpush1.bf16.msra.mxu0 0
        %1237 = vmatprep.subr.bf16.mxu0 0
        %1238 = vmatpush1.bf16.msra.mxu0 0
        %1239 = vmatprep.subr.bf16.mxu0 0
        %1240 = vmatpush1.bf16.msra.mxu0 0
        %1241 = vmatprep.subr.bf16.mxu0 0
        %1242 = vmatpush1.bf16.msra.mxu0 0
        %1243 = vmatprep.subr.bf16.mxu0 0
        %1244 = vmatpush1.bf16.msra.mxu0 0
        %1245 = vmatprep.subr.bf16.mxu0 0
        %1246 = vmatpush1.bf16.msra.mxu0 0
        %1247 = vmatprep.subr.bf16.mxu0 0
        %1248 = vmatpush1.bf16.msra.mxu0 0
        %1249 = vmatprep.subr.bf16.mxu0 0
        %1250 = vmatpush1.bf16.msra.mxu0 0
        %1251 = vmatprep.subr.bf16.mxu0 0
        %1252 = vmatpush1.bf16.msra.mxu0 0
        %1253 = vmatprep.subr.bf16.mxu0 0
        %1254 = vmatpush1.bf16.msra.mxu0 0
        %1255 = vmatprep.subr.bf16.mxu0 0
        %1256 = vmatpush1.bf16.msra.mxu0 0
        %1257 = vmatprep.mubr.bf16.mxu0 0
        %1258 = vmatmul.mubr.bf16.gmra.mrb[0].mxu0 %v1223
        %v1259 = vpop.f32.mrb[0].mxu0
        %v1260 = vadd.f32 0.0, %v1259
        %v1261 = vpop.f32.mrb[0].mxu0
        %v1262 = vpop.f32.mrb[0].mxu0
        %v1263 = vadd.f32 0.0, %v1262
        %v1264 = vpop.f32.mrb[0].mxu0
        %1265 = vdwg.mxu0
        %v1268 = vunpack.c.l.b16 %v390
        %v1269 = vunpack.c.l.b16 %v391
        %v1270 = vpack.c.b16 %v1269, %v1268
        %v1272 = vsel %vm1074, %v1270, 0
        %1274 = vmatprep.subr.bf16.mxu0 0
        %1275 = vmatpush1.bf16.msra.mxu0 %v1057
        %1276 = vmatprep.subr.bf16.mxu0 0
        %1277 = vmatpush1.bf16.msra.mxu0 0
        %1278 = vmatprep.subr.bf16.mxu0 0
        %1279 = vmatpush1.bf16.msra.mxu0 0
        %1280 = vmatprep.subr.bf16.mxu0 0
        %1281 = vmatpush1.bf16.msra.mxu0 0
        %1282 = vmatprep.subr.bf16.mxu0 0
        %1283 = vmatpush1.bf16.msra.mxu0 0
        %1284 = vmatprep.subr.bf16.mxu0 0
        %1285 = vmatpush1.bf16.msra.mxu0 0
        %1286 = vmatprep.subr.bf16.mxu0 0
        %1287 = vmatpush1.bf16.msra.mxu0 0
        %1288 = vmatprep.subr.bf16.mxu0 0
        %1289 = vmatpush1.bf16.msra.mxu0 0
        %1290 = vmatprep.subr.bf16.mxu0 0
        %1291 = vmatpush1.bf16.msra.mxu0 0
        %1292 = vmatprep.subr.bf16.mxu0 0
        %1293 = vmatpush1.bf16.msra.mxu0 0
        %1294 = vmatprep.subr.bf16.mxu0 0
        %1295 = vmatpush1.bf16.msra.mxu0 0
        %1296 = vmatprep.subr.bf16.mxu0 0
        %1297 = vmatpush1.bf16.msra.mxu0 0
        %1298 = vmatprep.subr.bf16.mxu0 0
        %1299 = vmatpush1.bf16.msra.mxu0 0
        %1300 = vmatprep.subr.bf16.mxu0 0
        %1301 = vmatpush1.bf16.msra.mxu0 0
        %1302 = vmatprep.subr.bf16.mxu0 0
        %1303 = vmatpush1.bf16.msra.mxu0 0
        %1304 = vmatprep.subr.bf16.mxu0 0
        %1305 = vmatpush1.bf16.msra.mxu0 0
        %1306 = vmatprep.mubr.bf16.mxu0 0
        %1307 = vmatmul.mubr.bf16.gmra.mrb[0].mxu0 %v1272
        %v1308 = vpop.f32.mrb[0].mxu0
        %v1309 = vadd.f32 0.0, %v1308
        %v1310 = vpop.f32.mrb[0].mxu0
        %v1311 = vpop.f32.mrb[0].mxu0
        %v1312 = vadd.f32 0.0, %v1311
        %v1313 = vpop.f32.mrb[0].mxu0
        %1314 = vdwg.mxu0
        %v1317 = vunpack.c.l.b16 %v392
        %v1318 = vunpack.c.l.b16 %v393
        %v1319 = vpack.c.b16 %v1318, %v1317
        %v1321 = vsel %vm1074, %v1319, 0
        %1323 = vmatprep.subr.bf16.mxu0 0
        %1324 = vmatpush1.bf16.msra.mxu0 %v1058
        %1325 = vmatprep.subr.bf16.mxu0 0
        %1326 = vmatpush1.bf16.msra.mxu0 0
        %1327 = vmatprep.subr.bf16.mxu0 0
        %1328 = vmatpush1.bf16.msra.mxu0 0
        %1329 = vmatprep.subr.bf16.mxu0 0
        %1330 = vmatpush1.bf16.msra.mxu0 0
        %1331 = vmatprep.subr.bf16.mxu0 0
        %1332 = vmatpush1.bf16.msra.mxu0 0
        %1333 = vmatprep.subr.bf16.mxu0 0
        %1334 = vmatpush1.bf16.msra.mxu0 0
        %1335 = vmatprep.subr.bf16.mxu0 0
        %1336 = vmatpush1.bf16.msra.mxu0 0
        %1337 = vmatprep.subr.bf16.mxu0 0
        %1338 = vmatpush1.bf16.msra.mxu0 0
        %1339 = vmatprep.subr.bf16.mxu0 0
        %1340 = vmatpush1.bf16.msra.mxu0 0
        %1341 = vmatprep.subr.bf16.mxu0 0
        %1342 = vmatpush1.bf16.msra.mxu0 0
        %1343 = vmatprep.subr.bf16.mxu0 0
        %1344 = vmatpush1.bf16.msra.mxu0 0
        %1345 = vmatprep.subr.bf16.mxu0 0
        %1346 = vmatpush1.bf16.msra.mxu0 0
        %1347 = vmatprep.subr.bf16.mxu0 0
        %1348 = vmatpush1.bf16.msra.mxu0 0
        %1349 = vmatprep.subr.bf16.mxu0 0
        %1350 = vmatpush1.bf16.msra.mxu0 0
        %1351 = vmatprep.subr.bf16.mxu0 0
        %1352 = vmatpush1.bf16.msra.mxu0 0
        %1353 = vmatprep.subr.bf16.mxu0 0
        %1354 = vmatpush1.bf16.msra.mxu0 0
        %1355 = vmatprep.mubr.bf16.mxu0 0
        %1356 = vmatmul.mubr.bf16.gmra.mrb[0].mxu0 %v1321
        %v1357 = vpop.f32.mrb[0].mxu0
        %v1358 = vadd.f32 0.0, %v1357
        %v1359 = vpop.f32.mrb[0].mxu0
        %v1360 = vpop.f32.mrb[0].mxu0
        %v1361 = vadd.f32 0.0, %v1360
        %v1362 = vpop.f32.mrb[0].mxu0
        %1363 = vdwg.mxu0
        %v1366 = vunpack.c.l.b16 %v394
        %v1367 = vunpack.c.l.b16 %v395
        %v1368 = vpack.c.b16 %v1367, %v1366
        %v1370 = vsel %vm1074, %v1368, 0
        %1372 = vmatprep.subr.bf16.mxu0 0
        %1373 = vmatpush1.bf16.msra.mxu0 %v1059
        %1374 = vmatprep.subr.bf16.mxu0 0
        %1375 = vmatpush1.bf16.msra.mxu0 0
        %1376 = vmatprep.subr.bf16.mxu0 0
        %1377 = vmatpush1.bf16.msra.mxu0 0
        %1378 = vmatprep.subr.bf16.mxu0 0
        %1379 = vmatpush1.bf16.msra.mxu0 0
        %1380 = vmatprep.subr.bf16.mxu0 0
        %1381 = vmatpush1.bf16.msra.mxu0 0
        %1382 = vmatprep.subr.bf16.mxu0 0
        %1383 = vmatpush1.bf16.msra.mxu0 0
        %1384 = vmatprep.subr.bf16.mxu0 0
        %1385 = vmatpush1.bf16.msra.mxu0 0
        %1386 = vmatprep.subr.bf16.mxu0 0
        %1387 = vmatpush1.bf16.msra.mxu0 0
        %1388 = vmatprep.subr.bf16.mxu0 0
        %1389 = vmatpush1.bf16.msra.mxu0 0
        %1390 = vmatprep.subr.bf16.mxu0 0
        %1391 = vmatpush1.bf16.msra.mxu0 0
        %1392 = vmatprep.subr.bf16.mxu0 0
        %1393 = vmatpush1.bf16.msra.mxu0 0
        %1394 = vmatprep.subr.bf16.mxu0 0
        %1395 = vmatpush1.bf16.msra.mxu0 0
        %1396 = vmatprep.subr.bf16.mxu0 0
        %1397 = vmatpush1.bf16.msra.mxu0 0
        %1398 = vmatprep.subr.bf16.mxu0 0
        %1399 = vmatpush1.bf16.msra.mxu0 0
        %1400 = vmatprep.subr.bf16.mxu0 0
        %1401 = vmatpush1.bf16.msra.mxu0 0
        %1402 = vmatprep.subr.bf16.mxu0 0
        %1403 = vmatpush1.bf16.msra.mxu0 0
        %1404 = vmatprep.mubr.bf16.mxu0 0
        %1405 = vmatmul.mubr.bf16.gmra.mrb[0].mxu0 %v1370
        %v1406 = vpop.f32.mrb[0].mxu0
        %v1407 = vadd.f32 0.0, %v1406
        %v1408 = vpop.f32.mrb[0].mxu0
        %v1409 = vpop.f32.mrb[0].mxu0
        %v1410 = vadd.f32 0.0, %v1409
        %v1411 = vpop.f32.mrb[0].mxu0
        %1412 = vdwg.mxu0
        %v1415 = vunpack.c.l.b16 %v396
        %v1416 = vunpack.c.l.b16 %v397
        %v1417 = vpack.c.b16 %v1416, %v1415
        %v1419 = vsel %vm1074, %v1417, 0
        %1421 = vmatprep.subr.bf16.mxu0 0
        %1422 = vmatpush1.bf16.msra.mxu0 %v1060
        %1423 = vmatprep.subr.bf16.mxu0 0
        %1424 = vmatpush1.bf16.msra.mxu0 0
        %1425 = vmatprep.subr.bf16.mxu0 0
        %1426 = vmatpush1.bf16.msra.mxu0 0
        %1427 = vmatprep.subr.bf16.mxu0 0
        %1428 = vmatpush1.bf16.msra.mxu0 0
        %1429 = vmatprep.subr.bf16.mxu0 0
        %1430 = vmatpush1.bf16.msra.mxu0 0
        %1431 = vmatprep.subr.bf16.mxu0 0
        %1432 = vmatpush1.bf16.msra.mxu0 0
        %1433 = vmatprep.subr.bf16.mxu0 0
        %1434 = vmatpush1.bf16.msra.mxu0 0
        %1435 = vmatprep.subr.bf16.mxu0 0
        %1436 = vmatpush1.bf16.msra.mxu0 0
        %1437 = vmatprep.subr.bf16.mxu0 0
        %1438 = vmatpush1.bf16.msra.mxu0 0
        %1439 = vmatprep.subr.bf16.mxu0 0
        %1440 = vmatpush1.bf16.msra.mxu0 0
        %1441 = vmatprep.subr.bf16.mxu0 0
        %1442 = vmatpush1.bf16.msra.mxu0 0
        %1443 = vmatprep.subr.bf16.mxu0 0
        %1444 = vmatpush1.bf16.msra.mxu0 0
        %1445 = vmatprep.subr.bf16.mxu0 0
        %1446 = vmatpush1.bf16.msra.mxu0 0
        %1447 = vmatprep.subr.bf16.mxu0 0
        %1448 = vmatpush1.bf16.msra.mxu0 0
        %1449 = vmatprep.subr.bf16.mxu0 0
        %1450 = vmatpush1.bf16.msra.mxu0 0
        %1451 = vmatprep.subr.bf16.mxu0 0
        %1452 = vmatpush1.bf16.msra.mxu0 0
        %1453 = vmatprep.mubr.bf16.mxu0 0
        %1454 = vmatmul.mubr.bf16.gmra.mrb[0].mxu0 %v1419
        %v1455 = vpop.f32.mrb[0].mxu0
        %v1456 = vadd.f32 0.0, %v1455
        %v1457 = vpop.f32.mrb[0].mxu0
        %v1458 = vpop.f32.mrb[0].mxu0
        %v1459 = vadd.f32 0.0, %v1458
        %v1460 = vpop.f32.mrb[0].mxu0
        %1461 = vdwg.mxu0
        %v1464 = vunpack.c.l.b16 %v398
        %v1465 = vunpack.c.l.b16 %v399
        %v1466 = vpack.c.b16 %v1465, %v1464
        %v1468 = vsel %vm1074, %v1466, 0
        %1470 = vmatprep.subr.bf16.mxu0 0
        %1471 = vmatpush1.bf16.msra.mxu0 %v1061
        %1472 = vmatprep.subr.bf16.mxu0 0
        %1473 = vmatpush1.bf16.msra.mxu0 0
        %1474 = vmatprep.subr.bf16.mxu0 0
        %1475 = vmatpush1.bf16.msra.mxu0 0
        %1476 = vmatprep.subr.bf16.mxu0 0
        %1477 = vmatpush1.bf16.msra.mxu0 0
        %1478 = vmatprep.subr.bf16.mxu0 0
        %1479 = vmatpush1.bf16.msra.mxu0 0
        %1480 = vmatprep.subr.bf16.mxu0 0
        %1481 = vmatpush1.bf16.msra.mxu0 0
        %1482 = vmatprep.subr.bf16.mxu0 0
        %1483 = vmatpush1.bf16.msra.mxu0 0
        %1484 = vmatprep.subr.bf16.mxu0 0
        %1485 = vmatpush1.bf16.msra.mxu0 0
        %1486 = vmatprep.subr.bf16.mxu0 0
        %1487 = vmatpush1.bf16.msra.mxu0 0
        %1488 = vmatprep.subr.bf16.mxu0 0
        %1489 = vmatpush1.bf16.msra.mxu0 0
        %1490 = vmatprep.subr.bf16.mxu0 0
        %1491 = vmatpush1.bf16.msra.mxu0 0
        %1492 = vmatprep.subr.bf16.mxu0 0
        %1493 = vmatpush1.bf16.msra.mxu0 0
        %1494 = vmatprep.subr.bf16.mxu0 0
        %1495 = vmatpush1.bf16.msra.mxu0 0
        %1496 = vmatprep.subr.bf16.mxu0 0
        %1497 = vmatpush1.bf16.msra.mxu0 0
        %1498 = vmatprep.subr.bf16.mxu0 0
        %1499 = vmatpush1.bf16.msra.mxu0 0
        %1500 = vmatprep.subr.bf16.mxu0 0
        %1501 = vmatpush1.bf16.msra.mxu0 0
        %1502 = vmatprep.mubr.bf16.mxu0 0
        %1503 = vmatmul.mubr.bf16.gmra.mrb[0].mxu0 %v1468
        %v1504 = vpop.f32.mrb[0].mxu0
        %v1505 = vadd.f32 0.0, %v1504
        %v1506 = vpop.f32.mrb[0].mxu0
        %v1507 = vpop.f32.mrb[0].mxu0
        %v1508 = vadd.f32 0.0, %v1507
        %v1509 = vpop.f32.mrb[0].mxu0
        %1510 = vdwg.mxu0
        %v1513 = vunpack.c.l.b16 %v400
        %v1514 = vunpack.c.l.b16 %v401
        %v1515 = vpack.c.b16 %v1514, %v1513
        %v1517 = vsel %vm1074, %v1515, 0
        %1519 = vmatprep.subr.bf16.mxu0 0
        %1520 = vmatpush1.bf16.msra.mxu0 %v1062
        %1521 = vmatprep.subr.bf16.mxu0 0
        %1522 = vmatpush1.bf16.msra.mxu0 0
        %1523 = vmatprep.subr.bf16.mxu0 0
        %1524 = vmatpush1.bf16.msra.mxu0 0
        %1525 = vmatprep.subr.bf16.mxu0 0
        %1526 = vmatpush1.bf16.msra.mxu0 0
        %1527 = vmatprep.subr.bf16.mxu0 0
        %1528 = vmatpush1.bf16.msra.mxu0 0
        %1529 = vmatprep.subr.bf16.mxu0 0
        %1530 = vmatpush1.bf16.msra.mxu0 0
        %1531 = vmatprep.subr.bf16.mxu0 0
        %1532 = vmatpush1.bf16.msra.mxu0 0
        %1533 = vmatprep.subr.bf16.mxu0 0
        %1534 = vmatpush1.bf16.msra.mxu0 0
        %1535 = vmatprep.subr.bf16.mxu0 0
        %1536 = vmatpush1.bf16.msra.mxu0 0
        %1537 = vmatprep.subr.bf16.mxu0 0
        %1538 = vmatpush1.bf16.msra.mxu0 0
        %1539 = vmatprep.subr.bf16.mxu0 0
        %1540 = vmatpush1.bf16.msra.mxu0 0
        %1541 = vmatprep.subr.bf16.mxu0 0
        %1542 = vmatpush1.bf16.msra.mxu0 0
        %1543 = vmatprep.subr.bf16.mxu0 0
        %1544 = vmatpush1.bf16.msra.mxu0 0
        %1545 = vmatprep.subr.bf16.mxu0 0
        %1546 = vmatpush1.bf16.msra.mxu0 0
        %1547 = vmatprep.subr.bf16.mxu0 0
        %1548 = vmatpush1.bf16.msra.mxu0 0
        %1549 = vmatprep.subr.bf16.mxu0 0
        %1550 = vmatpush1.bf16.msra.mxu0 0
        %1551 = vmatprep.mubr.bf16.mxu0 0
        %1552 = vmatmul.mubr.bf16.gmra.mrb[0].mxu0 %v1517
        %v1553 = vpop.f32.mrb[0].mxu0
        %v1554 = vadd.f32 0.0, %v1553
        %v1555 = vpop.f32.mrb[0].mxu0
        %v1556 = vpop.f32.mrb[0].mxu0
        %v1557 = vadd.f32 0.0, %v1556
        %v1558 = vpop.f32.mrb[0].mxu0
        %1559 = vdwg.mxu0
        %v1562 = vunpack.c.l.b16 %v402
        %v1563 = vunpack.c.l.b16 %v403
        %v1564 = vpack.c.b16 %v1563, %v1562
        %v1566 = vsel %vm1074, %v1564, 0
        %1568 = vmatprep.subr.bf16.mxu0 0
        %1569 = vmatpush1.bf16.msra.mxu0 %v1063
        %1570 = vmatprep.subr.bf16.mxu0 0
        %1571 = vmatpush1.bf16.msra.mxu0 0
        %1572 = vmatprep.subr.bf16.mxu0 0
        %1573 = vmatpush1.bf16.msra.mxu0 0
        %1574 = vmatprep.subr.bf16.mxu0 0
        %1575 = vmatpush1.bf16.msra.mxu0 0
        %1576 = vmatprep.subr.bf16.mxu0 0
        %1577 = vmatpush1.bf16.msra.mxu0 0
        %1578 = vmatprep.subr.bf16.mxu0 0
        %1579 = vmatpush1.bf16.msra.mxu0 0
        %1580 = vmatprep.subr.bf16.mxu0 0
        %1581 = vmatpush1.bf16.msra.mxu0 0
        %1582 = vmatprep.subr.bf16.mxu0 0
        %1583 = vmatpush1.bf16.msra.mxu0 0
        %1584 = vmatprep.subr.bf16.mxu0 0
        %1585 = vmatpush1.bf16.msra.mxu0 0
        %1586 = vmatprep.subr.bf16.mxu0 0
        %1587 = vmatpush1.bf16.msra.mxu0 0
        %1588 = vmatprep.subr.bf16.mxu0 0
        %1589 = vmatpush1.bf16.msra.mxu0 0
        %1590 = vmatprep.subr.bf16.mxu0 0
        %1591 = vmatpush1.bf16.msra.mxu0 0
        %1592 = vmatprep.subr.bf16.mxu0 0
        %1593 = vmatpush1.bf16.msra.mxu0 0
        %1594 = vmatprep.subr.bf16.mxu0 0
        %1595 = vmatpush1.bf16.msra.mxu0 0
        %1596 = vmatprep.subr.bf16.mxu0 0
        %1597 = vmatpush1.bf16.msra.mxu0 0
        %1598 = vmatprep.subr.bf16.mxu0 0
        %1599 = vmatpush1.bf16.msra.mxu0 0
        %1600 = vmatprep.mubr.bf16.mxu0 0
        %1601 = vmatmul.mubr.bf16.gmra.mrb[0].mxu0 %v1566
        %v1602 = vpop.f32.mrb[0].mxu0
        %v1603 = vadd.f32 0.0, %v1602
        %v1604 = vpop.f32.mrb[0].mxu0
        %v1605 = vpop.f32.mrb[0].mxu0
        %v1606 = vadd.f32 0.0, %v1605
        %v1607 = vpop.f32.mrb[0].mxu0
        %1608 = vdwg.mxu0
        %v1611 = vunpack.c.l.b16 %v404
        %v1612 = vunpack.c.l.b16 %v405
        %v1613 = vpack.c.b16 %v1612, %v1611
        %v1615 = vsel %vm1074, %v1613, 0
        %1617 = vmatprep.subr.bf16.mxu0 0
        %1618 = vmatpush1.bf16.msra.mxu0 %v1064
        %1619 = vmatprep.subr.bf16.mxu0 0
        %1620 = vmatpush1.bf16.msra.mxu0 0
        %1621 = vmatprep.subr.bf16.mxu0 0
        %1622 = vmatpush1.bf16.msra.mxu0 0
        %1623 = vmatprep.subr.bf16.mxu0 0
        %1624 = vmatpush1.bf16.msra.mxu0 0
        %1625 = vmatprep.subr.bf16.mxu0 0
        %1626 = vmatpush1.bf16.msra.mxu0 0
        %1627 = vmatprep.subr.bf16.mxu0 0
        %1628 = vmatpush1.bf16.msra.mxu0 0
        %1629 = vmatprep.subr.bf16.mxu0 0
        %1630 = vmatpush1.bf16.msra.mxu0 0
        %1631 = vmatprep.subr.bf16.mxu0 0
        %1632 = vmatpush1.bf16.msra.mxu0 0
        %1633 = vmatprep.subr.bf16.mxu0 0
        %1634 = vmatpush1.bf16.msra.mxu0 0
        %1635 = vmatprep.subr.bf16.mxu0 0
        %1636 = vmatpush1.bf16.msra.mxu0 0
        %1637 = vmatprep.subr.bf16.mxu0 0
        %1638 = vmatpush1.bf16.msra.mxu0 0
        %1639 = vmatprep.subr.bf16.mxu0 0
        %1640 = vmatpush1.bf16.msra.mxu0 0
        %1641 = vmatprep.subr.bf16.mxu0 0
        %1642 = vmatpush1.bf16.msra.mxu0 0
        %1643 = vmatprep.subr.bf16.mxu0 0
        %1644 = vmatpush1.bf16.msra.mxu0 0
        %1645 = vmatprep.subr.bf16.mxu0 0
        %1646 = vmatpush1.bf16.msra.mxu0 0
        %1647 = vmatprep.subr.bf16.mxu0 0
        %1648 = vmatpush1.bf16.msra.mxu0 0
        %1649 = vmatprep.mubr.bf16.mxu0 0
        %1650 = vmatmul.mubr.bf16.gmra.mrb[0].mxu0 %v1615
        %v1651 = vpop.f32.mrb[0].mxu0
        %v1652 = vadd.f32 0.0, %v1651
        %v1653 = vpop.f32.mrb[0].mxu0
        %v1654 = vpop.f32.mrb[0].mxu0
        %v1655 = vadd.f32 0.0, %v1654
        %v1656 = vpop.f32.mrb[0].mxu0
        %1657 = vdwg.mxu0
        %v1660 = vunpack.c.l.b16 %v406
        %v1661 = vunpack.c.l.b16 %v407
        %v1662 = vpack.c.b16 %v1661, %v1660
        %v1664 = vsel %vm1074, %v1662, 0
        %1666 = vmatprep.subr.bf16.mxu0 0
        %1667 = vmatpush1.bf16.msra.mxu0 %v1065
        %1668 = vmatprep.subr.bf16.mxu0 0
        %1669 = vmatpush1.bf16.msra.mxu0 0
        %1670 = vmatprep.subr.bf16.mxu0 0
        %1671 = vmatpush1.bf16.msra.mxu0 0
        %1672 = vmatprep.subr.bf16.mxu0 0
        %1673 = vmatpush1.bf16.msra.mxu0 0
        %1674 = vmatprep.subr.bf16.mxu0 0
        %1675 = vmatpush1.bf16.msra.mxu0 0
        %1676 = vmatprep.subr.bf16.mxu0 0
        %1677 = vmatpush1.bf16.msra.mxu0 0
        %1678 = vmatprep.subr.bf16.mxu0 0
        %1679 = vmatpush1.bf16.msra.mxu0 0
        %1680 = vmatprep.subr.bf16.mxu0 0
        %1681 = vmatpush1.bf16.msra.mxu0 0
        %1682 = vmatprep.subr.bf16.mxu0 0
        %1683 = vmatpush1.bf16.msra.mxu0 0
        %1684 = vmatprep.subr.bf16.mxu0 0
        %1685 = vmatpush1.bf16.msra.mxu0 0
        %1686 = vmatprep.subr.bf16.mxu0 0
        %1687 = vmatpush1.bf16.msra.mxu0 0
        %1688 = vmatprep.subr.bf16.mxu0 0
        %1689 = vmatpush1.bf16.msra.mxu0 0
        %1690 = vmatprep.subr.bf16.mxu0 0
        %1691 = vmatpush1.bf16.msra.mxu0 0
        %1692 = vmatprep.subr.bf16.mxu0 0
        %1693 = vmatpush1.bf16.msra.mxu0 0
        %1694 = vmatprep.subr.bf16.mxu0 0
        %1695 = vmatpush1.bf16.msra.mxu0 0
        %1696 = vmatprep.subr.bf16.mxu0 0
        %1697 = vmatpush1.bf16.msra.mxu0 0
        %1698 = vmatprep.mubr.bf16.mxu0 0
        %1699 = vmatmul.mubr.bf16.gmra.mrb[0].mxu0 %v1664
        %v1700 = vpop.f32.mrb[0].mxu0
        %v1701 = vadd.f32 0.0, %v1700
        %v1702 = vpop.f32.mrb[0].mxu0
        %v1703 = vpop.f32.mrb[0].mxu0
        %v1704 = vadd.f32 0.0, %v1703
        %v1705 = vpop.f32.mrb[0].mxu0
        %1706 = vdwg.mxu0
        %v1709 = vunpack.c.l.b16 %v408
        %v1710 = vunpack.c.l.b16 %v409
        %v1711 = vpack.c.b16 %v1710, %v1709
        %v1713 = vsel %vm1074, %v1711, 0
        %1715 = vmatprep.subr.bf16.mxu0 0
        %1716 = vmatpush1.bf16.msra.mxu0 %v1066
        %1717 = vmatprep.subr.bf16.mxu0 0
        %1718 = vmatpush1.bf16.msra.mxu0 0
        %1719 = vmatprep.subr.bf16.mxu0 0
        %1720 = vmatpush1.bf16.msra.mxu0 0
        %1721 = vmatprep.subr.bf16.mxu0 0
        %1722 = vmatpush1.bf16.msra.mxu0 0
        %1723 = vmatprep.subr.bf16.mxu0 0
        %1724 = vmatpush1.bf16.msra.mxu0 0
        %1725 = vmatprep.subr.bf16.mxu0 0
        %1726 = vmatpush1.bf16.msra.mxu0 0
        %1727 = vmatprep.subr.bf16.mxu0 0
        %1728 = vmatpush1.bf16.msra.mxu0 0
        %1729 = vmatprep.subr.bf16.mxu0 0
        %1730 = vmatpush1.bf16.msra.mxu0 0
        %1731 = vmatprep.subr.bf16.mxu0 0
        %1732 = vmatpush1.bf16.msra.mxu0 0
        %1733 = vmatprep.subr.bf16.mxu0 0
        %1734 = vmatpush1.bf16.msra.mxu0 0
        %1735 = vmatprep.subr.bf16.mxu0 0
        %1736 = vmatpush1.bf16.msra.mxu0 0
        %1737 = vmatprep.subr.bf16.mxu0 0
        %1738 = vmatpush1.bf16.msra.mxu0 0
        %1739 = vmatprep.subr.bf16.mxu0 0
        %1740 = vmatpush1.bf16.msra.mxu0 0
        %1741 = vmatprep.subr.bf16.mxu0 0
        %1742 = vmatpush1.bf16.msra.mxu0 0
        %1743 = vmatprep.subr.bf16.mxu0 0
        %1744 = vmatpush1.bf16.msra.mxu0 0
        %1745 = vmatprep.subr.bf16.mxu0 0
        %1746 = vmatpush1.bf16.msra.mxu0 0
        %1747 = vmatprep.mubr.bf16.mxu0 0
        %1748 = vmatmul.mubr.bf16.gmra.mrb[0].mxu0 %v1713
        %v1749 = vpop.f32.mrb[0].mxu0
        %v1750 = vadd.f32 0.0, %v1749
        %v1751 = vpop.f32.mrb[0].mxu0
        %v1752 = vpop.f32.mrb[0].mxu0
        %v1753 = vadd.f32 0.0, %v1752
        %v1754 = vpop.f32.mrb[0].mxu0
        %1755 = vdwg.mxu0
        %v1758 = vunpack.c.l.b16 %v410
        %v1759 = vunpack.c.l.b16 %v411
        %v1760 = vpack.c.b16 %v1759, %v1758
        %v1762 = vsel %vm1074, %v1760, 0
        %1764 = vmatprep.subr.bf16.mxu0 0
        %1765 = vmatpush1.bf16.msra.mxu0 %v1067
        %1766 = vmatprep.subr.bf16.mxu0 0
        %1767 = vmatpush1.bf16.msra.mxu0 0
        %1768 = vmatprep.subr.bf16.mxu0 0
        %1769 = vmatpush1.bf16.msra.mxu0 0
        %1770 = vmatprep.subr.bf16.mxu0 0
        %1771 = vmatpush1.bf16.msra.mxu0 0
        %1772 = vmatprep.subr.bf16.mxu0 0
        %1773 = vmatpush1.bf16.msra.mxu0 0
        %1774 = vmatprep.subr.bf16.mxu0 0
        %1775 = vmatpush1.bf16.msra.mxu0 0
        %1776 = vmatprep.subr.bf16.mxu0 0
        %1777 = vmatpush1.bf16.msra.mxu0 0
        %1778 = vmatprep.subr.bf16.mxu0 0
        %1779 = vmatpush1.bf16.msra.mxu0 0
        %1780 = vmatprep.subr.bf16.mxu0 0
        %1781 = vmatpush1.bf16.msra.mxu0 0
        %1782 = vmatprep.subr.bf16.mxu0 0
        %1783 = vmatpush1.bf16.msra.mxu0 0
        %1784 = vmatprep.subr.bf16.mxu0 0
        %1785 = vmatpush1.bf16.msra.mxu0 0
        %1786 = vmatprep.subr.bf16.mxu0 0
        %1787 = vmatpush1.bf16.msra.mxu0 0
        %1788 = vmatprep.subr.bf16.mxu0 0
        %1789 = vmatpush1.bf16.msra.mxu0 0
        %1790 = vmatprep.subr.bf16.mxu0 0
        %1791 = vmatpush1.bf16.msra.mxu0 0
        %1792 = vmatprep.subr.bf16.mxu0 0
        %1793 = vmatpush1.bf16.msra.mxu0 0
        %1794 = vmatprep.subr.bf16.mxu0 0
        %1795 = vmatpush1.bf16.msra.mxu0 0
        %1796 = vmatprep.mubr.bf16.mxu0 0
        %1797 = vmatmul.mubr.bf16.gmra.mrb[0].mxu0 %v1762
        %v1798 = vpop.f32.mrb[0].mxu0
        %v1799 = vadd.f32 0.0, %v1798
        %v1800 = vpop.f32.mrb[0].mxu0
        %v1801 = vpop.f32.mrb[0].mxu0
        %v1802 = vadd.f32 0.0, %v1801
        %v1803 = vpop.f32.mrb[0].mxu0
        %1804 = vdwg.mxu0
        %v1807 = vunpack.c.l.b16 %v412
        %v1808 = vunpack.c.l.b16 %v413
        %v1809 = vpack.c.b16 %v1808, %v1807
        %v1811 = vsel %vm1074, %v1809, 0
        %1813 = vmatprep.subr.bf16.mxu0 0
        %1814 = vmatpush1.bf16.msra.mxu0 %v1068
        %1815 = vmatprep.subr.bf16.mxu0 0
        %1816 = vmatpush1.bf16.msra.mxu0 0
        %1817 = vmatprep.subr.bf16.mxu0 0
        %1818 = vmatpush1.bf16.msra.mxu0 0
        %1819 = vmatprep.subr.bf16.mxu0 0
        %1820 = vmatpush1.bf16.msra.mxu0 0
        %1821 = vmatprep.subr.bf16.mxu0 0
        %1822 = vmatpush1.bf16.msra.mxu0 0
        %1823 = vmatprep.subr.bf16.mxu0 0
        %1824 = vmatpush1.bf16.msra.mxu0 0
        %1825 = vmatprep.subr.bf16.mxu0 0
        %1826 = vmatpush1.bf16.msra.mxu0 0
        %1827 = vmatprep.subr.bf16.mxu0 0
        %1828 = vmatpush1.bf16.msra.mxu0 0
        %1829 = vmatprep.subr.bf16.mxu0 0
        %1830 = vmatpush1.bf16.msra.mxu0 0
        %1831 = vmatprep.subr.bf16.mxu0 0
        %1832 = vmatpush1.bf16.msra.mxu0 0
        %1833 = vmatprep.subr.bf16.mxu0 0
        %1834 = vmatpush1.bf16.msra.mxu0 0
        %1835 = vmatprep.subr.bf16.mxu0 0
        %1836 = vmatpush1.bf16.msra.mxu0 0
        %1837 = vmatprep.subr.bf16.mxu0 0
        %1838 = vmatpush1.bf16.msra.mxu0 0
        %1839 = vmatprep.subr.bf16.mxu0 0
        %1840 = vmatpush1.bf16.msra.mxu0 0
        %1841 = vmatprep.subr.bf16.mxu0 0
        %1842 = vmatpush1.bf16.msra.mxu0 0
        %1843 = vmatprep.subr.bf16.mxu0 0
        %1844 = vmatpush1.bf16.msra.mxu0 0
        %1845 = vmatprep.mubr.bf16.mxu0 0
        %1846 = vmatmul.mubr.bf16.gmra.mrb[0].mxu0 %v1811
        %v1847 = vpop.f32.mrb[0].mxu0
        %v1848 = vadd.f32 0.0, %v1847
        %v1849 = vpop.f32.mrb[0].mxu0
        %v1850 = vpop.f32.mrb[0].mxu0
        %v1851 = vadd.f32 0.0, %v1850
        %v1852 = vpop.f32.mrb[0].mxu0
        %1853 = vdwg.mxu0
        %v1854 = vld [vmem:[%s6] sm:$0x1]
        %v1856 = vlaneseq
        %v1857 = vshrl.u32 %v1856, 7
        %v1858 = vsub.s32 0, %v1857
        %v1859 = vrot.slane %v1854, %v1858
        %v1861 = vadd.f32 %v1113, %v1859
        %v1862 = vadd.f32 %v1116, %v1859
        %v1863 = vadd.f32 %v1162, %v1859
        %v1864 = vadd.f32 %v1165, %v1859
        %v1865 = vadd.f32 %v1211, %v1859
        %v1866 = vadd.f32 %v1214, %v1859
        %v1867 = vadd.f32 %v1260, %v1859
        %v1868 = vadd.f32 %v1263, %v1859
        %v1869 = vadd.f32 %v1309, %v1859
        %v1870 = vadd.f32 %v1312, %v1859
        %v1871 = vadd.f32 %v1358, %v1859
        %v1872 = vadd.f32 %v1361, %v1859
        %v1873 = vadd.f32 %v1407, %v1859
        %v1874 = vadd.f32 %v1410, %v1859
        %v1875 = vadd.f32 %v1456, %v1859
        %v1876 = vadd.f32 %v1459, %v1859
        %v1877 = vadd.f32 %v1505, %v1859
        %v1878 = vadd.f32 %v1508, %v1859
        %v1879 = vadd.f32 %v1554, %v1859
        %v1880 = vadd.f32 %v1557, %v1859
        %v1881 = vadd.f32 %v1603, %v1859
        %v1882 = vadd.f32 %v1606, %v1859
        %v1883 = vadd.f32 %v1652, %v1859
        %v1884 = vadd.f32 %v1655, %v1859
        %v1885 = vadd.f32 %v1701, %v1859
        %v1886 = vadd.f32 %v1704, %v1859
        %v1887 = vadd.f32 %v1750, %v1859
        %v1888 = vadd.f32 %v1753, %v1859
        %v1889 = vadd.f32 %v1799, %v1859
        %v1890 = vadd.f32 %v1802, %v1859
        %v1891 = vadd.f32 %v1848, %v1859
        %v1892 = vadd.f32 %v1851, %v1859
        %1894 = vset.pattern.permute.xlu0 0
        %1895 = vperm.xlu0 %1894, %v414
        %v1896 = vpop.permute.xlu0 %1895
        %1899 = vset.pattern.permute.xlu0 0
        %1900 = vperm.xlu0 %1899, %v415
        %v1901 = vpop.permute.xlu0 %1900
        %1904 = vset.pattern.permute.xlu0 0
        %1905 = vperm.xlu0 %1904, %v416
        %v1906 = vpop.permute.xlu0 %1905
        %1909 = vset.pattern.permute.xlu0 0
        %1910 = vperm.xlu0 %1909, %v417
        %v1911 = vpop.permute.xlu0 %1910
        %1914 = vset.pattern.permute.xlu0 0
        %1915 = vperm.xlu0 %1914, %v418
        %v1916 = vpop.permute.xlu0 %1915
        %1919 = vset.pattern.permute.xlu0 0
        %1920 = vperm.xlu0 %1919, %v419
        %v1921 = vpop.permute.xlu0 %1920
        %1924 = vset.pattern.permute.xlu0 0
        %1925 = vperm.xlu0 %1924, %v420
        %v1926 = vpop.permute.xlu0 %1925
        %1929 = vset.pattern.permute.xlu0 0
        %1930 = vperm.xlu0 %1929, %v421
        %v1931 = vpop.permute.xlu0 %1930
        %1934 = vset.pattern.permute.xlu0 0
        %1935 = vperm.xlu0 %1934, %v422
        %v1936 = vpop.permute.xlu0 %1935
        %1939 = vset.pattern.permute.xlu0 0
        %1940 = vperm.xlu0 %1939, %v423
        %v1941 = vpop.permute.xlu0 %1940
        %1944 = vset.pattern.permute.xlu0 0
        %1945 = vperm.xlu0 %1944, %v424
        %v1946 = vpop.permute.xlu0 %1945
        %1949 = vset.pattern.permute.xlu0 0
        %1950 = vperm.xlu0 %1949, %v425
        %v1951 = vpop.permute.xlu0 %1950
        %1954 = vset.pattern.permute.xlu0 0
        %1955 = vperm.xlu0 %1954, %v426
        %v1956 = vpop.permute.xlu0 %1955
        %1959 = vset.pattern.permute.xlu0 0
        %1960 = vperm.xlu0 %1959, %v427
        %v1961 = vpop.permute.xlu0 %1960
        %1964 = vset.pattern.permute.xlu0 0
        %1965 = vperm.xlu0 %1964, %v428
        %v1966 = vpop.permute.xlu0 %1965
        %1969 = vset.pattern.permute.xlu0 0
        %1970 = vperm.xlu0 %1969, %v429
        %v1971 = vpop.permute.xlu0 %1970
        %1974 = vset.pattern.permute.xlu0 0
        %1975 = vperm.xlu0 %1974, %v430
        %v1976 = vpop.permute.xlu0 %1975
        %1979 = vset.pattern.permute.xlu0 0
        %1980 = vperm.xlu0 %1979, %v431
        %v1981 = vpop.permute.xlu0 %1980
        %1984 = vset.pattern.permute.xlu0 0
        %1985 = vperm.xlu0 %1984, %v432
        %v1986 = vpop.permute.xlu0 %1985
        %1989 = vset.pattern.permute.xlu0 0
        %1990 = vperm.xlu0 %1989, %v433
        %v1991 = vpop.permute.xlu0 %1990
        %1994 = vset.pattern.permute.xlu0 0
        %1995 = vperm.xlu0 %1994, %v434
        %v1996 = vpop.permute.xlu0 %1995
        %1999 = vset.pattern.permute.xlu0 0
        %2000 = vperm.xlu0 %1999, %v435
        %v2001 = vpop.permute.xlu0 %2000
        %2004 = vset.pattern.permute.xlu0 0
        %2005 = vperm.xlu0 %2004, %v436
        %v2006 = vpop.permute.xlu0 %2005
        %2009 = vset.pattern.permute.xlu0 0
        %2010 = vperm.xlu0 %2009, %v437
        %v2011 = vpop.permute.xlu0 %2010
        %2014 = vset.pattern.permute.xlu0 0
        %2015 = vperm.xlu0 %2014, %v438
        %v2016 = vpop.permute.xlu0 %2015
        %2019 = vset.pattern.permute.xlu0 0
        %2020 = vperm.xlu0 %2019, %v439
        %v2021 = vpop.permute.xlu0 %2020
        %2024 = vset.pattern.permute.xlu0 0
        %2025 = vperm.xlu0 %2024, %v440
        %v2026 = vpop.permute.xlu0 %2025
        %2029 = vset.pattern.permute.xlu0 0
        %2030 = vperm.xlu0 %2029, %v441
        %v2031 = vpop.permute.xlu0 %2030
        %2034 = vset.pattern.permute.xlu0 0
        %2035 = vperm.xlu0 %2034, %v442
        %v2036 = vpop.permute.xlu0 %2035
        %2039 = vset.pattern.permute.xlu0 0
        %2040 = vperm.xlu0 %2039, %v443
        %v2041 = vpop.permute.xlu0 %2040
        %2044 = vset.pattern.permute.xlu0 0
        %2045 = vperm.xlu0 %2044, %v444
        %v2046 = vpop.permute.xlu0 %2045
        %2049 = vset.pattern.permute.xlu0 0
        %2050 = vperm.xlu0 %2049, %v445
        %v2051 = vpop.permute.xlu0 %2050
        %v2053 = vmul.f32 %v1861, %v1896
        %v2054 = vmul.f32 %v1862, %v1901
        %v2055 = vmul.f32 %v1863, %v1906
        %v2056 = vmul.f32 %v1864, %v1911
        %v2057 = vmul.f32 %v1865, %v1916
        %v2058 = vmul.f32 %v1866, %v1921
        %v2059 = vmul.f32 %v1867, %v1926
        %v2060 = vmul.f32 %v1868, %v1931
        %v2061 = vmul.f32 %v1869, %v1936
        %v2062 = vmul.f32 %v1870, %v1941
        %v2063 = vmul.f32 %v1871, %v1946
        %v2064 = vmul.f32 %v1872, %v1951
        %v2065 = vmul.f32 %v1873, %v1956
        %v2066 = vmul.f32 %v1874, %v1961
        %v2067 = vmul.f32 %v1875, %v1966
        %v2068 = vmul.f32 %v1876, %v1971
        %v2069 = vmul.f32 %v1877, %v1976
        %v2070 = vmul.f32 %v1878, %v1981
        %v2071 = vmul.f32 %v1879, %v1986
        %v2072 = vmul.f32 %v1880, %v1991
        %v2073 = vmul.f32 %v1881, %v1996
        %v2074 = vmul.f32 %v1882, %v2001
        %v2075 = vmul.f32 %v1883, %v2006
        %v2076 = vmul.f32 %v1884, %v2011
        %v2077 = vmul.f32 %v1885, %v2016
        %v2078 = vmul.f32 %v1886, %v2021
        %v2079 = vmul.f32 %v1887, %v2026
        %v2080 = vmul.f32 %v1888, %v2031
        %v2081 = vmul.f32 %v1889, %v2036
        %v2082 = vmul.f32 %v1890, %v2041
        %v2083 = vmul.f32 %v1891, %v2046
        %v2084 = vmul.f32 %v1892, %v2051
        %v2085 = vld [vmem:[%s7] sm:$0x1]
        %v2087 = vlaneseq
        %v2088 = vshrl.u32 %v2087, 7
        %v2089 = vsub.s32 0, %v2088
        %v2090 = vrot.slane %v2085, %v2089
        %v2092 = vmul.f32 %v2053, %v2090
        %v2093 = vmul.f32 %v2054, %v2090
        %v2094 = vmul.f32 %v2055, %v2090
        %v2095 = vmul.f32 %v2056, %v2090
        %v2096 = vmul.f32 %v2057, %v2090
        %v2097 = vmul.f32 %v2058, %v2090
        %v2098 = vmul.f32 %v2059, %v2090
        %v2099 = vmul.f32 %v2060, %v2090
        %v2100 = vmul.f32 %v2061, %v2090
        %v2101 = vmul.f32 %v2062, %v2090
        %v2102 = vmul.f32 %v2063, %v2090
        %v2103 = vmul.f32 %v2064, %v2090
        %v2104 = vmul.f32 %v2065, %v2090
        %v2105 = vmul.f32 %v2066, %v2090
        %v2106 = vmul.f32 %v2067, %v2090
        %v2107 = vmul.f32 %v2068, %v2090
        %v2108 = vmul.f32 %v2069, %v2090
        %v2109 = vmul.f32 %v2070, %v2090
        %v2110 = vmul.f32 %v2071, %v2090
        %v2111 = vmul.f32 %v2072, %v2090
        %v2112 = vmul.f32 %v2073, %v2090
        %v2113 = vmul.f32 %v2074, %v2090
        %v2114 = vmul.f32 %v2075, %v2090
        %v2115 = vmul.f32 %v2076, %v2090
        %v2116 = vmul.f32 %v2077, %v2090
        %v2117 = vmul.f32 %v2078, %v2090
        %v2118 = vmul.f32 %v2079, %v2090
        %v2119 = vmul.f32 %v2080, %v2090
        %v2120 = vmul.f32 %v2081, %v2090
        %v2121 = vmul.f32 %v2082, %v2090
        %v2122 = vmul.f32 %v2083, %v2090
        %v2123 = vmul.f32 %v2084, %v2090
        %v2124 = vld [vmem:[%s8] sm:$0x1]
        %v2126 = vlaneseq
        %v2127 = vshrl.u32 %v2126, 7
        %v2128 = vsub.s32 0, %v2127
        %v2129 = vrot.slane %v2124, %v2128
        %v2131 = vadd.f32 %v2092, %v2129
        %v2132 = vadd.f32 %v2093, %v2129
        %v2133 = vadd.f32 %v2094, %v2129
        %v2134 = vadd.f32 %v2095, %v2129
        %v2135 = vadd.f32 %v2096, %v2129
        %v2136 = vadd.f32 %v2097, %v2129
        %v2137 = vadd.f32 %v2098, %v2129
        %v2138 = vadd.f32 %v2099, %v2129
        %v2139 = vadd.f32 %v2100, %v2129
        %v2140 = vadd.f32 %v2101, %v2129
        %v2141 = vadd.f32 %v2102, %v2129
        %v2142 = vadd.f32 %v2103, %v2129
        %v2143 = vadd.f32 %v2104, %v2129
        %v2144 = vadd.f32 %v2105, %v2129
        %v2145 = vadd.f32 %v2106, %v2129
        %v2146 = vadd.f32 %v2107, %v2129
        %v2147 = vadd.f32 %v2108, %v2129
        %v2148 = vadd.f32 %v2109, %v2129
        %v2149 = vadd.f32 %v2110, %v2129
        %v2150 = vadd.f32 %v2111, %v2129
        %v2151 = vadd.f32 %v2112, %v2129
        %v2152 = vadd.f32 %v2113, %v2129
        %v2153 = vadd.f32 %v2114, %v2129
        %v2154 = vadd.f32 %v2115, %v2129
        %v2155 = vadd.f32 %v2116, %v2129
        %v2156 = vadd.f32 %v2117, %v2129
        %v2157 = vadd.f32 %v2118, %v2129
        %v2158 = vadd.f32 %v2119, %v2129
        %v2159 = vadd.f32 %v2120, %v2129
        %v2160 = vadd.f32 %v2121, %v2129
        %v2161 = vadd.f32 %v2122, %v2129
        %v2162 = vadd.f32 %v2123, %v2129
        %v2163 = vmax.f32 %v2131, 0.0
        %v2164 = vmax.f32 %v2132, 0.0
        %v2165 = vmax.f32 %v2133, 0.0
        %v2166 = vmax.f32 %v2134, 0.0
        %v2167 = vmax.f32 %v2135, 0.0
        %v2168 = vmax.f32 %v2136, 0.0
        %v2169 = vmax.f32 %v2137, 0.0
        %v2170 = vmax.f32 %v2138, 0.0
        %v2171 = vmax.f32 %v2139, 0.0
        %v2172 = vmax.f32 %v2140, 0.0
        %v2173 = vmax.f32 %v2141, 0.0
        %v2174 = vmax.f32 %v2142, 0.0
        %v2175 = vmax.f32 %v2143, 0.0
        %v2176 = vmax.f32 %v2144, 0.0
        %v2177 = vmax.f32 %v2145, 0.0
        %v2178 = vmax.f32 %v2146, 0.0
        %v2179 = vmax.f32 %v2147, 0.0
        %v2180 = vmax.f32 %v2148, 0.0
        %v2181 = vmax.f32 %v2149, 0.0
        %v2182 = vmax.f32 %v2150, 0.0
        %v2183 = vmax.f32 %v2151, 0.0
        %v2184 = vmax.f32 %v2152, 0.0
        %v2185 = vmax.f32 %v2153, 0.0
        %v2186 = vmax.f32 %v2154, 0.0
        %v2187 = vmax.f32 %v2155, 0.0
        %v2188 = vmax.f32 %v2156, 0.0
        %v2189 = vmax.f32 %v2157, 0.0
        %v2190 = vmax.f32 %v2158, 0.0
        %v2191 = vmax.f32 %v2159, 0.0
        %v2192 = vmax.f32 %v2160, 0.0
        %v2193 = vmax.f32 %v2161, 0.0
        %v2194 = vmax.f32 %v2162, 0.0
        %v2195 = vadd.f32 %v654, %v2163
        %v2196 = vadd.f32 %v659, %v2164
        %v2197 = vadd.f32 %v664, %v2165
        %v2198 = vadd.f32 %v669, %v2166
        %v2199 = vadd.f32 %v674, %v2167
        %v2200 = vadd.f32 %v679, %v2168
        %v2201 = vadd.f32 %v684, %v2169
        %v2202 = vadd.f32 %v689, %v2170
        %v2203 = vadd.f32 %v694, %v2171
        %v2204 = vadd.f32 %v699, %v2172
        %v2205 = vadd.f32 %v704, %v2173
        %v2206 = vadd.f32 %v709, %v2174
        %v2207 = vadd.f32 %v714, %v2175
        %v2208 = vadd.f32 %v719, %v2176
        %v2209 = vadd.f32 %v724, %v2177
        %v2210 = vadd.f32 %v729, %v2178
        %v2211 = vadd.f32 %v734, %v2179
        %v2212 = vadd.f32 %v739, %v2180
        %v2213 = vadd.f32 %v744, %v2181
        %v2214 = vadd.f32 %v749, %v2182
        %v2215 = vadd.f32 %v754, %v2183
        %v2216 = vadd.f32 %v759, %v2184
        %v2217 = vadd.f32 %v764, %v2185
        %v2218 = vadd.f32 %v769, %v2186
        %v2219 = vadd.f32 %v774, %v2187
        %v2220 = vadd.f32 %v779, %v2188
        %v2221 = vadd.f32 %v784, %v2189
        %v2222 = vadd.f32 %v789, %v2190
        %v2223 = vadd.f32 %v794, %v2191
        %v2224 = vadd.f32 %v799, %v2192
        %v2225 = vadd.f32 %v804, %v2193
        %v2226 = vadd.f32 %v809, %v2194
        %v2227 = vpack.c.bf16 %v2196, %v2195
        %v2228 = vpack.c.bf16 %v2198, %v2197
        %v2229 = vpack.c.bf16 %v2200, %v2199
        %v2230 = vpack.c.bf16 %v2202, %v2201
        %v2231 = vpack.c.bf16 %v2204, %v2203
        %v2232 = vpack.c.bf16 %v2206, %v2205
        %v2233 = vpack.c.bf16 %v2208, %v2207
        %v2234 = vpack.c.bf16 %v2210, %v2209
        %v2235 = vpack.c.bf16 %v2212, %v2211
        %v2236 = vpack.c.bf16 %v2214, %v2213
        %v2237 = vpack.c.bf16 %v2216, %v2215
        %v2238 = vpack.c.bf16 %v2218, %v2217
        %v2239 = vpack.c.bf16 %v2220, %v2219
        %v2240 = vpack.c.bf16 %v2222, %v2221
        %v2241 = vpack.c.bf16 %v2224, %v2223
        %v2242 = vpack.c.bf16 %v2226, %v2225
        %s2243 = scalar_lea.vmem %s5, 64
        %v2244 = vld [vmem:[%s2243] sm:$0xf]
        %v2245 = vld [vmem:[%s2243 + $0x4] sm:$0xf]
        %v2246 = vld [vmem:[%s2243 + $0x8] sm:$0xf]
        %v2247 = vld [vmem:[%s2243 + $0xc] sm:$0xf]
        %v2248 = vld [vmem:[%s2243 + $0x10] sm:$0xf]
        %v2249 = vld [vmem:[%s2243 + $0x14] sm:$0xf]
        %v2250 = vld [vmem:[%s2243 + $0x18] sm:$0xf]
        %v2251 = vld [vmem:[%s2243 + $0x1c] sm:$0xf]
        %v2252 = vld [vmem:[%s2243 + $0x20] sm:$0xf]
        %v2253 = vld [vmem:[%s2243 + $0x24] sm:$0xf]
        %v2254 = vld [vmem:[%s2243 + $0x28] sm:$0xf]
        %v2255 = vld [vmem:[%s2243 + $0x2c] sm:$0xf]
        %v2256 = vld [vmem:[%s2243 + $0x30] sm:$0xf]
        %v2257 = vld [vmem:[%s2243 + $0x34] sm:$0xf]
        %v2258 = vld [vmem:[%s2243 + $0x38] sm:$0xf]
        %v2259 = vld [vmem:[%s2243 + $0x3c] sm:$0xf]
        %v2276 = vunpack.c.l.b16 %v2244
        %v2277 = vunpack.c.l.b16 %v2245
        %v2278 = vunpack.c.l.b16 %v2246
        %v2279 = vunpack.c.l.b16 %v2247
        %v2280 = vunpack.c.l.b16 %v2248
        %v2281 = vunpack.c.l.b16 %v2249
        %v2282 = vunpack.c.l.b16 %v2250
        %v2283 = vunpack.c.l.b16 %v2251
        %v2284 = vunpack.c.l.b16 %v2252
        %v2285 = vunpack.c.l.b16 %v2253
        %v2286 = vunpack.c.l.b16 %v2254
        %v2287 = vunpack.c.l.b16 %v2255
        %v2288 = vunpack.c.l.b16 %v2256
        %v2289 = vunpack.c.l.b16 %v2257
        %v2290 = vunpack.c.l.b16 %v2258
        %v2291 = vunpack.c.l.b16 %v2259
        %v2292 = vpack.c.b16 %v2277, %v2276
        %v2293 = vpack.c.b16 %v2279, %v2278
        %v2294 = vpack.c.b16 %v2281, %v2280
        %v2295 = vpack.c.b16 %v2283, %v2282
        %v2296 = vpack.c.b16 %v2285, %v2284
        %v2297 = vpack.c.b16 %v2287, %v2286
        %v2298 = vpack.c.b16 %v2289, %v2288
        %v2299 = vpack.c.b16 %v2291, %v2290
        %2308 = vmatprep.subr.bf16.mxu0 0
        %2309 = vmatpush1.bf16.msra.mxu0 %v2292
        %2310 = vmatprep.subr.bf16.mxu0 0
        %2311 = vmatpush1.bf16.msra.mxu0 %v2293
        %2312 = vmatprep.subr.bf16.mxu0 0
        %2313 = vmatpush1.bf16.msra.mxu0 %v2294
        %2314 = vmatprep.subr.bf16.mxu0 0
        %2315 = vmatpush1.bf16.msra.mxu0 %v2295
        %2316 = vmatprep.subr.bf16.mxu0 0
        %2317 = vmatpush1.bf16.msra.mxu0 %v2296
        %2318 = vmatprep.subr.bf16.mxu0 0
        %2319 = vmatpush1.bf16.msra.mxu0 %v2297
        %2320 = vmatprep.subr.bf16.mxu0 0
        %2321 = vmatpush1.bf16.msra.mxu0 %v2298
        %2322 = vmatprep.subr.bf16.mxu0 0
        %2323 = vmatpush1.bf16.msra.mxu0 %v2299
        %2324 = vmatprep.subr.bf16.mxu0 0
        %2325 = vmatpush1.bf16.msra.mxu0 0
        %2326 = vmatprep.subr.bf16.mxu0 0
        %2327 = vmatpush1.bf16.msra.mxu0 0
        %2328 = vmatprep.subr.bf16.mxu0 0
        %2329 = vmatpush1.bf16.msra.mxu0 0
        %2330 = vmatprep.subr.bf16.mxu0 0
        %2331 = vmatpush1.bf16.msra.mxu0 0
        %2332 = vmatprep.subr.bf16.mxu0 0
        %2333 = vmatpush1.bf16.msra.mxu0 0
        %2334 = vmatprep.subr.bf16.mxu0 0
        %2335 = vmatpush1.bf16.msra.mxu0 0
        %2336 = vmatprep.subr.bf16.mxu0 0
        %2337 = vmatpush1.bf16.msra.mxu0 0
        %2338 = vmatprep.subr.bf16.mxu0 0
        %2339 = vmatpush1.bf16.msra.mxu0 0
        %2340 = vmatprep.mubr.bf16.mxu0 0
        %2341 = vmatmul.mubr.bf16.gmra.mrb[0].mxu0 %v2227
        %v2342 = vpop.f32.mrb[0].mxu0
        %v2343 = vadd.f32 0.0, %v2342
        %v2344 = vpop.f32.mrb[0].mxu0
        %v2345 = vpop.f32.mrb[0].mxu0
        %v2346 = vadd.f32 0.0, %v2345
        %v2347 = vpop.f32.mrb[0].mxu0
        %2348 = vmatprep.mubr.bf16.mxu0 0
        %2349 = vmatmul.mubr.bf16.gmra.mrb[0].mxu0 %v2228
        %v2350 = vpop.f32.mrb[0].mxu0
        %v2351 = vadd.f32 0.0, %v2350
        %v2352 = vpop.f32.mrb[0].mxu0
        %v2353 = vpop.f32.mrb[0].mxu0
        %v2354 = vadd.f32 0.0, %v2353
        %v2355 = vpop.f32.mrb[0].mxu0
        %2356 = vmatprep.mubr.bf16.mxu0 0
        %2357 = vmatmul.mubr.bf16.gmra.mrb[0].mxu0 %v2229
        %v2358 = vpop.f32.mrb[0].mxu0
        %v2359 = vadd.f32 0.0, %v2358
        %v2360 = vpop.f32.mrb[0].mxu0
        %v2361 = vpop.f32.mrb[0].mxu0
        %v2362 = vadd.f32 0.0, %v2361
        %v2363 = vpop.f32.mrb[0].mxu0
        %2364 = vmatprep.mubr.bf16.mxu0 0
        %2365 = vmatmul.mubr.bf16.gmra.mrb[0].mxu0 %v2230
        %v2366 = vpop.f32.mrb[0].mxu0
        %v2367 = vadd.f32 0.0, %v2366
        %v2368 = vpop.f32.mrb[0].mxu0
        %v2369 = vpop.f32.mrb[0].mxu0
        %v2370 = vadd.f32 0.0, %v2369
        %v2371 = vpop.f32.mrb[0].mxu0
        %2372 = vmatprep.mubr.bf16.mxu0 0
        %2373 = vmatmul.mubr.bf16.gmra.mrb[0].mxu0 %v2231
        %v2374 = vpop.f32.mrb[0].mxu0
        %v2375 = vadd.f32 0.0, %v2374
        %v2376 = vpop.f32.mrb[0].mxu0
        %v2377 = vpop.f32.mrb[0].mxu0
        %v2378 = vadd.f32 0.0, %v2377
        %v2379 = vpop.f32.mrb[0].mxu0
        %2380 = vmatprep.mubr.bf16.mxu0 0
        %2381 = vmatmul.mubr.bf16.gmra.mrb[0].mxu0 %v2232
        %v2382 = vpop.f32.mrb[0].mxu0
        %v2383 = vadd.f32 0.0, %v2382
        %v2384 = vpop.f32.mrb[0].mxu0
        %v2385 = vpop.f32.mrb[0].mxu0
        %v2386 = vadd.f32 0.0, %v2385
        %v2387 = vpop.f32.mrb[0].mxu0
        %2388 = vmatprep.mubr.bf16.mxu0 0
        %2389 = vmatmul.mubr.bf16.gmra.mrb[0].mxu0 %v2233
        %v2390 = vpop.f32.mrb[0].mxu0
        %v2391 = vadd.f32 0.0, %v2390
        %v2392 = vpop.f32.mrb[0].mxu0
        %v2393 = vpop.f32.mrb[0].mxu0
        %v2394 = vadd.f32 0.0, %v2393
        %v2395 = vpop.f32.mrb[0].mxu0
        %2396 = vmatprep.mubr.bf16.mxu0 0
        %2397 = vmatmul.mubr.bf16.gmra.mrb[0].mxu0 %v2234
        %v2398 = vpop.f32.mrb[0].mxu0
        %v2399 = vadd.f32 0.0, %v2398
        %v2400 = vpop.f32.mrb[0].mxu0
        %v2401 = vpop.f32.mrb[0].mxu0
        %v2402 = vadd.f32 0.0, %v2401
        %v2403 = vpop.f32.mrb[0].mxu0
        %2404 = vmatprep.mubr.bf16.mxu0 0
        %2405 = vmatmul.mubr.bf16.gmra.mrb[0].mxu0 %v2235
        %v2406 = vpop.f32.mrb[0].mxu0
        %v2407 = vadd.f32 0.0, %v2406
        %v2408 = vpop.f32.mrb[0].mxu0
        %v2409 = vpop.f32.mrb[0].mxu0
        %v2410 = vadd.f32 0.0, %v2409
        %v2411 = vpop.f32.mrb[0].mxu0
        %2412 = vmatprep.mubr.bf16.mxu0 0
        %2413 = vmatmul.mubr.bf16.gmra.mrb[0].mxu0 %v2236
        %v2414 = vpop.f32.mrb[0].mxu0
        %v2415 = vadd.f32 0.0, %v2414
        %v2416 = vpop.f32.mrb[0].mxu0
        %v2417 = vpop.f32.mrb[0].mxu0
        %v2418 = vadd.f32 0.0, %v2417
        %v2419 = vpop.f32.mrb[0].mxu0
        %2420 = vmatprep.mubr.bf16.mxu0 0
        %2421 = vmatmul.mubr.bf16.gmra.mrb[0].mxu0 %v2237
        %v2422 = vpop.f32.mrb[0].mxu0
        %v2423 = vadd.f32 0.0, %v2422
        %v2424 = vpop.f32.mrb[0].mxu0
        %v2425 = vpop.f32.mrb[0].mxu0
        %v2426 = vadd.f32 0.0, %v2425
        %v2427 = vpop.f32.mrb[0].mxu0
        %2428 = vmatprep.mubr.bf16.mxu0 0
        %2429 = vmatmul.mubr.bf16.gmra.mrb[0].mxu0 %v2238
        %v2430 = vpop.f32.mrb[0].mxu0
        %v2431 = vadd.f32 0.0, %v2430
        %v2432 = vpop.f32.mrb[0].mxu0
        %v2433 = vpop.f32.mrb[0].mxu0
        %v2434 = vadd.f32 0.0, %v2433
        %v2435 = vpop.f32.mrb[0].mxu0
        %2436 = vmatprep.mubr.bf16.mxu0 0
        %2437 = vmatmul.mubr.bf16.gmra.mrb[0].mxu0 %v2239
        %v2438 = vpop.f32.mrb[0].mxu0
        %v2439 = vadd.f32 0.0, %v2438
        %v2440 = vpop.f32.mrb[0].mxu0
        %v2441 = vpop.f32.mrb[0].mxu0
        %v2442 = vadd.f32 0.0, %v2441
        %v2443 = vpop.f32.mrb[0].mxu0
        %2444 = vmatprep.mubr.bf16.mxu0 0
        %2445 = vmatmul.mubr.bf16.gmra.mrb[0].mxu0 %v2240
        %v2446 = vpop.f32.mrb[0].mxu0
        %v2447 = vadd.f32 0.0, %v2446
        %v2448 = vpop.f32.mrb[0].mxu0
        %v2449 = vpop.f32.mrb[0].mxu0
        %v2450 = vadd.f32 0.0, %v2449
        %v2451 = vpop.f32.mrb[0].mxu0
        %2452 = vmatprep.mubr.bf16.mxu0 0
        %2453 = vmatmul.mubr.bf16.gmra.mrb[0].mxu0 %v2241
        %v2454 = vpop.f32.mrb[0].mxu0
        %v2455 = vadd.f32 0.0, %v2454
        %v2456 = vpop.f32.mrb[0].mxu0
        %v2457 = vpop.f32.mrb[0].mxu0
        %v2458 = vadd.f32 0.0, %v2457
        %v2459 = vpop.f32.mrb[0].mxu0
        %2460 = vmatprep.mubr.bf16.mxu0 0
        %2461 = vmatmul.mubr.bf16.gmra.mrb[0].mxu0 %v2242
        %v2462 = vpop.f32.mrb[0].mxu0
        %v2463 = vadd.f32 0.0, %v2462
        %v2464 = vpop.f32.mrb[0].mxu0
        %v2465 = vpop.f32.mrb[0].mxu0
        %v2466 = vadd.f32 0.0, %v2465
        %v2467 = vpop.f32.mrb[0].mxu0
        %2468 = vdwg.mxu0
        %v2469 = vpack.c.bf16 %v2346, %v2343
        %v2470 = vpack.c.bf16 %v2354, %v2351
        %v2471 = vpack.c.bf16 %v2362, %v2359
        %v2472 = vpack.c.bf16 %v2370, %v2367
        %v2473 = vpack.c.bf16 %v2378, %v2375
        %v2474 = vpack.c.bf16 %v2386, %v2383
        %v2475 = vpack.c.bf16 %v2394, %v2391
        %v2476 = vpack.c.bf16 %v2402, %v2399
        %v2477 = vpack.c.bf16 %v2410, %v2407
        %v2478 = vpack.c.bf16 %v2418, %v2415
        %v2479 = vpack.c.bf16 %v2426, %v2423
        %v2480 = vpack.c.bf16 %v2434, %v2431
        %v2481 = vpack.c.bf16 %v2442, %v2439
        %v2482 = vpack.c.bf16 %v2450, %v2447
        %v2483 = vpack.c.bf16 %v2458, %v2455
        %v2484 = vpack.c.bf16 %v2466, %v2463
        %2485 = vmatprep.subr.bf16.mxu0 0
        %2486 = vmatpush1.bf16.msra.mxu0 %v2469
        %2487 = vmatprep.subr.bf16.mxu0 0
        %2488 = vmatpush1.bf16.msra.mxu0 0
        %2489 = vmatprep.subr.bf16.mxu0 0
        %2490 = vmatpush1.bf16.msra.mxu0 0
        %2491 = vmatprep.subr.bf16.mxu0 0
        %2492 = vmatpush1.bf16.msra.mxu0 0
        %2493 = vmatprep.subr.bf16.mxu0 0
        %2494 = vmatpush1.bf16.msra.mxu0 0
        %2495 = vmatprep.subr.bf16.mxu0 0
        %2496 = vmatpush1.bf16.msra.mxu0 0
        %2497 = vmatprep.subr.bf16.mxu0 0
        %2498 = vmatpush1.bf16.msra.mxu0 0
        %2499 = vmatprep.subr.bf16.mxu0 0
        %2500 = vmatpush1.bf16.msra.mxu0 0
        %2501 = vmatprep.subr.bf16.mxu0 0
        %2502 = vmatpush1.bf16.msra.mxu0 0
        %2503 = vmatprep.subr.bf16.mxu0 0
        %2504 = vmatpush1.bf16.msra.mxu0 0
        %2505 = vmatprep.subr.bf16.mxu0 0
        %2506 = vmatpush1.bf16.msra.mxu0 0
        %2507 = vmatprep.subr.bf16.mxu0 0
        %2508 = vmatpush1.bf16.msra.mxu0 0
        %2509 = vmatprep.subr.bf16.mxu0 0
        %2510 = vmatpush1.bf16.msra.mxu0 0
        %2511 = vmatprep.subr.bf16.mxu0 0
        %2512 = vmatpush1.bf16.msra.mxu0 0
        %2513 = vmatprep.subr.bf16.mxu0 0
        %2514 = vmatpush1.bf16.msra.mxu0 0
        %2515 = vmatprep.subr.bf16.mxu0 0
        %2516 = vmatpush1.bf16.msra.mxu0 0
        %2517 = vmatprep.mubr.bf16.mxu0 0
        %2518 = vmatmul.mubr.bf16.gmra.mrb[0].mxu0 %v1076
        %v2519 = vpop.f32.mrb[0].mxu0
        %v2520 = vadd.f32 0.0, %v2519
        %v2521 = vpop.f32.mrb[0].mxu0
        %v2522 = vpop.f32.mrb[0].mxu0
        %v2523 = vadd.f32 0.0, %v2522
        %v2524 = vpop.f32.mrb[0].mxu0
        %2525 = vdwg.mxu0
        %2526 = vmatprep.subr.bf16.mxu0 0
        %2527 = vmatpush1.bf16.msra.mxu0 %v2470
        %2528 = vmatprep.subr.bf16.mxu0 0
        %2529 = vmatpush1.bf16.msra.mxu0 0
        %2530 = vmatprep.subr.bf16.mxu0 0
        %2531 = vmatpush1.bf16.msra.mxu0 0
        %2532 = vmatprep.subr.bf16.mxu0 0
        %2533 = vmatpush1.bf16.msra.mxu0 0
        %2534 = vmatprep.subr.bf16.mxu0 0
        %2535 = vmatpush1.bf16.msra.mxu0 0
        %2536 = vmatprep.subr.bf16.mxu0 0
        %2537 = vmatpush1.bf16.msra.mxu0 0
        %2538 = vmatprep.subr.bf16.mxu0 0
        %2539 = vmatpush1.bf16.msra.mxu0 0
        %2540 = vmatprep.subr.bf16.mxu0 0
        %2541 = vmatpush1.bf16.msra.mxu0 0
        %2542 = vmatprep.subr.bf16.mxu0 0
        %2543 = vmatpush1.bf16.msra.mxu0 0
        %2544 = vmatprep.subr.bf16.mxu0 0
        %2545 = vmatpush1.bf16.msra.mxu0 0
        %2546 = vmatprep.subr.bf16.mxu0 0
        %2547 = vmatpush1.bf16.msra.mxu0 0
        %2548 = vmatprep.subr.bf16.mxu0 0
        %2549 = vmatpush1.bf16.msra.mxu0 0
        %2550 = vmatprep.subr.bf16.mxu0 0
        %2551 = vmatpush1.bf16.msra.mxu0 0
        %2552 = vmatprep.subr.bf16.mxu0 0
        %2553 = vmatpush1.bf16.msra.mxu0 0
        %2554 = vmatprep.subr.bf16.mxu0 0
        %2555 = vmatpush1.bf16.msra.mxu0 0
        %2556 = vmatprep.subr.bf16.mxu0 0
        %2557 = vmatpush1.bf16.msra.mxu0 0
        %2558 = vmatprep.mubr.bf16.mxu0 0
        %2559 = vmatmul.mubr.bf16.gmra.mrb[0].mxu0 %v1125
        %v2560 = vpop.f32.mrb[0].mxu0
        %v2561 = vadd.f32 0.0, %v2560
        %v2562 = vpop.f32.mrb[0].mxu0
        %v2563 = vpop.f32.mrb[0].mxu0
        %v2564 = vadd.f32 0.0, %v2563
        %v2565 = vpop.f32.mrb[0].mxu0
        %2566 = vdwg.mxu0
        %2567 = vmatprep.subr.bf16.mxu0 0
        %2568 = vmatpush1.bf16.msra.mxu0 %v2471
        %2569 = vmatprep.subr.bf16.mxu0 0
        %2570 = vmatpush1.bf16.msra.mxu0 0
        %2571 = vmatprep.subr.bf16.mxu0 0
        %2572 = vmatpush1.bf16.msra.mxu0 0
        %2573 = vmatprep.subr.bf16.mxu0 0
        %2574 = vmatpush1.bf16.msra.mxu0 0
        %2575 = vmatprep.subr.bf16.mxu0 0
        %2576 = vmatpush1.bf16.msra.mxu0 0
        %2577 = vmatprep.subr.bf16.mxu0 0
        %2578 = vmatpush1.bf16.msra.mxu0 0
        %2579 = vmatprep.subr.bf16.mxu0 0
        %2580 = vmatpush1.bf16.msra.mxu0 0
        %2581 = vmatprep.subr.bf16.mxu0 0
        %2582 = vmatpush1.bf16.msra.mxu0 0
        %2583 = vmatprep.subr.bf16.mxu0 0
        %2584 = vmatpush1.bf16.msra.mxu0 0
        %2585 = vmatprep.subr.bf16.mxu0 0
        %2586 = vmatpush1.bf16.msra.mxu0 0
        %2587 = vmatprep.subr.bf16.mxu0 0
        %2588 = vmatpush1.bf16.msra.mxu0 0
        %2589 = vmatprep.subr.bf16.mxu0 0
        %2590 = vmatpush1.bf16.msra.mxu0 0
        %2591 = vmatprep.subr.bf16.mxu0 0
        %2592 = vmatpush1.bf16.msra.mxu0 0
        %2593 = vmatprep.subr.bf16.mxu0 0
        %2594 = vmatpush1.bf16.msra.mxu0 0
        %2595 = vmatprep.subr.bf16.mxu0 0
        %2596 = vmatpush1.bf16.msra.mxu0 0
        %2597 = vmatprep.subr.bf16.mxu0 0
        %2598 = vmatpush1.bf16.msra.mxu0 0
        %2599 = vmatprep.mubr.bf16.mxu0 0
        %2600 = vmatmul.mubr.bf16.gmra.mrb[0].mxu0 %v1174
        %v2601 = vpop.f32.mrb[0].mxu0
        %v2602 = vadd.f32 0.0, %v2601
        %v2603 = vpop.f32.mrb[0].mxu0
        %v2604 = vpop.f32.mrb[0].mxu0
        %v2605 = vadd.f32 0.0, %v2604
        %v2606 = vpop.f32.mrb[0].mxu0
        %2607 = vdwg.mxu0
        %2608 = vmatprep.subr.bf16.mxu0 0
        %2609 = vmatpush1.bf16.msra.mxu0 %v2472
        %2610 = vmatprep.subr.bf16.mxu0 0
        %2611 = vmatpush1.bf16.msra.mxu0 0
        %2612 = vmatprep.subr.bf16.mxu0 0
        %2613 = vmatpush1.bf16.msra.mxu0 0
        %2614 = vmatprep.subr.bf16.mxu0 0
        %2615 = vmatpush1.bf16.msra.mxu0 0
        %2616 = vmatprep.subr.bf16.mxu0 0
        %2617 = vmatpush1.bf16.msra.mxu0 0
        %2618 = vmatprep.subr.bf16.mxu0 0
        %2619 = vmatpush1.bf16.msra.mxu0 0
        %2620 = vmatprep.subr.bf16.mxu0 0
        %2621 = vmatpush1.bf16.msra.mxu0 0
        %2622 = vmatprep.subr.bf16.mxu0 0
        %2623 = vmatpush1.bf16.msra.mxu0 0
        %2624 = vmatprep.subr.bf16.mxu0 0
        %2625 = vmatpush1.bf16.msra.mxu0 0
        %2626 = vmatprep.subr.bf16.mxu0 0
        %2627 = vmatpush1.bf16.msra.mxu0 0
        %2628 = vmatprep.subr.bf16.mxu0 0
        %2629 = vmatpush1.bf16.msra.mxu0 0
        %2630 = vmatprep.subr.bf16.mxu0 0
        %2631 = vmatpush1.bf16.msra.mxu0 0
        %2632 = vmatprep.subr.bf16.mxu0 0
        %2633 = vmatpush1.bf16.msra.mxu0 0
        %2634 = vmatprep.subr.bf16.mxu0 0
        %2635 = vmatpush1.bf16.msra.mxu0 0
        %2636 = vmatprep.subr.bf16.mxu0 0
        %2637 = vmatpush1.bf16.msra.mxu0 0
        %2638 = vmatprep.subr.bf16.mxu0 0
        %2639 = vmatpush1.bf16.msra.mxu0 0
        %2640 = vmatprep.mubr.bf16.mxu0 0
        %2641 = vmatmul.mubr.bf16.gmra.mrb[0].mxu0 %v1223
        %v2642 = vpop.f32.mrb[0].mxu0
        %v2643 = vadd.f32 0.0, %v2642
        %v2644 = vpop.f32.mrb[0].mxu0
        %v2645 = vpop.f32.mrb[0].mxu0
        %v2646 = vadd.f32 0.0, %v2645
        %v2647 = vpop.f32.mrb[0].mxu0
        %2648 = vdwg.mxu0
        %2649 = vmatprep.subr.bf16.mxu0 0
        %2650 = vmatpush1.bf16.msra.mxu0 %v2473
        %2651 = vmatprep.subr.bf16.mxu0 0
        %2652 = vmatpush1.bf16.msra.mxu0 0
        %2653 = vmatprep.subr.bf16.mxu0 0
        %2654 = vmatpush1.bf16.msra.mxu0 0
        %2655 = vmatprep.subr.bf16.mxu0 0
        %2656 = vmatpush1.bf16.msra.mxu0 0
        %2657 = vmatprep.subr.bf16.mxu0 0
        %2658 = vmatpush1.bf16.msra.mxu0 0
        %2659 = vmatprep.subr.bf16.mxu0 0
        %2660 = vmatpush1.bf16.msra.mxu0 0
        %2661 = vmatprep.subr.bf16.mxu0 0
        %2662 = vmatpush1.bf16.msra.mxu0 0
        %2663 = vmatprep.subr.bf16.mxu0 0
        %2664 = vmatpush1.bf16.msra.mxu0 0
        %2665 = vmatprep.subr.bf16.mxu0 0
        %2666 = vmatpush1.bf16.msra.mxu0 0
        %2667 = vmatprep.subr.bf16.mxu0 0
        %2668 = vmatpush1.bf16.msra.mxu0 0
        %2669 = vmatprep.subr.bf16.mxu0 0
        %2670 = vmatpush1.bf16.msra.mxu0 0
        %2671 = vmatprep.subr.bf16.mxu0 0
        %2672 = vmatpush1.bf16.msra.mxu0 0
        %2673 = vmatprep.subr.bf16.mxu0 0
        %2674 = vmatpush1.bf16.msra.mxu0 0
        %2675 = vmatprep.subr.bf16.mxu0 0
        %2676 = vmatpush1.bf16.msra.mxu0 0
        %2677 = vmatprep.subr.bf16.mxu0 0
        %2678 = vmatpush1.bf16.msra.mxu0 0
        %2679 = vmatprep.subr.bf16.mxu0 0
        %2680 = vmatpush1.bf16.msra.mxu0 0
        %2681 = vmatprep.mubr.bf16.mxu0 0
        %2682 = vmatmul.mubr.bf16.gmra.mrb[0].mxu0 %v1272
        %v2683 = vpop.f32.mrb[0].mxu0
        %v2684 = vadd.f32 0.0, %v2683
        %v2685 = vpop.f32.mrb[0].mxu0
        %v2686 = vpop.f32.mrb[0].mxu0
        %v2687 = vadd.f32 0.0, %v2686
        %v2688 = vpop.f32.mrb[0].mxu0
        %2689 = vdwg.mxu0
        %2690 = vmatprep.subr.bf16.mxu0 0
        %2691 = vmatpush1.bf16.msra.mxu0 %v2474
        %2692 = vmatprep.subr.bf16.mxu0 0
        %2693 = vmatpush1.bf16.msra.mxu0 0
        %2694 = vmatprep.subr.bf16.mxu0 0
        %2695 = vmatpush1.bf16.msra.mxu0 0
        %2696 = vmatprep.subr.bf16.mxu0 0
        %2697 = vmatpush1.bf16.msra.mxu0 0
        %2698 = vmatprep.subr.bf16.mxu0 0
        %2699 = vmatpush1.bf16.msra.mxu0 0
        %2700 = vmatprep.subr.bf16.mxu0 0
        %2701 = vmatpush1.bf16.msra.mxu0 0
        %2702 = vmatprep.subr.bf16.mxu0 0
        %2703 = vmatpush1.bf16.msra.mxu0 0
        %2704 = vmatprep.subr.bf16.mxu0 0
        %2705 = vmatpush1.bf16.msra.mxu0 0
        %2706 = vmatprep.subr.bf16.mxu0 0
        %2707 = vmatpush1.bf16.msra.mxu0 0
        %2708 = vmatprep.subr.bf16.mxu0 0
        %2709 = vmatpush1.bf16.msra.mxu0 0
        %2710 = vmatprep.subr.bf16.mxu0 0
        %2711 = vmatpush1.bf16.msra.mxu0 0
        %2712 = vmatprep.subr.bf16.mxu0 0
        %2713 = vmatpush1.bf16.msra.mxu0 0
        %2714 = vmatprep.subr.bf16.mxu0 0
        %2715 = vmatpush1.bf16.msra.mxu0 0
        %2716 = vmatprep.subr.bf16.mxu0 0
        %2717 = vmatpush1.bf16.msra.mxu0 0
        %2718 = vmatprep.subr.bf16.mxu0 0
        %2719 = vmatpush1.bf16.msra.mxu0 0
        %2720 = vmatprep.subr.bf16.mxu0 0
        %2721 = vmatpush1.bf16.msra.mxu0 0
        %2722 = vmatprep.mubr.bf16.mxu0 0
        %2723 = vmatmul.mubr.bf16.gmra.mrb[0].mxu0 %v1321
        %v2724 = vpop.f32.mrb[0].mxu0
        %v2725 = vadd.f32 0.0, %v2724
        %v2726 = vpop.f32.mrb[0].mxu0
        %v2727 = vpop.f32.mrb[0].mxu0
        %v2728 = vadd.f32 0.0, %v2727
        %v2729 = vpop.f32.mrb[0].mxu0
        %2730 = vdwg.mxu0
        %2731 = vmatprep.subr.bf16.mxu0 0
        %2732 = vmatpush1.bf16.msra.mxu0 %v2475
        %2733 = vmatprep.subr.bf16.mxu0 0
        %2734 = vmatpush1.bf16.msra.mxu0 0
        %2735 = vmatprep.subr.bf16.mxu0 0
        %2736 = vmatpush1.bf16.msra.mxu0 0
        %2737 = vmatprep.subr.bf16.mxu0 0
        %2738 = vmatpush1.bf16.msra.mxu0 0
        %2739 = vmatprep.subr.bf16.mxu0 0
        %2740 = vmatpush1.bf16.msra.mxu0 0
        %2741 = vmatprep.subr.bf16.mxu0 0
        %2742 = vmatpush1.bf16.msra.mxu0 0
        %2743 = vmatprep.subr.bf16.mxu0 0
        %2744 = vmatpush1.bf16.msra.mxu0 0
        %2745 = vmatprep.subr.bf16.mxu0 0
        %2746 = vmatpush1.bf16.msra.mxu0 0
        %2747 = vmatprep.subr.bf16.mxu0 0
        %2748 = vmatpush1.bf16.msra.mxu0 0
        %2749 = vmatprep.subr.bf16.mxu0 0
        %2750 = vmatpush1.bf16.msra.mxu0 0
        %2751 = vmatprep.subr.bf16.mxu0 0
        %2752 = vmatpush1.bf16.msra.mxu0 0
        %2753 = vmatprep.subr.bf16.mxu0 0
        %2754 = vmatpush1.bf16.msra.mxu0 0
        %2755 = vmatprep.subr.bf16.mxu0 0
        %2756 = vmatpush1.bf16.msra.mxu0 0
        %2757 = vmatprep.subr.bf16.mxu0 0
        %2758 = vmatpush1.bf16.msra.mxu0 0
        %2759 = vmatprep.subr.bf16.mxu0 0
        %2760 = vmatpush1.bf16.msra.mxu0 0
        %2761 = vmatprep.subr.bf16.mxu0 0
        %2762 = vmatpush1.bf16.msra.mxu0 0
        %2763 = vmatprep.mubr.bf16.mxu0 0
        %2764 = vmatmul.mubr.bf16.gmra.mrb[0].mxu0 %v1370
        %v2765 = vpop.f32.mrb[0].mxu0
        %v2766 = vadd.f32 0.0, %v2765
        %v2767 = vpop.f32.mrb[0].mxu0
        %v2768 = vpop.f32.mrb[0].mxu0
        %v2769 = vadd.f32 0.0, %v2768
        %v2770 = vpop.f32.mrb[0].mxu0
        %2771 = vdwg.mxu0
        %2772 = vmatprep.subr.bf16.mxu0 0
        %2773 = vmatpush1.bf16.msra.mxu0 %v2476
        %2774 = vmatprep.subr.bf16.mxu0 0
        %2775 = vmatpush1.bf16.msra.mxu0 0
        %2776 = vmatprep.subr.bf16.mxu0 0
        %2777 = vmatpush1.bf16.msra.mxu0 0
        %2778 = vmatprep.subr.bf16.mxu0 0
        %2779 = vmatpush1.bf16.msra.mxu0 0
        %2780 = vmatprep.subr.bf16.mxu0 0
        %2781 = vmatpush1.bf16.msra.mxu0 0
        %2782 = vmatprep.subr.bf16.mxu0 0
        %2783 = vmatpush1.bf16.msra.mxu0 0
        %2784 = vmatprep.subr.bf16.mxu0 0
        %2785 = vmatpush1.bf16.msra.mxu0 0
        %2786 = vmatprep.subr.bf16.mxu0 0
        %2787 = vmatpush1.bf16.msra.mxu0 0
        %2788 = vmatprep.subr.bf16.mxu0 0
        %2789 = vmatpush1.bf16.msra.mxu0 0
        %2790 = vmatprep.subr.bf16.mxu0 0
        %2791 = vmatpush1.bf16.msra.mxu0 0
        %2792 = vmatprep.subr.bf16.mxu0 0
        %2793 = vmatpush1.bf16.msra.mxu0 0
        %2794 = vmatprep.subr.bf16.mxu0 0
        %2795 = vmatpush1.bf16.msra.mxu0 0
        %2796 = vmatprep.subr.bf16.mxu0 0
        %2797 = vmatpush1.bf16.msra.mxu0 0
        %2798 = vmatprep.subr.bf16.mxu0 0
        %2799 = vmatpush1.bf16.msra.mxu0 0
        %2800 = vmatprep.subr.bf16.mxu0 0
        %2801 = vmatpush1.bf16.msra.mxu0 0
        %2802 = vmatprep.subr.bf16.mxu0 0
        %2803 = vmatpush1.bf16.msra.mxu0 0
        %2804 = vmatprep.mubr.bf16.mxu0 0
        %2805 = vmatmul.mubr.bf16.gmra.mrb[0].mxu0 %v1419
        %v2806 = vpop.f32.mrb[0].mxu0
        %v2807 = vadd.f32 0.0, %v2806
        %v2808 = vpop.f32.mrb[0].mxu0
        %v2809 = vpop.f32.mrb[0].mxu0
        %v2810 = vadd.f32 0.0, %v2809
        %v2811 = vpop.f32.mrb[0].mxu0
        %2812 = vdwg.mxu0
        %2813 = vmatprep.subr.bf16.mxu0 0
        %2814 = vmatpush1.bf16.msra.mxu0 %v2477
        %2815 = vmatprep.subr.bf16.mxu0 0
        %2816 = vmatpush1.bf16.msra.mxu0 0
        %2817 = vmatprep.subr.bf16.mxu0 0
        %2818 = vmatpush1.bf16.msra.mxu0 0
        %2819 = vmatprep.subr.bf16.mxu0 0
        %2820 = vmatpush1.bf16.msra.mxu0 0
        %2821 = vmatprep.subr.bf16.mxu0 0
        %2822 = vmatpush1.bf16.msra.mxu0 0
        %2823 = vmatprep.subr.bf16.mxu0 0
        %2824 = vmatpush1.bf16.msra.mxu0 0
        %2825 = vmatprep.subr.bf16.mxu0 0
        %2826 = vmatpush1.bf16.msra.mxu0 0
        %2827 = vmatprep.subr.bf16.mxu0 0
        %2828 = vmatpush1.bf16.msra.mxu0 0
        %2829 = vmatprep.subr.bf16.mxu0 0
        %2830 = vmatpush1.bf16.msra.mxu0 0
        %2831 = vmatprep.subr.bf16.mxu0 0
        %2832 = vmatpush1.bf16.msra.mxu0 0
        %2833 = vmatprep.subr.bf16.mxu0 0
        %2834 = vmatpush1.bf16.msra.mxu0 0
        %2835 = vmatprep.subr.bf16.mxu0 0
        %2836 = vmatpush1.bf16.msra.mxu0 0
        %2837 = vmatprep.subr.bf16.mxu0 0
        %2838 = vmatpush1.bf16.msra.mxu0 0
        %2839 = vmatprep.subr.bf16.mxu0 0
        %2840 = vmatpush1.bf16.msra.mxu0 0
        %2841 = vmatprep.subr.bf16.mxu0 0
        %2842 = vmatpush1.bf16.msra.mxu0 0
        %2843 = vmatprep.subr.bf16.mxu0 0
        %2844 = vmatpush1.bf16.msra.mxu0 0
        %2845 = vmatprep.mubr.bf16.mxu0 0
        %2846 = vmatmul.mubr.bf16.gmra.mrb[0].mxu0 %v1468
        %v2847 = vpop.f32.mrb[0].mxu0
        %v2848 = vadd.f32 0.0, %v2847
        %v2849 = vpop.f32.mrb[0].mxu0
        %v2850 = vpop.f32.mrb[0].mxu0
        %v2851 = vadd.f32 0.0, %v2850
        %v2852 = vpop.f32.mrb[0].mxu0
        %2853 = vdwg.mxu0
        %2854 = vmatprep.subr.bf16.mxu0 0
        %2855 = vmatpush1.bf16.msra.mxu0 %v2478
        %2856 = vmatprep.subr.bf16.mxu0 0
        %2857 = vmatpush1.bf16.msra.mxu0 0
        %2858 = vmatprep.subr.bf16.mxu0 0
        %2859 = vmatpush1.bf16.msra.mxu0 0
        %2860 = vmatprep.subr.bf16.mxu0 0
        %2861 = vmatpush1.bf16.msra.mxu0 0
        %2862 = vmatprep.subr.bf16.mxu0 0
        %2863 = vmatpush1.bf16.msra.mxu0 0
        %2864 = vmatprep.subr.bf16.mxu0 0
        %2865 = vmatpush1.bf16.msra.mxu0 0
        %2866 = vmatprep.subr.bf16.mxu0 0
        %2867 = vmatpush1.bf16.msra.mxu0 0
        %2868 = vmatprep.subr.bf16.mxu0 0
        %2869 = vmatpush1.bf16.msra.mxu0 0
        %2870 = vmatprep.subr.bf16.mxu0 0
        %2871 = vmatpush1.bf16.msra.mxu0 0
        %2872 = vmatprep.subr.bf16.mxu0 0
        %2873 = vmatpush1.bf16.msra.mxu0 0
        %2874 = vmatprep.subr.bf16.mxu0 0
        %2875 = vmatpush1.bf16.msra.mxu0 0
        %2876 = vmatprep.subr.bf16.mxu0 0
        %2877 = vmatpush1.bf16.msra.mxu0 0
        %2878 = vmatprep.subr.bf16.mxu0 0
        %2879 = vmatpush1.bf16.msra.mxu0 0
        %2880 = vmatprep.subr.bf16.mxu0 0
        %2881 = vmatpush1.bf16.msra.mxu0 0
        %2882 = vmatprep.subr.bf16.mxu0 0
        %2883 = vmatpush1.bf16.msra.mxu0 0
        %2884 = vmatprep.subr.bf16.mxu0 0
        %2885 = vmatpush1.bf16.msra.mxu0 0
        %2886 = vmatprep.mubr.bf16.mxu0 0
        %2887 = vmatmul.mubr.bf16.gmra.mrb[0].mxu0 %v1517
        %v2888 = vpop.f32.mrb[0].mxu0
        %v2889 = vadd.f32 0.0, %v2888
        %v2890 = vpop.f32.mrb[0].mxu0
        %v2891 = vpop.f32.mrb[0].mxu0
        %v2892 = vadd.f32 0.0, %v2891
        %v2893 = vpop.f32.mrb[0].mxu0
        %2894 = vdwg.mxu0
        %2895 = vmatprep.subr.bf16.mxu0 0
        %2896 = vmatpush1.bf16.msra.mxu0 %v2479
        %2897 = vmatprep.subr.bf16.mxu0 0
        %2898 = vmatpush1.bf16.msra.mxu0 0
        %2899 = vmatprep.subr.bf16.mxu0 0
        %2900 = vmatpush1.bf16.msra.mxu0 0
        %2901 = vmatprep.subr.bf16.mxu0 0
        %2902 = vmatpush1.bf16.msra.mxu0 0
        %2903 = vmatprep.subr.bf16.mxu0 0
        %2904 = vmatpush1.bf16.msra.mxu0 0
        %2905 = vmatprep.subr.bf16.mxu0 0
        %2906 = vmatpush1.bf16.msra.mxu0 0
        %2907 = vmatprep.subr.bf16.mxu0 0
        %2908 = vmatpush1.bf16.msra.mxu0 0
        %2909 = vmatprep.subr.bf16.mxu0 0
        %2910 = vmatpush1.bf16.msra.mxu0 0
        %2911 = vmatprep.subr.bf16.mxu0 0
        %2912 = vmatpush1.bf16.msra.mxu0 0
        %2913 = vmatprep.subr.bf16.mxu0 0
        %2914 = vmatpush1.bf16.msra.mxu0 0
        %2915 = vmatprep.subr.bf16.mxu0 0
        %2916 = vmatpush1.bf16.msra.mxu0 0
        %2917 = vmatprep.subr.bf16.mxu0 0
        %2918 = vmatpush1.bf16.msra.mxu0 0
        %2919 = vmatprep.subr.bf16.mxu0 0
        %2920 = vmatpush1.bf16.msra.mxu0 0
        %2921 = vmatprep.subr.bf16.mxu0 0
        %2922 = vmatpush1.bf16.msra.mxu0 0
        %2923 = vmatprep.subr.bf16.mxu0 0
        %2924 = vmatpush1.bf16.msra.mxu0 0
        %2925 = vmatprep.subr.bf16.mxu0 0
        %2926 = vmatpush1.bf16.msra.mxu0 0
        %2927 = vmatprep.mubr.bf16.mxu0 0
        %2928 = vmatmul.mubr.bf16.gmra.mrb[0].mxu0 %v1566
        %v2929 = vpop.f32.mrb[0].mxu0
        %v2930 = vadd.f32 0.0, %v2929
        %v2931 = vpop.f32.mrb[0].mxu0
        %v2932 = vpop.f32.mrb[0].mxu0
        %v2933 = vadd.f32 0.0, %v2932
        %v2934 = vpop.f32.mrb[0].mxu0
        %2935 = vdwg.mxu0
        %2936 = vmatprep.subr.bf16.mxu0 0
        %2937 = vmatpush1.bf16.msra.mxu0 %v2480
        %2938 = vmatprep.subr.bf16.mxu0 0
        %2939 = vmatpush1.bf16.msra.mxu0 0
        %2940 = vmatprep.subr.bf16.mxu0 0
        %2941 = vmatpush1.bf16.msra.mxu0 0
        %2942 = vmatprep.subr.bf16.mxu0 0
        %2943 = vmatpush1.bf16.msra.mxu0 0
        %2944 = vmatprep.subr.bf16.mxu0 0
        %2945 = vmatpush1.bf16.msra.mxu0 0
        %2946 = vmatprep.subr.bf16.mxu0 0
        %2947 = vmatpush1.bf16.msra.mxu0 0
        %2948 = vmatprep.subr.bf16.mxu0 0
        %2949 = vmatpush1.bf16.msra.mxu0 0
        %2950 = vmatprep.subr.bf16.mxu0 0
        %2951 = vmatpush1.bf16.msra.mxu0 0
        %2952 = vmatprep.subr.bf16.mxu0 0
        %2953 = vmatpush1.bf16.msra.mxu0 0
        %2954 = vmatprep.subr.bf16.mxu0 0
        %2955 = vmatpush1.bf16.msra.mxu0 0
        %2956 = vmatprep.subr.bf16.mxu0 0
        %2957 = vmatpush1.bf16.msra.mxu0 0
        %2958 = vmatprep.subr.bf16.mxu0 0
        %2959 = vmatpush1.bf16.msra.mxu0 0
        %2960 = vmatprep.subr.bf16.mxu0 0
        %2961 = vmatpush1.bf16.msra.mxu0 0
        %2962 = vmatprep.subr.bf16.mxu0 0
        %2963 = vmatpush1.bf16.msra.mxu0 0
        %2964 = vmatprep.subr.bf16.mxu0 0
        %2965 = vmatpush1.bf16.msra.mxu0 0
        %2966 = vmatprep.subr.bf16.mxu0 0
        %2967 = vmatpush1.bf16.msra.mxu0 0
        %2968 = vmatprep.mubr.bf16.mxu0 0
        %2969 = vmatmul.mubr.bf16.gmra.mrb[0].mxu0 %v1615
        %v2970 = vpop.f32.mrb[0].mxu0
        %v2971 = vadd.f32 0.0, %v2970
        %v2972 = vpop.f32.mrb[0].mxu0
        %v2973 = vpop.f32.mrb[0].mxu0
        %v2974 = vadd.f32 0.0, %v2973
        %v2975 = vpop.f32.mrb[0].mxu0
        %2976 = vdwg.mxu0
        %2977 = vmatprep.subr.bf16.mxu0 0
        %2978 = vmatpush1.bf16.msra.mxu0 %v2481
        %2979 = vmatprep.subr.bf16.mxu0 0
        %2980 = vmatpush1.bf16.msra.mxu0 0
        %2981 = vmatprep.subr.bf16.mxu0 0
        %2982 = vmatpush1.bf16.msra.mxu0 0
        %2983 = vmatprep.subr.bf16.mxu0 0
        %2984 = vmatpush1.bf16.msra.mxu0 0
        %2985 = vmatprep.subr.bf16.mxu0 0
        %2986 = vmatpush1.bf16.msra.mxu0 0
        %2987 = vmatprep.subr.bf16.mxu0 0
        %2988 = vmatpush1.bf16.msra.mxu0 0
        %2989 = vmatprep.subr.bf16.mxu0 0
        %2990 = vmatpush1.bf16.msra.mxu0 0
        %2991 = vmatprep.subr.bf16.mxu0 0
        %2992 = vmatpush1.bf16.msra.mxu0 0
        %2993 = vmatprep.subr.bf16.mxu0 0
        %2994 = vmatpush1.bf16.msra.mxu0 0
        %2995 = vmatprep.subr.bf16.mxu0 0
        %2996 = vmatpush1.bf16.msra.mxu0 0
        %2997 = vmatprep.subr.bf16.mxu0 0
        %2998 = vmatpush1.bf16.msra.mxu0 0
        %2999 = vmatprep.subr.bf16.mxu0 0
        %3000 = vmatpush1.bf16.msra.mxu0 0
        %3001 = vmatprep.subr.bf16.mxu0 0
        %3002 = vmatpush1.bf16.msra.mxu0 0
        %3003 = vmatprep.subr.bf16.mxu0 0
        %3004 = vmatpush1.bf16.msra.mxu0 0
        %3005 = vmatprep.subr.bf16.mxu0 0
        %3006 = vmatpush1.bf16.msra.mxu0 0
        %3007 = vmatprep.subr.bf16.mxu0 0
        %3008 = vmatpush1.bf16.msra.mxu0 0
        %3009 = vmatprep.mubr.bf16.mxu0 0
        %3010 = vmatmul.mubr.bf16.gmra.mrb[0].mxu0 %v1664
        %v3011 = vpop.f32.mrb[0].mxu0
        %v3012 = vadd.f32 0.0, %v3011
        %v3013 = vpop.f32.mrb[0].mxu0
        %v3014 = vpop.f32.mrb[0].mxu0
        %v3015 = vadd.f32 0.0, %v3014
        %v3016 = vpop.f32.mrb[0].mxu0
        %3017 = vdwg.mxu0
        %3018 = vmatprep.subr.bf16.mxu0 0
        %3019 = vmatpush1.bf16.msra.mxu0 %v2482
        %3020 = vmatprep.subr.bf16.mxu0 0
        %3021 = vmatpush1.bf16.msra.mxu0 0
        %3022 = vmatprep.subr.bf16.mxu0 0
        %3023 = vmatpush1.bf16.msra.mxu0 0
        %3024 = vmatprep.subr.bf16.mxu0 0
        %3025 = vmatpush1.bf16.msra.mxu0 0
        %3026 = vmatprep.subr.bf16.mxu0 0
        %3027 = vmatpush1.bf16.msra.mxu0 0
        %3028 = vmatprep.subr.bf16.mxu0 0
        %3029 = vmatpush1.bf16.msra.mxu0 0
        %3030 = vmatprep.subr.bf16.mxu0 0
        %3031 = vmatpush1.bf16.msra.mxu0 0
        %3032 = vmatprep.subr.bf16.mxu0 0
        %3033 = vmatpush1.bf16.msra.mxu0 0
        %3034 = vmatprep.subr.bf16.mxu0 0
        %3035 = vmatpush1.bf16.msra.mxu0 0
        %3036 = vmatprep.subr.bf16.mxu0 0
        %3037 = vmatpush1.bf16.msra.mxu0 0
        %3038 = vmatprep.subr.bf16.mxu0 0
        %3039 = vmatpush1.bf16.msra.mxu0 0
        %3040 = vmatprep.subr.bf16.mxu0 0
        %3041 = vmatpush1.bf16.msra.mxu0 0
        %3042 = vmatprep.subr.bf16.mxu0 0
        %3043 = vmatpush1.bf16.msra.mxu0 0
        %3044 = vmatprep.subr.bf16.mxu0 0
        %3045 = vmatpush1.bf16.msra.mxu0 0
        %3046 = vmatprep.subr.bf16.mxu0 0
        %3047 = vmatpush1.bf16.msra.mxu0 0
        %3048 = vmatprep.subr.bf16.mxu0 0
        %3049 = vmatpush1.bf16.msra.mxu0 0
        %3050 = vmatprep.mubr.bf16.mxu0 0
        %3051 = vmatmul.mubr.bf16.gmra.mrb[0].mxu0 %v1713
        %v3052 = vpop.f32.mrb[0].mxu0
        %v3053 = vadd.f32 0.0, %v3052
        %v3054 = vpop.f32.mrb[0].mxu0
        %v3055 = vpop.f32.mrb[0].mxu0
        %v3056 = vadd.f32 0.0, %v3055
        %v3057 = vpop.f32.mrb[0].mxu0
        %3058 = vdwg.mxu0
        %3059 = vmatprep.subr.bf16.mxu0 0
        %3060 = vmatpush1.bf16.msra.mxu0 %v2483
        %3061 = vmatprep.subr.bf16.mxu0 0
        %3062 = vmatpush1.bf16.msra.mxu0 0
        %3063 = vmatprep.subr.bf16.mxu0 0
        %3064 = vmatpush1.bf16.msra.mxu0 0
        %3065 = vmatprep.subr.bf16.mxu0 0
        %3066 = vmatpush1.bf16.msra.mxu0 0
        %3067 = vmatprep.subr.bf16.mxu0 0
        %3068 = vmatpush1.bf16.msra.mxu0 0
        %3069 = vmatprep.subr.bf16.mxu0 0
        %3070 = vmatpush1.bf16.msra.mxu0 0
        %3071 = vmatprep.subr.bf16.mxu0 0
        %3072 = vmatpush1.bf16.msra.mxu0 0
        %3073 = vmatprep.subr.bf16.mxu0 0
        %3074 = vmatpush1.bf16.msra.mxu0 0
        %3075 = vmatprep.subr.bf16.mxu0 0
        %3076 = vmatpush1.bf16.msra.mxu0 0
        %3077 = vmatprep.subr.bf16.mxu0 0
        %3078 = vmatpush1.bf16.msra.mxu0 0
        %3079 = vmatprep.subr.bf16.mxu0 0
        %3080 = vmatpush1.bf16.msra.mxu0 0
        %3081 = vmatprep.subr.bf16.mxu0 0
        %3082 = vmatpush1.bf16.msra.mxu0 0
        %3083 = vmatprep.subr.bf16.mxu0 0
        %3084 = vmatpush1.bf16.msra.mxu0 0
        %3085 = vmatprep.subr.bf16.mxu0 0
        %3086 = vmatpush1.bf16.msra.mxu0 0
        %3087 = vmatprep.subr.bf16.mxu0 0
        %3088 = vmatpush1.bf16.msra.mxu0 0
        %3089 = vmatprep.subr.bf16.mxu0 0
        %3090 = vmatpush1.bf16.msra.mxu0 0
        %3091 = vmatprep.mubr.bf16.mxu0 0
        %3092 = vmatmul.mubr.bf16.gmra.mrb[0].mxu0 %v1762
        %v3093 = vpop.f32.mrb[0].mxu0
        %v3094 = vadd.f32 0.0, %v3093
        %v3095 = vpop.f32.mrb[0].mxu0
        %v3096 = vpop.f32.mrb[0].mxu0
        %v3097 = vadd.f32 0.0, %v3096
        %v3098 = vpop.f32.mrb[0].mxu0
        %3099 = vdwg.mxu0
        %3100 = vmatprep.subr.bf16.mxu0 0
        %3101 = vmatpush1.bf16.msra.mxu0 %v2484
        %3102 = vmatprep.subr.bf16.mxu0 0
        %3103 = vmatpush1.bf16.msra.mxu0 0
        %3104 = vmatprep.subr.bf16.mxu0 0
        %3105 = vmatpush1.bf16.msra.mxu0 0
        %3106 = vmatprep.subr.bf16.mxu0 0
        %3107 = vmatpush1.bf16.msra.mxu0 0
        %3108 = vmatprep.subr.bf16.mxu0 0
        %3109 = vmatpush1.bf16.msra.mxu0 0
        %3110 = vmatprep.subr.bf16.mxu0 0
        %3111 = vmatpush1.bf16.msra.mxu0 0
        %3112 = vmatprep.subr.bf16.mxu0 0
        %3113 = vmatpush1.bf16.msra.mxu0 0
        %3114 = vmatprep.subr.bf16.mxu0 0
        %3115 = vmatpush1.bf16.msra.mxu0 0
        %3116 = vmatprep.subr.bf16.mxu0 0
        %3117 = vmatpush1.bf16.msra.mxu0 0
        %3118 = vmatprep.subr.bf16.mxu0 0
        %3119 = vmatpush1.bf16.msra.mxu0 0
        %3120 = vmatprep.subr.bf16.mxu0 0
        %3121 = vmatpush1.bf16.msra.mxu0 0
        %3122 = vmatprep.subr.bf16.mxu0 0
        %3123 = vmatpush1.bf16.msra.mxu0 0
        %3124 = vmatprep.subr.bf16.mxu0 0
        %3125 = vmatpush1.bf16.msra.mxu0 0
        %3126 = vmatprep.subr.bf16.mxu0 0
        %3127 = vmatpush1.bf16.msra.mxu0 0
        %3128 = vmatprep.subr.bf16.mxu0 0
        %3129 = vmatpush1.bf16.msra.mxu0 0
        %3130 = vmatprep.subr.bf16.mxu0 0
        %3131 = vmatpush1.bf16.msra.mxu0 0
        %3132 = vmatprep.mubr.bf16.mxu0 0
        %3133 = vmatmul.mubr.bf16.gmra.mrb[0].mxu0 %v1811
        %v3134 = vpop.f32.mrb[0].mxu0
        %v3135 = vadd.f32 0.0, %v3134
        %v3136 = vpop.f32.mrb[0].mxu0
        %v3137 = vpop.f32.mrb[0].mxu0
        %v3138 = vadd.f32 0.0, %v3137
        %v3139 = vpop.f32.mrb[0].mxu0
        %3140 = vdwg.mxu0
        %s3141 = scalar_lea.vmem %s6, 1
        %v3142 = vld [vmem:[%s3141] sm:$0x1]
        %v3144 = vlaneseq
        %v3145 = vshrl.u32 %v3144, 7
        %v3146 = vsub.s32 0, %v3145
        %v3147 = vrot.slane %v3142, %v3146
        %v3149 = vadd.f32 %v2520, %v3147
        %v3150 = vadd.f32 %v2523, %v3147
        %v3151 = vadd.f32 %v2561, %v3147
        %v3152 = vadd.f32 %v2564, %v3147
        %v3153 = vadd.f32 %v2602, %v3147
        %v3154 = vadd.f32 %v2605, %v3147
        %v3155 = vadd.f32 %v2643, %v3147
        %v3156 = vadd.f32 %v2646, %v3147
        %v3157 = vadd.f32 %v2684, %v3147
        %v3158 = vadd.f32 %v2687, %v3147
        %v3159 = vadd.f32 %v2725, %v3147
        %v3160 = vadd.f32 %v2728, %v3147
        %v3161 = vadd.f32 %v2766, %v3147
        %v3162 = vadd.f32 %v2769, %v3147
        %v3163 = vadd.f32 %v2807, %v3147
        %v3164 = vadd.f32 %v2810, %v3147
        %v3165 = vadd.f32 %v2848, %v3147
        %v3166 = vadd.f32 %v2851, %v3147
        %v3167 = vadd.f32 %v2889, %v3147
        %v3168 = vadd.f32 %v2892, %v3147
        %v3169 = vadd.f32 %v2930, %v3147
        %v3170 = vadd.f32 %v2933, %v3147
        %v3171 = vadd.f32 %v2971, %v3147
        %v3172 = vadd.f32 %v2974, %v3147
        %v3173 = vadd.f32 %v3012, %v3147
        %v3174 = vadd.f32 %v3015, %v3147
        %v3175 = vadd.f32 %v3053, %v3147
        %v3176 = vadd.f32 %v3056, %v3147
        %v3177 = vadd.f32 %v3094, %v3147
        %v3178 = vadd.f32 %v3097, %v3147
        %v3179 = vadd.f32 %v3135, %v3147
        %v3180 = vadd.f32 %v3138, %v3147
        %v3181 = vmul.f32 %v3149, %v1896
        %v3182 = vmul.f32 %v3150, %v1901
        %v3183 = vmul.f32 %v3151, %v1906
        %v3184 = vmul.f32 %v3152, %v1911
        %v3185 = vmul.f32 %v3153, %v1916
        %v3186 = vmul.f32 %v3154, %v1921
        %v3187 = vmul.f32 %v3155, %v1926
        %v3188 = vmul.f32 %v3156, %v1931
        %v3189 = vmul.f32 %v3157, %v1936
        %v3190 = vmul.f32 %v3158, %v1941
        %v3191 = vmul.f32 %v3159, %v1946
        %v3192 = vmul.f32 %v3160, %v1951
        %v3193 = vmul.f32 %v3161, %v1956
        %v3194 = vmul.f32 %v3162, %v1961
        %v3195 = vmul.f32 %v3163, %v1966
        %v3196 = vmul.f32 %v3164, %v1971
        %v3197 = vmul.f32 %v3165, %v1976
        %v3198 = vmul.f32 %v3166, %v1981
        %v3199 = vmul.f32 %v3167, %v1986
        %v3200 = vmul.f32 %v3168, %v1991
        %v3201 = vmul.f32 %v3169, %v1996
        %v3202 = vmul.f32 %v3170, %v2001
        %v3203 = vmul.f32 %v3171, %v2006
        %v3204 = vmul.f32 %v3172, %v2011
        %v3205 = vmul.f32 %v3173, %v2016
        %v3206 = vmul.f32 %v3174, %v2021
        %v3207 = vmul.f32 %v3175, %v2026
        %v3208 = vmul.f32 %v3176, %v2031
        %v3209 = vmul.f32 %v3177, %v2036
        %v3210 = vmul.f32 %v3178, %v2041
        %v3211 = vmul.f32 %v3179, %v2046
        %v3212 = vmul.f32 %v3180, %v2051
        %s3213 = scalar_lea.vmem %s7, 1
        %v3214 = vld [vmem:[%s3213] sm:$0x1]
        %v3216 = vlaneseq
        %v3217 = vshrl.u32 %v3216, 7
        %v3218 = vsub.s32 0, %v3217
        %v3219 = vrot.slane %v3214, %v3218
        %v3221 = vmul.f32 %v3181, %v3219
        %v3222 = vmul.f32 %v3182, %v3219
        %v3223 = vmul.f32 %v3183, %v3219
        %v3224 = vmul.f32 %v3184, %v3219
        %v3225 = vmul.f32 %v3185, %v3219
        %v3226 = vmul.f32 %v3186, %v3219
        %v3227 = vmul.f32 %v3187, %v3219
        %v3228 = vmul.f32 %v3188, %v3219
        %v3229 = vmul.f32 %v3189, %v3219
        %v3230 = vmul.f32 %v3190, %v3219
        %v3231 = vmul.f32 %v3191, %v3219
        %v3232 = vmul.f32 %v3192, %v3219
        %v3233 = vmul.f32 %v3193, %v3219
        %v3234 = vmul.f32 %v3194, %v3219
        %v3235 = vmul.f32 %v3195, %v3219
        %v3236 = vmul.f32 %v3196, %v3219
        %v3237 = vmul.f32 %v3197, %v3219
        %v3238 = vmul.f32 %v3198, %v3219
        %v3239 = vmul.f32 %v3199, %v3219
        %v3240 = vmul.f32 %v3200, %v3219
        %v3241 = vmul.f32 %v3201, %v3219
        %v3242 = vmul.f32 %v3202, %v3219
        %v3243 = vmul.f32 %v3203, %v3219
        %v3244 = vmul.f32 %v3204, %v3219
        %v3245 = vmul.f32 %v3205, %v3219
        %v3246 = vmul.f32 %v3206, %v3219
        %v3247 = vmul.f32 %v3207, %v3219
        %v3248 = vmul.f32 %v3208, %v3219
        %v3249 = vmul.f32 %v3209, %v3219
        %v3250 = vmul.f32 %v3210, %v3219
        %v3251 = vmul.f32 %v3211, %v3219
        %v3252 = vmul.f32 %v3212, %v3219
        %s3253 = scalar_lea.vmem %s8, 1
        %v3254 = vld [vmem:[%s3253] sm:$0x1]
        %v3256 = vlaneseq
        %v3257 = vshrl.u32 %v3256, 7
        %v3258 = vsub.s32 0, %v3257
        %v3259 = vrot.slane %v3254, %v3258
        %v3261 = vadd.f32 %v3221, %v3259
        %v3262 = vadd.f32 %v3222, %v3259
        %v3263 = vadd.f32 %v3223, %v3259
        %v3264 = vadd.f32 %v3224, %v3259
        %v3265 = vadd.f32 %v3225, %v3259
        %v3266 = vadd.f32 %v3226, %v3259
        %v3267 = vadd.f32 %v3227, %v3259
        %v3268 = vadd.f32 %v3228, %v3259
        %v3269 = vadd.f32 %v3229, %v3259
        %v3270 = vadd.f32 %v3230, %v3259
        %v3271 = vadd.f32 %v3231, %v3259
        %v3272 = vadd.f32 %v3232, %v3259
        %v3273 = vadd.f32 %v3233, %v3259
        %v3274 = vadd.f32 %v3234, %v3259
        %v3275 = vadd.f32 %v3235, %v3259
        %v3276 = vadd.f32 %v3236, %v3259
        %v3277 = vadd.f32 %v3237, %v3259
        %v3278 = vadd.f32 %v3238, %v3259
        %v3279 = vadd.f32 %v3239, %v3259
        %v3280 = vadd.f32 %v3240, %v3259
        %v3281 = vadd.f32 %v3241, %v3259
        %v3282 = vadd.f32 %v3242, %v3259
        %v3283 = vadd.f32 %v3243, %v3259
        %v3284 = vadd.f32 %v3244, %v3259
        %v3285 = vadd.f32 %v3245, %v3259
        %v3286 = vadd.f32 %v3246, %v3259
        %v3287 = vadd.f32 %v3247, %v3259
        %v3288 = vadd.f32 %v3248, %v3259
        %v3289 = vadd.f32 %v3249, %v3259
        %v3290 = vadd.f32 %v3250, %v3259
        %v3291 = vadd.f32 %v3251, %v3259
        %v3292 = vadd.f32 %v3252, %v3259
        %v3293 = vmax.f32 %v3261, 0.0
        %v3294 = vmax.f32 %v3262, 0.0
        %v3295 = vmax.f32 %v3263, 0.0
        %v3296 = vmax.f32 %v3264, 0.0
        %v3297 = vmax.f32 %v3265, 0.0
        %v3298 = vmax.f32 %v3266, 0.0
        %v3299 = vmax.f32 %v3267, 0.0
        %v3300 = vmax.f32 %v3268, 0.0
        %v3301 = vmax.f32 %v3269, 0.0
        %v3302 = vmax.f32 %v3270, 0.0
        %v3303 = vmax.f32 %v3271, 0.0
        %v3304 = vmax.f32 %v3272, 0.0
        %v3305 = vmax.f32 %v3273, 0.0
        %v3306 = vmax.f32 %v3274, 0.0
        %v3307 = vmax.f32 %v3275, 0.0
        %v3308 = vmax.f32 %v3276, 0.0
        %v3309 = vmax.f32 %v3277, 0.0
        %v3310 = vmax.f32 %v3278, 0.0
        %v3311 = vmax.f32 %v3279, 0.0
        %v3312 = vmax.f32 %v3280, 0.0
        %v3313 = vmax.f32 %v3281, 0.0
        %v3314 = vmax.f32 %v3282, 0.0
        %v3315 = vmax.f32 %v3283, 0.0
        %v3316 = vmax.f32 %v3284, 0.0
        %v3317 = vmax.f32 %v3285, 0.0
        %v3318 = vmax.f32 %v3286, 0.0
        %v3319 = vmax.f32 %v3287, 0.0
        %v3320 = vmax.f32 %v3288, 0.0
        %v3321 = vmax.f32 %v3289, 0.0
        %v3322 = vmax.f32 %v3290, 0.0
        %v3323 = vmax.f32 %v3291, 0.0
        %v3324 = vmax.f32 %v3292, 0.0
        %v3325 = vadd.f32 %v2195, %v3293
        %v3326 = vadd.f32 %v2196, %v3294
        %v3327 = vadd.f32 %v2197, %v3295
        %v3328 = vadd.f32 %v2198, %v3296
        %v3329 = vadd.f32 %v2199, %v3297
        %v3330 = vadd.f32 %v2200, %v3298
        %v3331 = vadd.f32 %v2201, %v3299
        %v3332 = vadd.f32 %v2202, %v3300
        %v3333 = vadd.f32 %v2203, %v3301
        %v3334 = vadd.f32 %v2204, %v3302
        %v3335 = vadd.f32 %v2205, %v3303
        %v3336 = vadd.f32 %v2206, %v3304
        %v3337 = vadd.f32 %v2207, %v3305
        %v3338 = vadd.f32 %v2208, %v3306
        %v3339 = vadd.f32 %v2209, %v3307
        %v3340 = vadd.f32 %v2210, %v3308
        %v3341 = vadd.f32 %v2211, %v3309
        %v3342 = vadd.f32 %v2212, %v3310
        %v3343 = vadd.f32 %v2213, %v3311
        %v3344 = vadd.f32 %v2214, %v3312
        %v3345 = vadd.f32 %v2215, %v3313
        %v3346 = vadd.f32 %v2216, %v3314
        %v3347 = vadd.f32 %v2217, %v3315
        %v3348 = vadd.f32 %v2218, %v3316
        %v3349 = vadd.f32 %v2219, %v3317
        %v3350 = vadd.f32 %v2220, %v3318
        %v3351 = vadd.f32 %v2221, %v3319
        %v3352 = vadd.f32 %v2222, %v3320
        %v3353 = vadd.f32 %v2223, %v3321
        %v3354 = vadd.f32 %v2224, %v3322
        %v3355 = vadd.f32 %v2225, %v3323
        %v3356 = vadd.f32 %v2226, %v3324
        %v3357 = vpack.c.bf16 %v3326, %v3325
        %v3358 = vpack.c.bf16 %v3328, %v3327
        %v3359 = vpack.c.bf16 %v3330, %v3329
        %v3360 = vpack.c.bf16 %v3332, %v3331
        %v3361 = vpack.c.bf16 %v3334, %v3333
        %v3362 = vpack.c.bf16 %v3336, %v3335
        %v3363 = vpack.c.bf16 %v3338, %v3337
        %v3364 = vpack.c.bf16 %v3340, %v3339
        %v3365 = vpack.c.bf16 %v3342, %v3341
        %v3366 = vpack.c.bf16 %v3344, %v3343
        %v3367 = vpack.c.bf16 %v3346, %v3345
        %v3368 = vpack.c.bf16 %v3348, %v3347
        %v3369 = vpack.c.bf16 %v3350, %v3349
        %v3370 = vpack.c.bf16 %v3352, %v3351
        %v3371 = vpack.c.bf16 %v3354, %v3353
        %v3372 = vpack.c.bf16 %v3356, %v3355
        %s3373 = scalar_lea.vmem %s5, 128
        %v3374 = vld [vmem:[%s3373] sm:$0xf]
        %v3375 = vld [vmem:[%s3373 + $0x4] sm:$0xf]
        %v3376 = vld [vmem:[%s3373 + $0x8] sm:$0xf]
        %v3377 = vld [vmem:[%s3373 + $0xc] sm:$0xf]
        %v3378 = vld [vmem:[%s3373 + $0x10] sm:$0xf]
        %v3379 = vld [vmem:[%s3373 + $0x14] sm:$0xf]
        %v3380 = vld [vmem:[%s3373 + $0x18] sm:$0xf]
        %v3381 = vld [vmem:[%s3373 + $0x1c] sm:$0xf]
        %v3382 = vld [vmem:[%s3373 + $0x20] sm:$0xf]
        %v3383 = vld [vmem:[%s3373 + $0x24] sm:$0xf]
        %v3384 = vld [vmem:[%s3373 + $0x28] sm:$0xf]
        %v3385 = vld [vmem:[%s3373 + $0x2c] sm:$0xf]
        %v3386 = vld [vmem:[%s3373 + $0x30] sm:$0xf]
        %v3387 = vld [vmem:[%s3373 + $0x34] sm:$0xf]
        %v3388 = vld [vmem:[%s3373 + $0x38] sm:$0xf]
        %v3389 = vld [vmem:[%s3373 + $0x3c] sm:$0xf]
        %v3406 = vunpack.c.l.b16 %v3374
        %v3407 = vunpack.c.l.b16 %v3375
        %v3408 = vunpack.c.l.b16 %v3376
        %v3409 = vunpack.c.l.b16 %v3377
        %v3410 = vunpack.c.l.b16 %v3378
        %v3411 = vunpack.c.l.b16 %v3379
        %v3412 = vunpack.c.l.b16 %v3380
        %v3413 = vunpack.c.l.b16 %v3381
        %v3414 = vunpack.c.l.b16 %v3382
        %v3415 = vunpack.c.l.b16 %v3383
        %v3416 = vunpack.c.l.b16 %v3384
        %v3417 = vunpack.c.l.b16 %v3385
        %v3418 = vunpack.c.l.b16 %v3386
        %v3419 = vunpack.c.l.b16 %v3387
        %v3420 = vunpack.c.l.b16 %v3388
        %v3421 = vunpack.c.l.b16 %v3389
        %v3422 = vpack.c.b16 %v3407, %v3406
        %v3423 = vpack.c.b16 %v3409, %v3408
        %v3424 = vpack.c.b16 %v3411, %v3410
        %v3425 = vpack.c.b16 %v3413, %v3412
        %v3426 = vpack.c.b16 %v3415, %v3414
        %v3427 = vpack.c.b16 %v3417, %v3416
        %v3428 = vpack.c.b16 %v3419, %v3418
        %v3429 = vpack.c.b16 %v3421, %v3420
        %3438 = vmatprep.subr.bf16.mxu0 0
        %3439 = vmatpush1.bf16.msra.mxu0 %v3422
        %3440 = vmatprep.subr.bf16.mxu0 0
        %3441 = vmatpush1.bf16.msra.mxu0 %v3423
        %3442 = vmatprep.subr.bf16.mxu0 0
        %3443 = vmatpush1.bf16.msra.mxu0 %v3424
        %3444 = vmatprep.subr.bf16.mxu0 0
        %3445 = vmatpush1.bf16.msra.mxu0 %v3425
        %3446 = vmatprep.subr.bf16.mxu0 0
        %3447 = vmatpush1.bf16.msra.mxu0 %v3426
        %3448 = vmatprep.subr.bf16.mxu0 0
        %3449 = vmatpush1.bf16.msra.mxu0 %v3427
        %3450 = vmatprep.subr.bf16.mxu0 0
        %3451 = vmatpush1.bf16.msra.mxu0 %v3428
        %3452 = vmatprep.subr.bf16.mxu0 0
        %3453 = vmatpush1.bf16.msra.mxu0 %v3429
        %3454 = vmatprep.subr.bf16.mxu0 0
        %3455 = vmatpush1.bf16.msra.mxu0 0
        %3456 = vmatprep.subr.bf16.mxu0 0
        %3457 = vmatpush1.bf16.msra.mxu0 0
        %3458 = vmatprep.subr.bf16.mxu0 0
        %3459 = vmatpush1.bf16.msra.mxu0 0
        %3460 = vmatprep.subr.bf16.mxu0 0
        %3461 = vmatpush1.bf16.msra.mxu0 0
        %3462 = vmatprep.subr.bf16.mxu0 0
        %3463 = vmatpush1.bf16.msra.mxu0 0
        %3464 = vmatprep.subr.bf16.mxu0 0
        %3465 = vmatpush1.bf16.msra.mxu0 0
        %3466 = vmatprep.subr.bf16.mxu0 0
        %3467 = vmatpush1.bf16.msra.mxu0 0
        %3468 = vmatprep.subr.bf16.mxu0 0
        %3469 = vmatpush1.bf16.msra.mxu0 0
        %3470 = vmatprep.mubr.bf16.mxu0 0
        %3471 = vmatmul.mubr.bf16.gmra.mrb[0].mxu0 %v3357
        %v3472 = vpop.f32.mrb[0].mxu0
        %v3473 = vadd.f32 0.0, %v3472
        %v3474 = vpop.f32.mrb[0].mxu0
        %v3475 = vpop.f32.mrb[0].mxu0
        %v3476 = vadd.f32 0.0, %v3475
        %v3477 = vpop.f32.mrb[0].mxu0
        %3478 = vmatprep.mubr.bf16.mxu0 0
        %3479 = vmatmul.mubr.bf16.gmra.mrb[0].mxu0 %v3358
        %v3480 = vpop.f32.mrb[0].mxu0
        %v3481 = vadd.f32 0.0, %v3480
        %v3482 = vpop.f32.mrb[0].mxu0
        %v3483 = vpop.f32.mrb[0].mxu0
        %v3484 = vadd.f32 0.0, %v3483
        %v3485 = vpop.f32.mrb[0].mxu0
        %3486 = vmatprep.mubr.bf16.mxu0 0
        %3487 = vmatmul.mubr.bf16.gmra.mrb[0].mxu0 %v3359
        %v3488 = vpop.f32.mrb[0].mxu0
        %v3489 = vadd.f32 0.0, %v3488
        %v3490 = vpop.f32.mrb[0].mxu0
        %v3491 = vpop.f32.mrb[0].mxu0
        %v3492 = vadd.f32 0.0, %v3491
        %v3493 = vpop.f32.mrb[0].mxu0
        %3494 = vmatprep.mubr.bf16.mxu0 0
        %3495 = vmatmul.mubr.bf16.gmra.mrb[0].mxu0 %v3360
        %v3496 = vpop.f32.mrb[0].mxu0
        %v3497 = vadd.f32 0.0, %v3496
        %v3498 = vpop.f32.mrb[0].mxu0
        %v3499 = vpop.f32.mrb[0].mxu0
        %v3500 = vadd.f32 0.0, %v3499
        %v3501 = vpop.f32.mrb[0].mxu0
        %3502 = vmatprep.mubr.bf16.mxu0 0
        %3503 = vmatmul.mubr.bf16.gmra.mrb[0].mxu0 %v3361
        %v3504 = vpop.f32.mrb[0].mxu0
        %v3505 = vadd.f32 0.0, %v3504
        %v3506 = vpop.f32.mrb[0].mxu0
        %v3507 = vpop.f32.mrb[0].mxu0
        %v3508 = vadd.f32 0.0, %v3507
        %v3509 = vpop.f32.mrb[0].mxu0
        %3510 = vmatprep.mubr.bf16.mxu0 0
        %3511 = vmatmul.mubr.bf16.gmra.mrb[0].mxu0 %v3362
        %v3512 = vpop.f32.mrb[0].mxu0
        %v3513 = vadd.f32 0.0, %v3512
        %v3514 = vpop.f32.mrb[0].mxu0
        %v3515 = vpop.f32.mrb[0].mxu0
        %v3516 = vadd.f32 0.0, %v3515
        %v3517 = vpop.f32.mrb[0].mxu0
        %3518 = vmatprep.mubr.bf16.mxu0 0
        %3519 = vmatmul.mubr.bf16.gmra.mrb[0].mxu0 %v3363
        %v3520 = vpop.f32.mrb[0].mxu0
        %v3521 = vadd.f32 0.0, %v3520
        %v3522 = vpop.f32.mrb[0].mxu0
        %v3523 = vpop.f32.mrb[0].mxu0
        %v3524 = vadd.f32 0.0, %v3523
        %v3525 = vpop.f32.mrb[0].mxu0
        %3526 = vmatprep.mubr.bf16.mxu0 0
        %3527 = vmatmul.mubr.bf16.gmra.mrb[0].mxu0 %v3364
        %v3528 = vpop.f32.mrb[0].mxu0
        %v3529 = vadd.f32 0.0, %v3528
        %v3530 = vpop.f32.mrb[0].mxu0
        %v3531 = vpop.f32.mrb[0].mxu0
        %v3532 = vadd.f32 0.0, %v3531
        %v3533 = vpop.f32.mrb[0].mxu0
        %3534 = vmatprep.mubr.bf16.mxu0 0
        %3535 = vmatmul.mubr.bf16.gmra.mrb[0].mxu0 %v3365
        %v3536 = vpop.f32.mrb[0].mxu0
        %v3537 = vadd.f32 0.0, %v3536
        %v3538 = vpop.f32.mrb[0].mxu0
        %v3539 = vpop.f32.mrb[0].mxu0
        %v3540 = vadd.f32 0.0, %v3539
        %v3541 = vpop.f32.mrb[0].mxu0
        %3542 = vmatprep.mubr.bf16.mxu0 0
        %3543 = vmatmul.mubr.bf16.gmra.mrb[0].mxu0 %v3366
        %v3544 = vpop.f32.mrb[0].mxu0
        %v3545 = vadd.f32 0.0, %v3544
        %v3546 = vpop.f32.mrb[0].mxu0
        %v3547 = vpop.f32.mrb[0].mxu0
        %v3548 = vadd.f32 0.0, %v3547
        %v3549 = vpop.f32.mrb[0].mxu0
        %3550 = vmatprep.mubr.bf16.mxu0 0
        %3551 = vmatmul.mubr.bf16.gmra.mrb[0].mxu0 %v3367
        %v3552 = vpop.f32.mrb[0].mxu0
        %v3553 = vadd.f32 0.0, %v3552
        %v3554 = vpop.f32.mrb[0].mxu0
        %v3555 = vpop.f32.mrb[0].mxu0
        %v3556 = vadd.f32 0.0, %v3555
        %v3557 = vpop.f32.mrb[0].mxu0
        %3558 = vmatprep.mubr.bf16.mxu0 0
        %3559 = vmatmul.mubr.bf16.gmra.mrb[0].mxu0 %v3368
        %v3560 = vpop.f32.mrb[0].mxu0
        %v3561 = vadd.f32 0.0, %v3560
        %v3562 = vpop.f32.mrb[0].mxu0
        %v3563 = vpop.f32.mrb[0].mxu0
        %v3564 = vadd.f32 0.0, %v3563
        %v3565 = vpop.f32.mrb[0].mxu0
        %3566 = vmatprep.mubr.bf16.mxu0 0
        %3567 = vmatmul.mubr.bf16.gmra.mrb[0].mxu0 %v3369
        %v3568 = vpop.f32.mrb[0].mxu0
        %v3569 = vadd.f32 0.0, %v3568
        %v3570 = vpop.f32.mrb[0].mxu0
        %v3571 = vpop.f32.mrb[0].mxu0
        %v3572 = vadd.f32 0.0, %v3571
        %v3573 = vpop.f32.mrb[0].mxu0
        %3574 = vmatprep.mubr.bf16.mxu0 0
        %3575 = vmatmul.mubr.bf16.gmra.mrb[0].mxu0 %v3370
        %v3576 = vpop.f32.mrb[0].mxu0
        %v3577 = vadd.f32 0.0, %v3576
        %v3578 = vpop.f32.mrb[0].mxu0
        %v3579 = vpop.f32.mrb[0].mxu0
        %v3580 = vadd.f32 0.0, %v3579
        %v3581 = vpop.f32.mrb[0].mxu0
        %3582 = vmatprep.mubr.bf16.mxu0 0
        %3583 = vmatmul.mubr.bf16.gmra.mrb[0].mxu0 %v3371
        %v3584 = vpop.f32.mrb[0].mxu0
        %v3585 = vadd.f32 0.0, %v3584
        %v3586 = vpop.f32.mrb[0].mxu0
        %v3587 = vpop.f32.mrb[0].mxu0
        %v3588 = vadd.f32 0.0, %v3587
        %v3589 = vpop.f32.mrb[0].mxu0
        %3590 = vmatprep.mubr.bf16.mxu0 0
        %3591 = vmatmul.mubr.bf16.gmra.mrb[0].mxu0 %v3372
        %v3592 = vpop.f32.mrb[0].mxu0
        %v3593 = vadd.f32 0.0, %v3592
        %v3594 = vpop.f32.mrb[0].mxu0
        %v3595 = vpop.f32.mrb[0].mxu0
        %v3596 = vadd.f32 0.0, %v3595
        %v3597 = vpop.f32.mrb[0].mxu0
        %3598 = vdwg.mxu0
        %v3599 = vpack.c.bf16 %v3476, %v3473
        %v3600 = vpack.c.bf16 %v3484, %v3481
        %v3601 = vpack.c.bf16 %v3492, %v3489
        %v3602 = vpack.c.bf16 %v3500, %v3497
        %v3603 = vpack.c.bf16 %v3508, %v3505
        %v3604 = vpack.c.bf16 %v3516, %v3513
        %v3605 = vpack.c.bf16 %v3524, %v3521
        %v3606 = vpack.c.bf16 %v3532, %v3529
        %v3607 = vpack.c.bf16 %v3540, %v3537
        %v3608 = vpack.c.bf16 %v3548, %v3545
        %v3609 = vpack.c.bf16 %v3556, %v3553
        %v3610 = vpack.c.bf16 %v3564, %v3561
        %v3611 = vpack.c.bf16 %v3572, %v3569
        %v3612 = vpack.c.bf16 %v3580, %v3577
        %v3613 = vpack.c.bf16 %v3588, %v3585
        %v3614 = vpack.c.bf16 %v3596, %v3593
        %3615 = vmatprep.subr.bf16.mxu0 0
        %3616 = vmatpush1.bf16.msra.mxu0 %v3599
        %3617 = vmatprep.subr.bf16.mxu0 0
        %3618 = vmatpush1.bf16.msra.mxu0 0
        %3619 = vmatprep.subr.bf16.mxu0 0
        %3620 = vmatpush1.bf16.msra.mxu0 0
        %3621 = vmatprep.subr.bf16.mxu0 0
        %3622 = vmatpush1.bf16.msra.mxu0 0
        %3623 = vmatprep.subr.bf16.mxu0 0
        %3624 = vmatpush1.bf16.msra.mxu0 0
        %3625 = vmatprep.subr.bf16.mxu0 0
        %3626 = vmatpush1.bf16.msra.mxu0 0
        %3627 = vmatprep.subr.bf16.mxu0 0
        %3628 = vmatpush1.bf16.msra.mxu0 0
        %3629 = vmatprep.subr.bf16.mxu0 0
        %3630 = vmatpush1.bf16.msra.mxu0 0
        %3631 = vmatprep.subr.bf16.mxu0 0
        %3632 = vmatpush1.bf16.msra.mxu0 0
        %3633 = vmatprep.subr.bf16.mxu0 0
        %3634 = vmatpush1.bf16.msra.mxu0 0
        %3635 = vmatprep.subr.bf16.mxu0 0
        %3636 = vmatpush1.bf16.msra.mxu0 0
        %3637 = vmatprep.subr.bf16.mxu0 0
        %3638 = vmatpush1.bf16.msra.mxu0 0
        %3639 = vmatprep.subr.bf16.mxu0 0
        %3640 = vmatpush1.bf16.msra.mxu0 0
        %3641 = vmatprep.subr.bf16.mxu0 0
        %3642 = vmatpush1.bf16.msra.mxu0 0
        %3643 = vmatprep.subr.bf16.mxu0 0
        %3644 = vmatpush1.bf16.msra.mxu0 0
        %3645 = vmatprep.subr.bf16.mxu0 0
        %3646 = vmatpush1.bf16.msra.mxu0 0
        %3647 = vmatprep.mubr.bf16.mxu0 0
        %3648 = vmatmul.mubr.bf16.gmra.mrb[0].mxu0 %v1076
        %v3649 = vpop.f32.mrb[0].mxu0
        %v3650 = vadd.f32 0.0, %v3649
        %v3651 = vpop.f32.mrb[0].mxu0
        %v3652 = vpop.f32.mrb[0].mxu0
        %v3653 = vadd.f32 0.0, %v3652
        %v3654 = vpop.f32.mrb[0].mxu0
        %3655 = vdwg.mxu0
        %3656 = vmatprep.subr.bf16.mxu0 0
        %3657 = vmatpush1.bf16.msra.mxu0 %v3600
        %3658 = vmatprep.subr.bf16.mxu0 0
        %3659 = vmatpush1.bf16.msra.mxu0 0
        %3660 = vmatprep.subr.bf16.mxu0 0
        %3661 = vmatpush1.bf16.msra.mxu0 0
        %3662 = vmatprep.subr.bf16.mxu0 0
        %3663 = vmatpush1.bf16.msra.mxu0 0
        %3664 = vmatprep.subr.bf16.mxu0 0
        %3665 = vmatpush1.bf16.msra.mxu0 0
        %3666 = vmatprep.subr.bf16.mxu0 0
        %3667 = vmatpush1.bf16.msra.mxu0 0
        %3668 = vmatprep.subr.bf16.mxu0 0
        %3669 = vmatpush1.bf16.msra.mxu0 0
        %3670 = vmatprep.subr.bf16.mxu0 0
        %3671 = vmatpush1.bf16.msra.mxu0 0
        %3672 = vmatprep.subr.bf16.mxu0 0
        %3673 = vmatpush1.bf16.msra.mxu0 0
        %3674 = vmatprep.subr.bf16.mxu0 0
        %3675 = vmatpush1.bf16.msra.mxu0 0
        %3676 = vmatprep.subr.bf16.mxu0 0
        %3677 = vmatpush1.bf16.msra.mxu0 0
        %3678 = vmatprep.subr.bf16.mxu0 0
        %3679 = vmatpush1.bf16.msra.mxu0 0
        %3680 = vmatprep.subr.bf16.mxu0 0
        %3681 = vmatpush1.bf16.msra.mxu0 0
        %3682 = vmatprep.subr.bf16.mxu0 0
        %3683 = vmatpush1.bf16.msra.mxu0 0
        %3684 = vmatprep.subr.bf16.mxu0 0
        %3685 = vmatpush1.bf16.msra.mxu0 0
        %3686 = vmatprep.subr.bf16.mxu0 0
        %3687 = vmatpush1.bf16.msra.mxu0 0
        %3688 = vmatprep.mubr.bf16.mxu0 0
        %3689 = vmatmul.mubr.bf16.gmra.mrb[0].mxu0 %v1125
        %v3690 = vpop.f32.mrb[0].mxu0
        %v3691 = vadd.f32 0.0, %v3690
        %v3692 = vpop.f32.mrb[0].mxu0
        %v3693 = vpop.f32.mrb[0].mxu0
        %v3694 = vadd.f32 0.0, %v3693
        %v3695 = vpop.f32.mrb[0].mxu0
        %3696 = vdwg.mxu0
        %3697 = vmatprep.subr.bf16.mxu0 0
        %3698 = vmatpush1.bf16.msra.mxu0 %v3601
        %3699 = vmatprep.subr.bf16.mxu0 0
        %3700 = vmatpush1.bf16.msra.mxu0 0
        %3701 = vmatprep.subr.bf16.mxu0 0
        %3702 = vmatpush1.bf16.msra.mxu0 0
        %3703 = vmatprep.subr.bf16.mxu0 0
        %3704 = vmatpush1.bf16.msra.mxu0 0
        %3705 = vmatprep.subr.bf16.mxu0 0
        %3706 = vmatpush1.bf16.msra.mxu0 0
        %3707 = vmatprep.subr.bf16.mxu0 0
        %3708 = vmatpush1.bf16.msra.mxu0 0
        %3709 = vmatprep.subr.bf16.mxu0 0
        %3710 = vmatpush1.bf16.msra.mxu0 0
        %3711 = vmatprep.subr.bf16.mxu0 0
        %3712 = vmatpush1.bf16.msra.mxu0 0
        %3713 = vmatprep.subr.bf16.mxu0 0
        %3714 = vmatpush1.bf16.msra.mxu0 0
        %3715 = vmatprep.subr.bf16.mxu0 0
        %3716 = vmatpush1.bf16.msra.mxu0 0
        %3717 = vmatprep.subr.bf16.mxu0 0
        %3718 = vmatpush1.bf16.msra.mxu0 0
        %3719 = vmatprep.subr.bf16.mxu0 0
        %3720 = vmatpush1.bf16.msra.mxu0 0
        %3721 = vmatprep.subr.bf16.mxu0 0
        %3722 = vmatpush1.bf16.msra.mxu0 0
        %3723 = vmatprep.subr.bf16.mxu0 0
        %3724 = vmatpush1.bf16.msra.mxu0 0
        %3725 = vmatprep.subr.bf16.mxu0 0
        %3726 = vmatpush1.bf16.msra.mxu0 0
        %3727 = vmatprep.subr.bf16.mxu0 0
        %3728 = vmatpush1.bf16.msra.mxu0 0
        %3729 = vmatprep.mubr.bf16.mxu0 0
        %3730 = vmatmul.mubr.bf16.gmra.mrb[0].mxu0 %v1174
        %v3731 = vpop.f32.mrb[0].mxu0
        %v3732 = vadd.f32 0.0, %v3731
        %v3733 = vpop.f32.mrb[0].mxu0
        %v3734 = vpop.f32.mrb[0].mxu0
        %v3735 = vadd.f32 0.0, %v3734
        %v3736 = vpop.f32.mrb[0].mxu0
        %3737 = vdwg.mxu0
        %3738 = vmatprep.subr.bf16.mxu0 0
        %3739 = vmatpush1.bf16.msra.mxu0 %v3602
        %3740 = vmatprep.subr.bf16.mxu0 0
        %3741 = vmatpush1.bf16.msra.mxu0 0
        %3742 = vmatprep.subr.bf16.mxu0 0
        %3743 = vmatpush1.bf16.msra.mxu0 0
        %3744 = vmatprep.subr.bf16.mxu0 0
        %3745 = vmatpush1.bf16.msra.mxu0 0
        %3746 = vmatprep.subr.bf16.mxu0 0
        %3747 = vmatpush1.bf16.msra.mxu0 0
        %3748 = vmatprep.subr.bf16.mxu0 0
        %3749 = vmatpush1.bf16.msra.mxu0 0
        %3750 = vmatprep.subr.bf16.mxu0 0
        %3751 = vmatpush1.bf16.msra.mxu0 0
        %3752 = vmatprep.subr.bf16.mxu0 0
        %3753 = vmatpush1.bf16.msra.mxu0 0
        %3754 = vmatprep.subr.bf16.mxu0 0
        %3755 = vmatpush1.bf16.msra.mxu0 0
        %3756 = vmatprep.subr.bf16.mxu0 0
        %3757 = vmatpush1.bf16.msra.mxu0 0
        %3758 = vmatprep.subr.bf16.mxu0 0
        %3759 = vmatpush1.bf16.msra.mxu0 0
        %3760 = vmatprep.subr.bf16.mxu0 0
        %3761 = vmatpush1.bf16.msra.mxu0 0
        %3762 = vmatprep.subr.bf16.mxu0 0
        %3763 = vmatpush1.bf16.msra.mxu0 0
        %3764 = vmatprep.subr.bf16.mxu0 0
        %3765 = vmatpush1.bf16.msra.mxu0 0
        %3766 = vmatprep.subr.bf16.mxu0 0
        %3767 = vmatpush1.bf16.msra.mxu0 0
        %3768 = vmatprep.subr.bf16.mxu0 0
        %3769 = vmatpush1.bf16.msra.mxu0 0
        %3770 = vmatprep.mubr.bf16.mxu0 0
        %3771 = vmatmul.mubr.bf16.gmra.mrb[0].mxu0 %v1223
        %v3772 = vpop.f32.mrb[0].mxu0
        %v3773 = vadd.f32 0.0, %v3772
        %v3774 = vpop.f32.mrb[0].mxu0
        %v3775 = vpop.f32.mrb[0].mxu0
        %v3776 = vadd.f32 0.0, %v3775
        %v3777 = vpop.f32.mrb[0].mxu0
        %3778 = vdwg.mxu0
        %3779 = vmatprep.subr.bf16.mxu0 0
        %3780 = vmatpush1.bf16.msra.mxu0 %v3603
        %3781 = vmatprep.subr.bf16.mxu0 0
        %3782 = vmatpush1.bf16.msra.mxu0 0
        %3783 = vmatprep.subr.bf16.mxu0 0
        %3784 = vmatpush1.bf16.msra.mxu0 0
        %3785 = vmatprep.subr.bf16.mxu0 0
        %3786 = vmatpush1.bf16.msra.mxu0 0
        %3787 = vmatprep.subr.bf16.mxu0 0
        %3788 = vmatpush1.bf16.msra.mxu0 0
        %3789 = vmatprep.subr.bf16.mxu0 0
        %3790 = vmatpush1.bf16.msra.mxu0 0
        %3791 = vmatprep.subr.bf16.mxu0 0
        %3792 = vmatpush1.bf16.msra.mxu0 0
        %3793 = vmatprep.subr.bf16.mxu0 0
        %3794 = vmatpush1.bf16.msra.mxu0 0
        %3795 = vmatprep.subr.bf16.mxu0 0
        %3796 = vmatpush1.bf16.msra.mxu0 0
        %3797 = vmatprep.subr.bf16.mxu0 0
        %3798 = vmatpush1.bf16.msra.mxu0 0
        %3799 = vmatprep.subr.bf16.mxu0 0
        %3800 = vmatpush1.bf16.msra.mxu0 0
        %3801 = vmatprep.subr.bf16.mxu0 0
        %3802 = vmatpush1.bf16.msra.mxu0 0
        %3803 = vmatprep.subr.bf16.mxu0 0
        %3804 = vmatpush1.bf16.msra.mxu0 0
        %3805 = vmatprep.subr.bf16.mxu0 0
        %3806 = vmatpush1.bf16.msra.mxu0 0
        %3807 = vmatprep.subr.bf16.mxu0 0
        %3808 = vmatpush1.bf16.msra.mxu0 0
        %3809 = vmatprep.subr.bf16.mxu0 0
        %3810 = vmatpush1.bf16.msra.mxu0 0
        %3811 = vmatprep.mubr.bf16.mxu0 0
        %3812 = vmatmul.mubr.bf16.gmra.mrb[0].mxu0 %v1272
        %v3813 = vpop.f32.mrb[0].mxu0
        %v3814 = vadd.f32 0.0, %v3813
        %v3815 = vpop.f32.mrb[0].mxu0
        %v3816 = vpop.f32.mrb[0].mxu0
        %v3817 = vadd.f32 0.0, %v3816
        %v3818 = vpop.f32.mrb[0].mxu0
        %3819 = vdwg.mxu0
        %3820 = vmatprep.subr.bf16.mxu0 0
        %3821 = vmatpush1.bf16.msra.mxu0 %v3604
        %3822 = vmatprep.subr.bf16.mxu0 0
        %3823 = vmatpush1.bf16.msra.mxu0 0
        %3824 = vmatprep.subr.bf16.mxu0 0
        %3825 = vmatpush1.bf16.msra.mxu0 0
        %3826 = vmatprep.subr.bf16.mxu0 0
        %3827 = vmatpush1.bf16.msra.mxu0 0
        %3828 = vmatprep.subr.bf16.mxu0 0
        %3829 = vmatpush1.bf16.msra.mxu0 0
        %3830 = vmatprep.subr.bf16.mxu0 0
        %3831 = vmatpush1.bf16.msra.mxu0 0
        %3832 = vmatprep.subr.bf16.mxu0 0
        %3833 = vmatpush1.bf16.msra.mxu0 0
        %3834 = vmatprep.subr.bf16.mxu0 0
        %3835 = vmatpush1.bf16.msra.mxu0 0
        %3836 = vmatprep.subr.bf16.mxu0 0
        %3837 = vmatpush1.bf16.msra.mxu0 0
        %3838 = vmatprep.subr.bf16.mxu0 0
        %3839 = vmatpush1.bf16.msra.mxu0 0
        %3840 = vmatprep.subr.bf16.mxu0 0
        %3841 = vmatpush1.bf16.msra.mxu0 0
        %3842 = vmatprep.subr.bf16.mxu0 0
        %3843 = vmatpush1.bf16.msra.mxu0 0
        %3844 = vmatprep.subr.bf16.mxu0 0
        %3845 = vmatpush1.bf16.msra.mxu0 0
        %3846 = vmatprep.subr.bf16.mxu0 0
        %3847 = vmatpush1.bf16.msra.mxu0 0
        %3848 = vmatprep.subr.bf16.mxu0 0
        %3849 = vmatpush1.bf16.msra.mxu0 0
        %3850 = vmatprep.subr.bf16.mxu0 0
        %3851 = vmatpush1.bf16.msra.mxu0 0
        %3852 = vmatprep.mubr.bf16.mxu0 0
        %3853 = vmatmul.mubr.bf16.gmra.mrb[0].mxu0 %v1321
        %v3854 = vpop.f32.mrb[0].mxu0
        %v3855 = vadd.f32 0.0, %v3854
        %v3856 = vpop.f32.mrb[0].mxu0
        %v3857 = vpop.f32.mrb[0].mxu0
        %v3858 = vadd.f32 0.0, %v3857
        %v3859 = vpop.f32.mrb[0].mxu0
        %3860 = vdwg.mxu0
        %3861 = vmatprep.subr.bf16.mxu0 0
        %3862 = vmatpush1.bf16.msra.mxu0 %v3605
        %3863 = vmatprep.subr.bf16.mxu0 0
        %3864 = vmatpush1.bf16.msra.mxu0 0
        %3865 = vmatprep.subr.bf16.mxu0 0
        %3866 = vmatpush1.bf16.msra.mxu0 0
        %3867 = vmatprep.subr.bf16.mxu0 0
        %3868 = vmatpush1.bf16.msra.mxu0 0
        %3869 = vmatprep.subr.bf16.mxu0 0
        %3870 = vmatpush1.bf16.msra.mxu0 0
        %3871 = vmatprep.subr.bf16.mxu0 0
        %3872 = vmatpush1.bf16.msra.mxu0 0
        %3873 = vmatprep.subr.bf16.mxu0 0
        %3874 = vmatpush1.bf16.msra.mxu0 0
        %3875 = vmatprep.subr.bf16.mxu0 0
        %3876 = vmatpush1.bf16.msra.mxu0 0
        %3877 = vmatprep.subr.bf16.mxu0 0
        %3878 = vmatpush1.bf16.msra.mxu0 0
        %3879 = vmatprep.subr.bf16.mxu0 0
        %3880 = vmatpush1.bf16.msra.mxu0 0
        %3881 = vmatprep.subr.bf16.mxu0 0
        %3882 = vmatpush1.bf16.msra.mxu0 0
        %3883 = vmatprep.subr.bf16.mxu0 0
        %3884 = vmatpush1.bf16.msra.mxu0 0
        %3885 = vmatprep.subr.bf16.mxu0 0
        %3886 = vmatpush1.bf16.msra.mxu0 0
        %3887 = vmatprep.subr.bf16.mxu0 0
        %3888 = vmatpush1.bf16.msra.mxu0 0
        %3889 = vmatprep.subr.bf16.mxu0 0
        %3890 = vmatpush1.bf16.msra.mxu0 0
        %3891 = vmatprep.subr.bf16.mxu0 0
        %3892 = vmatpush1.bf16.msra.mxu0 0
        %3893 = vmatprep.mubr.bf16.mxu0 0
        %3894 = vmatmul.mubr.bf16.gmra.mrb[0].mxu0 %v1370
        %v3895 = vpop.f32.mrb[0].mxu0
        %v3896 = vadd.f32 0.0, %v3895
        %v3897 = vpop.f32.mrb[0].mxu0
        %v3898 = vpop.f32.mrb[0].mxu0
        %v3899 = vadd.f32 0.0, %v3898
        %v3900 = vpop.f32.mrb[0].mxu0
        %3901 = vdwg.mxu0
        %3902 = vmatprep.subr.bf16.mxu0 0
        %3903 = vmatpush1.bf16.msra.mxu0 %v3606
        %3904 = vmatprep.subr.bf16.mxu0 0
        %3905 = vmatpush1.bf16.msra.mxu0 0
        %3906 = vmatprep.subr.bf16.mxu0 0
        %3907 = vmatpush1.bf16.msra.mxu0 0
        %3908 = vmatprep.subr.bf16.mxu0 0
        %3909 = vmatpush1.bf16.msra.mxu0 0
        %3910 = vmatprep.subr.bf16.mxu0 0
        %3911 = vmatpush1.bf16.msra.mxu0 0
        %3912 = vmatprep.subr.bf16.mxu0 0
        %3913 = vmatpush1.bf16.msra.mxu0 0
        %3914 = vmatprep.subr.bf16.mxu0 0
        %3915 = vmatpush1.bf16.msra.mxu0 0
        %3916 = vmatprep.subr.bf16.mxu0 0
        %3917 = vmatpush1.bf16.msra.mxu0 0
        %3918 = vmatprep.subr.bf16.mxu0 0
        %3919 = vmatpush1.bf16.msra.mxu0 0
        %3920 = vmatprep.subr.bf16.mxu0 0
        %3921 = vmatpush1.bf16.msra.mxu0 0
        %3922 = vmatprep.subr.bf16.mxu0 0
        %3923 = vmatpush1.bf16.msra.mxu0 0
        %3924 = vmatprep.subr.bf16.mxu0 0
        %3925 = vmatpush1.bf16.msra.mxu0 0
        %3926 = vmatprep.subr.bf16.mxu0 0
        %3927 = vmatpush1.bf16.msra.mxu0 0
        %3928 = vmatprep.subr.bf16.mxu0 0
        %3929 = vmatpush1.bf16.msra.mxu0 0
        %3930 = vmatprep.subr.bf16.mxu0 0
        %3931 = vmatpush1.bf16.msra.mxu0 0
        %3932 = vmatprep.subr.bf16.mxu0 0
        %3933 = vmatpush1.bf16.msra.mxu0 0
        %3934 = vmatprep.mubr.bf16.mxu0 0
        %3935 = vmatmul.mubr.bf16.gmra.mrb[0].mxu0 %v1419
        %v3936 = vpop.f32.mrb[0].mxu0
        %v3937 = vadd.f32 0.0, %v3936
        %v3938 = vpop.f32.mrb[0].mxu0
        %v3939 = vpop.f32.mrb[0].mxu0
        %v3940 = vadd.f32 0.0, %v3939
        %v3941 = vpop.f32.mrb[0].mxu0
        %3942 = vdwg.mxu0
        %3943 = vmatprep.subr.bf16.mxu0 0
        %3944 = vmatpush1.bf16.msra.mxu0 %v3607
        %3945 = vmatprep.subr.bf16.mxu0 0
        %3946 = vmatpush1.bf16.msra.mxu0 0
        %3947 = vmatprep.subr.bf16.mxu0 0
        %3948 = vmatpush1.bf16.msra.mxu0 0
        %3949 = vmatprep.subr.bf16.mxu0 0
        %3950 = vmatpush1.bf16.msra.mxu0 0
        %3951 = vmatprep.subr.bf16.mxu0 0
        %3952 = vmatpush1.bf16.msra.mxu0 0
        %3953 = vmatprep.subr.bf16.mxu0 0
        %3954 = vmatpush1.bf16.msra.mxu0 0
        %3955 = vmatprep.subr.bf16.mxu0 0
        %3956 = vmatpush1.bf16.msra.mxu0 0
        %3957 = vmatprep.subr.bf16.mxu0 0
        %3958 = vmatpush1.bf16.msra.mxu0 0
        %3959 = vmatprep.subr.bf16.mxu0 0
        %3960 = vmatpush1.bf16.msra.mxu0 0
        %3961 = vmatprep.subr.bf16.mxu0 0
        %3962 = vmatpush1.bf16.msra.mxu0 0
        %3963 = vmatprep.subr.bf16.mxu0 0
        %3964 = vmatpush1.bf16.msra.mxu0 0
        %3965 = vmatprep.subr.bf16.mxu0 0
        %3966 = vmatpush1.bf16.msra.mxu0 0
        %3967 = vmatprep.subr.bf16.mxu0 0
        %3968 = vmatpush1.bf16.msra.mxu0 0
        %3969 = vmatprep.subr.bf16.mxu0 0
        %3970 = vmatpush1.bf16.msra.mxu0 0
        %3971 = vmatprep.subr.bf16.mxu0 0
        %3972 = vmatpush1.bf16.msra.mxu0 0
        %3973 = vmatprep.subr.bf16.mxu0 0
        %3974 = vmatpush1.bf16.msra.mxu0 0
        %3975 = vmatprep.mubr.bf16.mxu0 0
        %3976 = vmatmul.mubr.bf16.gmra.mrb[0].mxu0 %v1468
        %v3977 = vpop.f32.mrb[0].mxu0
        %v3978 = vadd.f32 0.0, %v3977
        %v3979 = vpop.f32.mrb[0].mxu0
        %v3980 = vpop.f32.mrb[0].mxu0
        %v3981 = vadd.f32 0.0, %v3980
        %v3982 = vpop.f32.mrb[0].mxu0
        %3983 = vdwg.mxu0
        %3984 = vmatprep.subr.bf16.mxu0 0
        %3985 = vmatpush1.bf16.msra.mxu0 %v3608
        %3986 = vmatprep.subr.bf16.mxu0 0
        %3987 = vmatpush1.bf16.msra.mxu0 0
        %3988 = vmatprep.subr.bf16.mxu0 0
        %3989 = vmatpush1.bf16.msra.mxu0 0
        %3990 = vmatprep.subr.bf16.mxu0 0
        %3991 = vmatpush1.bf16.msra.mxu0 0
        %3992 = vmatprep.subr.bf16.mxu0 0
        %3993 = vmatpush1.bf16.msra.mxu0 0
        %3994 = vmatprep.subr.bf16.mxu0 0
        %3995 = vmatpush1.bf16.msra.mxu0 0
        %3996 = vmatprep.subr.bf16.mxu0 0
        %3997 = vmatpush1.bf16.msra.mxu0 0
        %3998 = vmatprep.subr.bf16.mxu0 0
        %3999 = vmatpush1.bf16.msra.mxu0 0
        %4000 = vmatprep.subr.bf16.mxu0 0
        %4001 = vmatpush1.bf16.msra.mxu0 0
        %4002 = vmatprep.subr.bf16.mxu0 0
        %4003 = vmatpush1.bf16.msra.mxu0 0
        %4004 = vmatprep.subr.bf16.mxu0 0
        %4005 = vmatpush1.bf16.msra.mxu0 0
        %4006 = vmatprep.subr.bf16.mxu0 0
        %4007 = vmatpush1.bf16.msra.mxu0 0
        %4008 = vmatprep.subr.bf16.mxu0 0
        %4009 = vmatpush1.bf16.msra.mxu0 0
        %4010 = vmatprep.subr.bf16.mxu0 0
        %4011 = vmatpush1.bf16.msra.mxu0 0
        %4012 = vmatprep.subr.bf16.mxu0 0
        %4013 = vmatpush1.bf16.msra.mxu0 0
        %4014 = vmatprep.subr.bf16.mxu0 0
        %4015 = vmatpush1.bf16.msra.mxu0 0
        %4016 = vmatprep.mubr.bf16.mxu0 0
        %4017 = vmatmul.mubr.bf16.gmra.mrb[0].mxu0 %v1517
        %v4018 = vpop.f32.mrb[0].mxu0
        %v4019 = vadd.f32 0.0, %v4018
        %v4020 = vpop.f32.mrb[0].mxu0
        %v4021 = vpop.f32.mrb[0].mxu0
        %v4022 = vadd.f32 0.0, %v4021
        %v4023 = vpop.f32.mrb[0].mxu0
        %4024 = vdwg.mxu0
        %4025 = vmatprep.subr.bf16.mxu0 0
        %4026 = vmatpush1.bf16.msra.mxu0 %v3609
        %4027 = vmatprep.subr.bf16.mxu0 0
        %4028 = vmatpush1.bf16.msra.mxu0 0
        %4029 = vmatprep.subr.bf16.mxu0 0
        %4030 = vmatpush1.bf16.msra.mxu0 0
        %4031 = vmatprep.subr.bf16.mxu0 0
        %4032 = vmatpush1.bf16.msra.mxu0 0
        %4033 = vmatprep.subr.bf16.mxu0 0
        %4034 = vmatpush1.bf16.msra.mxu0 0
        %4035 = vmatprep.subr.bf16.mxu0 0
        %4036 = vmatpush1.bf16.msra.mxu0 0
        %4037 = vmatprep.subr.bf16.mxu0 0
        %4038 = vmatpush1.bf16.msra.mxu0 0
        %4039 = vmatprep.subr.bf16.mxu0 0
        %4040 = vmatpush1.bf16.msra.mxu0 0
        %4041 = vmatprep.subr.bf16.mxu0 0
        %4042 = vmatpush1.bf16.msra.mxu0 0
        %4043 = vmatprep.subr.bf16.mxu0 0
        %4044 = vmatpush1.bf16.msra.mxu0 0
        %4045 = vmatprep.subr.bf16.mxu0 0
        %4046 = vmatpush1.bf16.msra.mxu0 0
        %4047 = vmatprep.subr.bf16.mxu0 0
        %4048 = vmatpush1.bf16.msra.mxu0 0
        %4049 = vmatprep.subr.bf16.mxu0 0
        %4050 = vmatpush1.bf16.msra.mxu0 0
        %4051 = vmatprep.subr.bf16.mxu0 0
        %4052 = vmatpush1.bf16.msra.mxu0 0
        %4053 = vmatprep.subr.bf16.mxu0 0
        %4054 = vmatpush1.bf16.msra.mxu0 0
        %4055 = vmatprep.subr.bf16.mxu0 0
        %4056 = vmatpush1.bf16.msra.mxu0 0
        %4057 = vmatprep.mubr.bf16.mxu0 0
        %4058 = vmatmul.mubr.bf16.gmra.mrb[0].mxu0 %v1566
        %v4059 = vpop.f32.mrb[0].mxu0
        %v4060 = vadd.f32 0.0, %v4059
        %v4061 = vpop.f32.mrb[0].mxu0
        %v4062 = vpop.f32.mrb[0].mxu0
        %v4063 = vadd.f32 0.0, %v4062
        %v4064 = vpop.f32.mrb[0].mxu0
        %4065 = vdwg.mxu0
        %4066 = vmatprep.subr.bf16.mxu0 0
        %4067 = vmatpush1.bf16.msra.mxu0 %v3610
        %4068 = vmatprep.subr.bf16.mxu0 0
        %4069 = vmatpush1.bf16.msra.mxu0 0
        %4070 = vmatprep.subr.bf16.mxu0 0
        %4071 = vmatpush1.bf16.msra.mxu0 0
        %4072 = vmatprep.subr.bf16.mxu0 0
        %4073 = vmatpush1.bf16.msra.mxu0 0
        %4074 = vmatprep.subr.bf16.mxu0 0
        %4075 = vmatpush1.bf16.msra.mxu0 0
        %4076 = vmatprep.subr.bf16.mxu0 0
        %4077 = vmatpush1.bf16.msra.mxu0 0
        %4078 = vmatprep.subr.bf16.mxu0 0
        %4079 = vmatpush1.bf16.msra.mxu0 0
        %4080 = vmatprep.subr.bf16.mxu0 0
        %4081 = vmatpush1.bf16.msra.mxu0 0
        %4082 = vmatprep.subr.bf16.mxu0 0
        %4083 = vmatpush1.bf16.msra.mxu0 0
        %4084 = vmatprep.subr.bf16.mxu0 0
        %4085 = vmatpush1.bf16.msra.mxu0 0
        %4086 = vmatprep.subr.bf16.mxu0 0
        %4087 = vmatpush1.bf16.msra.mxu0 0
        %4088 = vmatprep.subr.bf16.mxu0 0
        %4089 = vmatpush1.bf16.msra.mxu0 0
        %4090 = vmatprep.subr.bf16.mxu0 0
        %4091 = vmatpush1.bf16.msra.mxu0 0
        %4092 = vmatprep.subr.bf16.mxu0 0
        %4093 = vmatpush1.bf16.msra.mxu0 0
        %4094 = vmatprep.subr.bf16.mxu0 0
        %4095 = vmatpush1.bf16.msra.mxu0 0
        %4096 = vmatprep.subr.bf16.mxu0 0
        %4097 = vmatpush1.bf16.msra.mxu0 0
        %4098 = vmatprep.mubr.bf16.mxu0 0
        %4099 = vmatmul.mubr.bf16.gmra.mrb[0].mxu0 %v1615
        %v4100 = vpop.f32.mrb[0].mxu0
        %v4101 = vadd.f32 0.0, %v4100
        %v4102 = vpop.f32.mrb[0].mxu0
        %v4103 = vpop.f32.mrb[0].mxu0
        %v4104 = vadd.f32 0.0, %v4103
        %v4105 = vpop.f32.mrb[0].mxu0
        %4106 = vdwg.mxu0
        %4107 = vmatprep.subr.bf16.mxu0 0
        %4108 = vmatpush1.bf16.msra.mxu0 %v3611
        %4109 = vmatprep.subr.bf16.mxu0 0
        %4110 = vmatpush1.bf16.msra.mxu0 0
        %4111 = vmatprep.subr.bf16.mxu0 0
        %4112 = vmatpush1.bf16.msra.mxu0 0
        %4113 = vmatprep.subr.bf16.mxu0 0
        %4114 = vmatpush1.bf16.msra.mxu0 0
        %4115 = vmatprep.subr.bf16.mxu0 0
        %4116 = vmatpush1.bf16.msra.mxu0 0
        %4117 = vmatprep.subr.bf16.mxu0 0
        %4118 = vmatpush1.bf16.msra.mxu0 0
        %4119 = vmatprep.subr.bf16.mxu0 0
        %4120 = vmatpush1.bf16.msra.mxu0 0
        %4121 = vmatprep.subr.bf16.mxu0 0
        %4122 = vmatpush1.bf16.msra.mxu0 0
        %4123 = vmatprep.subr.bf16.mxu0 0
        %4124 = vmatpush1.bf16.msra.mxu0 0
        %4125 = vmatprep.subr.bf16.mxu0 0
        %4126 = vmatpush1.bf16.msra.mxu0 0
        %4127 = vmatprep.subr.bf16.mxu0 0
        %4128 = vmatpush1.bf16.msra.mxu0 0
        %4129 = vmatprep.subr.bf16.mxu0 0
        %4130 = vmatpush1.bf16.msra.mxu0 0
        %4131 = vmatprep.subr.bf16.mxu0 0
        %4132 = vmatpush1.bf16.msra.mxu0 0
        %4133 = vmatprep.subr.bf16.mxu0 0
        %4134 = vmatpush1.bf16.msra.mxu0 0
        %4135 = vmatprep.subr.bf16.mxu0 0
        %4136 = vmatpush1.bf16.msra.mxu0 0
        %4137 = vmatprep.subr.bf16.mxu0 0
        %4138 = vmatpush1.bf16.msra.mxu0 0
        %4139 = vmatprep.mubr.bf16.mxu0 0
        %4140 = vmatmul.mubr.bf16.gmra.mrb[0].mxu0 %v1664
        %v4141 = vpop.f32.mrb[0].mxu0
        %v4142 = vadd.f32 0.0, %v4141
        %v4143 = vpop.f32.mrb[0].mxu0
        %v4144 = vpop.f32.mrb[0].mxu0
        %v4145 = vadd.f32 0.0, %v4144
        %v4146 = vpop.f32.mrb[0].mxu0
        %4147 = vdwg.mxu0
        %4148 = vmatprep.subr.bf16.mxu0 0
        %4149 = vmatpush1.bf16.msra.mxu0 %v3612
        %4150 = vmatprep.subr.bf16.mxu0 0
        %4151 = vmatpush1.bf16.msra.mxu0 0
        %4152 = vmatprep.subr.bf16.mxu0 0
        %4153 = vmatpush1.bf16.msra.mxu0 0
        %4154 = vmatprep.subr.bf16.mxu0 0
        %4155 = vmatpush1.bf16.msra.mxu0 0
        %4156 = vmatprep.subr.bf16.mxu0 0
        %4157 = vmatpush1.bf16.msra.mxu0 0
        %4158 = vmatprep.subr.bf16.mxu0 0
        %4159 = vmatpush1.bf16.msra.mxu0 0
        %4160 = vmatprep.subr.bf16.mxu0 0
        %4161 = vmatpush1.bf16.msra.mxu0 0
        %4162 = vmatprep.subr.bf16.mxu0 0
        %4163 = vmatpush1.bf16.msra.mxu0 0
        %4164 = vmatprep.subr.bf16.mxu0 0
        %4165 = vmatpush1.bf16.msra.mxu0 0
        %4166 = vmatprep.subr.bf16.mxu0 0
        %4167 = vmatpush1.bf16.msra.mxu0 0
        %4168 = vmatprep.subr.bf16.mxu0 0
        %4169 = vmatpush1.bf16.msra.mxu0 0
        %4170 = vmatprep.subr.bf16.mxu0 0
        %4171 = vmatpush1.bf16.msra.mxu0 0
        %4172 = vmatprep.subr.bf16.mxu0 0
        %4173 = vmatpush1.bf16.msra.mxu0 0
        %4174 = vmatprep.subr.bf16.mxu0 0
        %4175 = vmatpush1.bf16.msra.mxu0 0
        %4176 = vmatprep.subr.bf16.mxu0 0
        %4177 = vmatpush1.bf16.msra.mxu0 0
        %4178 = vmatprep.subr.bf16.mxu0 0
        %4179 = vmatpush1.bf16.msra.mxu0 0
        %4180 = vmatprep.mubr.bf16.mxu0 0
        %4181 = vmatmul.mubr.bf16.gmra.mrb[0].mxu0 %v1713
        %v4182 = vpop.f32.mrb[0].mxu0
        %v4183 = vadd.f32 0.0, %v4182
        %v4184 = vpop.f32.mrb[0].mxu0
        %v4185 = vpop.f32.mrb[0].mxu0
        %v4186 = vadd.f32 0.0, %v4185
        %v4187 = vpop.f32.mrb[0].mxu0
        %4188 = vdwg.mxu0
        %4189 = vmatprep.subr.bf16.mxu0 0
        %4190 = vmatpush1.bf16.msra.mxu0 %v3613
        %4191 = vmatprep.subr.bf16.mxu0 0
        %4192 = vmatpush1.bf16.msra.mxu0 0
        %4193 = vmatprep.subr.bf16.mxu0 0
        %4194 = vmatpush1.bf16.msra.mxu0 0
        %4195 = vmatprep.subr.bf16.mxu0 0
        %4196 = vmatpush1.bf16.msra.mxu0 0
        %4197 = vmatprep.subr.bf16.mxu0 0
        %4198 = vmatpush1.bf16.msra.mxu0 0
        %4199 = vmatprep.subr.bf16.mxu0 0
        %4200 = vmatpush1.bf16.msra.mxu0 0
        %4201 = vmatprep.subr.bf16.mxu0 0
        %4202 = vmatpush1.bf16.msra.mxu0 0
        %4203 = vmatprep.subr.bf16.mxu0 0
        %4204 = vmatpush1.bf16.msra.mxu0 0
        %4205 = vmatprep.subr.bf16.mxu0 0
        %4206 = vmatpush1.bf16.msra.mxu0 0
        %4207 = vmatprep.subr.bf16.mxu0 0
        %4208 = vmatpush1.bf16.msra.mxu0 0
        %4209 = vmatprep.subr.bf16.mxu0 0
        %4210 = vmatpush1.bf16.msra.mxu0 0
        %4211 = vmatprep.subr.bf16.mxu0 0
        %4212 = vmatpush1.bf16.msra.mxu0 0
        %4213 = vmatprep.subr.bf16.mxu0 0
        %4214 = vmatpush1.bf16.msra.mxu0 0
        %4215 = vmatprep.subr.bf16.mxu0 0
        %4216 = vmatpush1.bf16.msra.mxu0 0
        %4217 = vmatprep.subr.bf16.mxu0 0
        %4218 = vmatpush1.bf16.msra.mxu0 0
        %4219 = vmatprep.subr.bf16.mxu0 0
        %4220 = vmatpush1.bf16.msra.mxu0 0
        %4221 = vmatprep.mubr.bf16.mxu0 0
        %4222 = vmatmul.mubr.bf16.gmra.mrb[0].mxu0 %v1762
        %v4223 = vpop.f32.mrb[0].mxu0
        %v4224 = vadd.f32 0.0, %v4223
        %v4225 = vpop.f32.mrb[0].mxu0
        %v4226 = vpop.f32.mrb[0].mxu0
        %v4227 = vadd.f32 0.0, %v4226
        %v4228 = vpop.f32.mrb[0].mxu0
        %4229 = vdwg.mxu0
        %4230 = vmatprep.subr.bf16.mxu0 0
        %4231 = vmatpush1.bf16.msra.mxu0 %v3614
        %4232 = vmatprep.subr.bf16.mxu0 0
        %4233 = vmatpush1.bf16.msra.mxu0 0
        %4234 = vmatprep.subr.bf16.mxu0 0
        %4235 = vmatpush1.bf16.msra.mxu0 0
        %4236 = vmatprep.subr.bf16.mxu0 0
        %4237 = vmatpush1.bf16.msra.mxu0 0
        %4238 = vmatprep.subr.bf16.mxu0 0
        %4239 = vmatpush1.bf16.msra.mxu0 0
        %4240 = vmatprep.subr.bf16.mxu0 0
        %4241 = vmatpush1.bf16.msra.mxu0 0
        %4242 = vmatprep.subr.bf16.mxu0 0
        %4243 = vmatpush1.bf16.msra.mxu0 0
        %4244 = vmatprep.subr.bf16.mxu0 0
        %4245 = vmatpush1.bf16.msra.mxu0 0
        %4246 = vmatprep.subr.bf16.mxu0 0
        %4247 = vmatpush1.bf16.msra.mxu0 0
        %4248 = vmatprep.subr.bf16.mxu0 0
        %4249 = vmatpush1.bf16.msra.mxu0 0
        %4250 = vmatprep.subr.bf16.mxu0 0
        %4251 = vmatpush1.bf16.msra.mxu0 0
        %4252 = vmatprep.subr.bf16.mxu0 0
        %4253 = vmatpush1.bf16.msra.mxu0 0
        %4254 = vmatprep.subr.bf16.mxu0 0
        %4255 = vmatpush1.bf16.msra.mxu0 0
        %4256 = vmatprep.subr.bf16.mxu0 0
        %4257 = vmatpush1.bf16.msra.mxu0 0
        %4258 = vmatprep.subr.bf16.mxu0 0
        %4259 = vmatpush1.bf16.msra.mxu0 0
        %4260 = vmatprep.subr.bf16.mxu0 0
        %4261 = vmatpush1.bf16.msra.mxu0 0
        %4262 = vmatprep.mubr.bf16.mxu0 0
        %4263 = vmatmul.mubr.bf16.gmra.mrb[0].mxu0 %v1811
        %v4264 = vpop.f32.mrb[0].mxu0
        %v4265 = vadd.f32 0.0, %v4264
        %v4266 = vpop.f32.mrb[0].mxu0
        %v4267 = vpop.f32.mrb[0].mxu0
        %v4268 = vadd.f32 0.0, %v4267
        %v4269 = vpop.f32.mrb[0].mxu0
        %4270 = vdwg.mxu0
        %s4271 = scalar_lea.vmem %s6, 2
        %v4272 = vld [vmem:[%s4271] sm:$0x1]
        %v4274 = vlaneseq
        %v4275 = vshrl.u32 %v4274, 7
        %v4276 = vsub.s32 0, %v4275
        %v4277 = vrot.slane %v4272, %v4276
        %v4279 = vadd.f32 %v3650, %v4277
        %v4280 = vadd.f32 %v3653, %v4277
        %v4281 = vadd.f32 %v3691, %v4277
        %v4282 = vadd.f32 %v3694, %v4277
        %v4283 = vadd.f32 %v3732, %v4277
        %v4284 = vadd.f32 %v3735, %v4277
        %v4285 = vadd.f32 %v3773, %v4277
        %v4286 = vadd.f32 %v3776, %v4277
        %v4287 = vadd.f32 %v3814, %v4277
        %v4288 = vadd.f32 %v3817, %v4277
        %v4289 = vadd.f32 %v3855, %v4277
        %v4290 = vadd.f32 %v3858, %v4277
        %v4291 = vadd.f32 %v3896, %v4277
        %v4292 = vadd.f32 %v3899, %v4277
        %v4293 = vadd.f32 %v3937, %v4277
        %v4294 = vadd.f32 %v3940, %v4277
        %v4295 = vadd.f32 %v3978, %v4277
        %v4296 = vadd.f32 %v3981, %v4277
        %v4297 = vadd.f32 %v4019, %v4277
        %v4298 = vadd.f32 %v4022, %v4277
        %v4299 = vadd.f32 %v4060, %v4277
        %v4300 = vadd.f32 %v4063, %v4277
        %v4301 = vadd.f32 %v4101, %v4277
        %v4302 = vadd.f32 %v4104, %v4277
        %v4303 = vadd.f32 %v4142, %v4277
        %v4304 = vadd.f32 %v4145, %v4277
        %v4305 = vadd.f32 %v4183, %v4277
        %v4306 = vadd.f32 %v4186, %v4277
        %v4307 = vadd.f32 %v4224, %v4277
        %v4308 = vadd.f32 %v4227, %v4277
        %v4309 = vadd.f32 %v4265, %v4277
        %v4310 = vadd.f32 %v4268, %v4277
        %v4311 = vmul.f32 %v4279, %v1896
        %v4312 = vmul.f32 %v4280, %v1901
        %v4313 = vmul.f32 %v4281, %v1906
        %v4314 = vmul.f32 %v4282, %v1911
        %v4315 = vmul.f32 %v4283, %v1916
        %v4316 = vmul.f32 %v4284, %v1921
        %v4317 = vmul.f32 %v4285, %v1926
        %v4318 = vmul.f32 %v4286, %v1931
        %v4319 = vmul.f32 %v4287, %v1936
        %v4320 = vmul.f32 %v4288, %v1941
        %v4321 = vmul.f32 %v4289, %v1946
        %v4322 = vmul.f32 %v4290, %v1951
        %v4323 = vmul.f32 %v4291, %v1956
        %v4324 = vmul.f32 %v4292, %v1961
        %v4325 = vmul.f32 %v4293, %v1966
        %v4326 = vmul.f32 %v4294, %v1971
        %v4327 = vmul.f32 %v4295, %v1976
        %v4328 = vmul.f32 %v4296, %v1981
        %v4329 = vmul.f32 %v4297, %v1986
        %v4330 = vmul.f32 %v4298, %v1991
        %v4331 = vmul.f32 %v4299, %v1996
        %v4332 = vmul.f32 %v4300, %v2001
        %v4333 = vmul.f32 %v4301, %v2006
        %v4334 = vmul.f32 %v4302, %v2011
        %v4335 = vmul.f32 %v4303, %v2016
        %v4336 = vmul.f32 %v4304, %v2021
        %v4337 = vmul.f32 %v4305, %v2026
        %v4338 = vmul.f32 %v4306, %v2031
        %v4339 = vmul.f32 %v4307, %v2036
        %v4340 = vmul.f32 %v4308, %v2041
        %v4341 = vmul.f32 %v4309, %v2046
        %v4342 = vmul.f32 %v4310, %v2051
        %s4343 = scalar_lea.vmem %s7, 2
        %v4344 = vld [vmem:[%s4343] sm:$0x1]
        %v4346 = vlaneseq
        %v4347 = vshrl.u32 %v4346, 7
        %v4348 = vsub.s32 0, %v4347
        %v4349 = vrot.slane %v4344, %v4348
        %v4351 = vmul.f32 %v4311, %v4349
        %v4352 = vmul.f32 %v4312, %v4349
        %v4353 = vmul.f32 %v4313, %v4349
        %v4354 = vmul.f32 %v4314, %v4349
        %v4355 = vmul.f32 %v4315, %v4349
        %v4356 = vmul.f32 %v4316, %v4349
        %v4357 = vmul.f32 %v4317, %v4349
        %v4358 = vmul.f32 %v4318, %v4349
        %v4359 = vmul.f32 %v4319, %v4349
        %v4360 = vmul.f32 %v4320, %v4349
        %v4361 = vmul.f32 %v4321, %v4349
        %v4362 = vmul.f32 %v4322, %v4349
        %v4363 = vmul.f32 %v4323, %v4349
        %v4364 = vmul.f32 %v4324, %v4349
        %v4365 = vmul.f32 %v4325, %v4349
        %v4366 = vmul.f32 %v4326, %v4349
        %v4367 = vmul.f32 %v4327, %v4349
        %v4368 = vmul.f32 %v4328, %v4349
        %v4369 = vmul.f32 %v4329, %v4349
        %v4370 = vmul.f32 %v4330, %v4349
        %v4371 = vmul.f32 %v4331, %v4349
        %v4372 = vmul.f32 %v4332, %v4349
        %v4373 = vmul.f32 %v4333, %v4349
        %v4374 = vmul.f32 %v4334, %v4349
        %v4375 = vmul.f32 %v4335, %v4349
        %v4376 = vmul.f32 %v4336, %v4349
        %v4377 = vmul.f32 %v4337, %v4349
        %v4378 = vmul.f32 %v4338, %v4349
        %v4379 = vmul.f32 %v4339, %v4349
        %v4380 = vmul.f32 %v4340, %v4349
        %v4381 = vmul.f32 %v4341, %v4349
        %v4382 = vmul.f32 %v4342, %v4349
        %s4383 = scalar_lea.vmem %s8, 2
        %v4384 = vld [vmem:[%s4383] sm:$0x1]
        %v4386 = vlaneseq
        %v4387 = vshrl.u32 %v4386, 7
        %v4388 = vsub.s32 0, %v4387
        %v4389 = vrot.slane %v4384, %v4388
        %v4391 = vadd.f32 %v4351, %v4389
        %v4392 = vadd.f32 %v4352, %v4389
        %v4393 = vadd.f32 %v4353, %v4389
        %v4394 = vadd.f32 %v4354, %v4389
        %v4395 = vadd.f32 %v4355, %v4389
        %v4396 = vadd.f32 %v4356, %v4389
        %v4397 = vadd.f32 %v4357, %v4389
        %v4398 = vadd.f32 %v4358, %v4389
        %v4399 = vadd.f32 %v4359, %v4389
        %v4400 = vadd.f32 %v4360, %v4389
        %v4401 = vadd.f32 %v4361, %v4389
        %v4402 = vadd.f32 %v4362, %v4389
        %v4403 = vadd.f32 %v4363, %v4389
        %v4404 = vadd.f32 %v4364, %v4389
        %v4405 = vadd.f32 %v4365, %v4389
        %v4406 = vadd.f32 %v4366, %v4389
        %v4407 = vadd.f32 %v4367, %v4389
        %v4408 = vadd.f32 %v4368, %v4389
        %v4409 = vadd.f32 %v4369, %v4389
        %v4410 = vadd.f32 %v4370, %v4389
        %v4411 = vadd.f32 %v4371, %v4389
        %v4412 = vadd.f32 %v4372, %v4389
        %v4413 = vadd.f32 %v4373, %v4389
        %v4414 = vadd.f32 %v4374, %v4389
        %v4415 = vadd.f32 %v4375, %v4389
        %v4416 = vadd.f32 %v4376, %v4389
        %v4417 = vadd.f32 %v4377, %v4389
        %v4418 = vadd.f32 %v4378, %v4389
        %v4419 = vadd.f32 %v4379, %v4389
        %v4420 = vadd.f32 %v4380, %v4389
        %v4421 = vadd.f32 %v4381, %v4389
        %v4422 = vadd.f32 %v4382, %v4389
        %v4423 = vmax.f32 %v4391, 0.0
        %v4424 = vmax.f32 %v4392, 0.0
        %v4425 = vmax.f32 %v4393, 0.0
        %v4426 = vmax.f32 %v4394, 0.0
        %v4427 = vmax.f32 %v4395, 0.0
        %v4428 = vmax.f32 %v4396, 0.0
        %v4429 = vmax.f32 %v4397, 0.0
        %v4430 = vmax.f32 %v4398, 0.0
        %v4431 = vmax.f32 %v4399, 0.0
        %v4432 = vmax.f32 %v4400, 0.0
        %v4433 = vmax.f32 %v4401, 0.0
        %v4434 = vmax.f32 %v4402, 0.0
        %v4435 = vmax.f32 %v4403, 0.0
        %v4436 = vmax.f32 %v4404, 0.0
        %v4437 = vmax.f32 %v4405, 0.0
        %v4438 = vmax.f32 %v4406, 0.0
        %v4439 = vmax.f32 %v4407, 0.0
        %v4440 = vmax.f32 %v4408, 0.0
        %v4441 = vmax.f32 %v4409, 0.0
        %v4442 = vmax.f32 %v4410, 0.0
        %v4443 = vmax.f32 %v4411, 0.0
        %v4444 = vmax.f32 %v4412, 0.0
        %v4445 = vmax.f32 %v4413, 0.0
        %v4446 = vmax.f32 %v4414, 0.0
        %v4447 = vmax.f32 %v4415, 0.0
        %v4448 = vmax.f32 %v4416, 0.0
        %v4449 = vmax.f32 %v4417, 0.0
        %v4450 = vmax.f32 %v4418, 0.0
        %v4451 = vmax.f32 %v4419, 0.0
        %v4452 = vmax.f32 %v4420, 0.0
        %v4453 = vmax.f32 %v4421, 0.0
        %v4454 = vmax.f32 %v4422, 0.0
        %v4455 = vadd.f32 %v3325, %v4423
        %v4456 = vadd.f32 %v3326, %v4424
        %v4457 = vadd.f32 %v3327, %v4425
        %v4458 = vadd.f32 %v3328, %v4426
        %v4459 = vadd.f32 %v3329, %v4427
        %v4460 = vadd.f32 %v3330, %v4428
        %v4461 = vadd.f32 %v3331, %v4429
        %v4462 = vadd.f32 %v3332, %v4430
        %v4463 = vadd.f32 %v3333, %v4431
        %v4464 = vadd.f32 %v3334, %v4432
        %v4465 = vadd.f32 %v3335, %v4433
        %v4466 = vadd.f32 %v3336, %v4434
        %v4467 = vadd.f32 %v3337, %v4435
        %v4468 = vadd.f32 %v3338, %v4436
        %v4469 = vadd.f32 %v3339, %v4437
        %v4470 = vadd.f32 %v3340, %v4438
        %v4471 = vadd.f32 %v3341, %v4439
        %v4472 = vadd.f32 %v3342, %v4440
        %v4473 = vadd.f32 %v3343, %v4441
        %v4474 = vadd.f32 %v3344, %v4442
        %v4475 = vadd.f32 %v3345, %v4443
        %v4476 = vadd.f32 %v3346, %v4444
        %v4477 = vadd.f32 %v3347, %v4445
        %v4478 = vadd.f32 %v3348, %v4446
        %v4479 = vadd.f32 %v3349, %v4447
        %v4480 = vadd.f32 %v3350, %v4448
        %v4481 = vadd.f32 %v3351, %v4449
        %v4482 = vadd.f32 %v3352, %v4450
        %v4483 = vadd.f32 %v3353, %v4451
        %v4484 = vadd.f32 %v3354, %v4452
        %v4485 = vadd.f32 %v3355, %v4453
        %v4486 = vadd.f32 %v3356, %v4454
        %v4487 = vpack.c.bf16 %v4456, %v4455
        %v4488 = vpack.c.bf16 %v4458, %v4457
        %v4489 = vpack.c.bf16 %v4460, %v4459
        %v4490 = vpack.c.bf16 %v4462, %v4461
        %v4491 = vpack.c.bf16 %v4464, %v4463
        %v4492 = vpack.c.bf16 %v4466, %v4465
        %v4493 = vpack.c.bf16 %v4468, %v4467
        %v4494 = vpack.c.bf16 %v4470, %v4469
        %v4495 = vpack.c.bf16 %v4472, %v4471
        %v4496 = vpack.c.bf16 %v4474, %v4473
        %v4497 = vpack.c.bf16 %v4476, %v4475
        %v4498 = vpack.c.bf16 %v4478, %v4477
        %v4499 = vpack.c.bf16 %v4480, %v4479
        %v4500 = vpack.c.bf16 %v4482, %v4481
        %v4501 = vpack.c.bf16 %v4484, %v4483
        %v4502 = vpack.c.bf16 %v4486, %v4485
        %s4503 = scalar_lea.vmem %s5, 192
        %v4504 = vld [vmem:[%s4503] sm:$0xf]
        %v4505 = vld [vmem:[%s4503 + $0x4] sm:$0xf]
        %v4506 = vld [vmem:[%s4503 + $0x8] sm:$0xf]
        %v4507 = vld [vmem:[%s4503 + $0xc] sm:$0xf]
        %v4508 = vld [vmem:[%s4503 + $0x10] sm:$0xf]
        %v4509 = vld [vmem:[%s4503 + $0x14] sm:$0xf]
        %v4510 = vld [vmem:[%s4503 + $0x18] sm:$0xf]
        %v4511 = vld [vmem:[%s4503 + $0x1c] sm:$0xf]
        %v4512 = vld [vmem:[%s4503 + $0x20] sm:$0xf]
        %v4513 = vld [vmem:[%s4503 + $0x24] sm:$0xf]
        %v4514 = vld [vmem:[%s4503 + $0x28] sm:$0xf]
        %v4515 = vld [vmem:[%s4503 + $0x2c] sm:$0xf]
        %v4516 = vld [vmem:[%s4503 + $0x30] sm:$0xf]
        %v4517 = vld [vmem:[%s4503 + $0x34] sm:$0xf]
        %v4518 = vld [vmem:[%s4503 + $0x38] sm:$0xf]
        %v4519 = vld [vmem:[%s4503 + $0x3c] sm:$0xf]
        %v4536 = vunpack.c.l.b16 %v4504
        %v4537 = vunpack.c.l.b16 %v4505
        %v4538 = vunpack.c.l.b16 %v4506
        %v4539 = vunpack.c.l.b16 %v4507
        %v4540 = vunpack.c.l.b16 %v4508
        %v4541 = vunpack.c.l.b16 %v4509
        %v4542 = vunpack.c.l.b16 %v4510
        %v4543 = vunpack.c.l.b16 %v4511
        %v4544 = vunpack.c.l.b16 %v4512
        %v4545 = vunpack.c.l.b16 %v4513
        %v4546 = vunpack.c.l.b16 %v4514
        %v4547 = vunpack.c.l.b16 %v4515
        %v4548 = vunpack.c.l.b16 %v4516
        %v4549 = vunpack.c.l.b16 %v4517
        %v4550 = vunpack.c.l.b16 %v4518
        %v4551 = vunpack.c.l.b16 %v4519
        %v4552 = vpack.c.b16 %v4537, %v4536
        %v4553 = vpack.c.b16 %v4539, %v4538
        %v4554 = vpack.c.b16 %v4541, %v4540
        %v4555 = vpack.c.b16 %v4543, %v4542
        %v4556 = vpack.c.b16 %v4545, %v4544
        %v4557 = vpack.c.b16 %v4547, %v4546
        %v4558 = vpack.c.b16 %v4549, %v4548
        %v4559 = vpack.c.b16 %v4551, %v4550
        %4568 = vmatprep.subr.bf16.mxu0 0
        %4569 = vmatpush1.bf16.msra.mxu0 %v4552
        %4570 = vmatprep.subr.bf16.mxu0 0
        %4571 = vmatpush1.bf16.msra.mxu0 %v4553
        %4572 = vmatprep.subr.bf16.mxu0 0
        %4573 = vmatpush1.bf16.msra.mxu0 %v4554
        %4574 = vmatprep.subr.bf16.mxu0 0
        %4575 = vmatpush1.bf16.msra.mxu0 %v4555
        %4576 = vmatprep.subr.bf16.mxu0 0
        %4577 = vmatpush1.bf16.msra.mxu0 %v4556
        %4578 = vmatprep.subr.bf16.mxu0 0
        %4579 = vmatpush1.bf16.msra.mxu0 %v4557
        %4580 = vmatprep.subr.bf16.mxu0 0
        %4581 = vmatpush1.bf16.msra.mxu0 %v4558
        %4582 = vmatprep.subr.bf16.mxu0 0
        %4583 = vmatpush1.bf16.msra.mxu0 %v4559
        %4584 = vmatprep.subr.bf16.mxu0 0
        %4585 = vmatpush1.bf16.msra.mxu0 0
        %4586 = vmatprep.subr.bf16.mxu0 0
        %4587 = vmatpush1.bf16.msra.mxu0 0
        %4588 = vmatprep.subr.bf16.mxu0 0
        %4589 = vmatpush1.bf16.msra.mxu0 0
        %4590 = vmatprep.subr.bf16.mxu0 0
        %4591 = vmatpush1.bf16.msra.mxu0 0
        %4592 = vmatprep.subr.bf16.mxu0 0
        %4593 = vmatpush1.bf16.msra.mxu0 0
        %4594 = vmatprep.subr.bf16.mxu0 0
        %4595 = vmatpush1.bf16.msra.mxu0 0
        %4596 = vmatprep.subr.bf16.mxu0 0
        %4597 = vmatpush1.bf16.msra.mxu0 0
        %4598 = vmatprep.subr.bf16.mxu0 0
        %4599 = vmatpush1.bf16.msra.mxu0 0
        %4600 = vmatprep.mubr.bf16.mxu0 0
        %4601 = vmatmul.mubr.bf16.gmra.mrb[0].mxu0 %v4487
        %v4602 = vpop.f32.mrb[0].mxu0
        %v4603 = vadd.f32 0.0, %v4602
        %v4604 = vpop.f32.mrb[0].mxu0
        %v4605 = vpop.f32.mrb[0].mxu0
        %v4606 = vadd.f32 0.0, %v4605
        %v4607 = vpop.f32.mrb[0].mxu0
        %4608 = vmatprep.mubr.bf16.mxu0 0
        %4609 = vmatmul.mubr.bf16.gmra.mrb[0].mxu0 %v4488
        %v4610 = vpop.f32.mrb[0].mxu0
        %v4611 = vadd.f32 0.0, %v4610
        %v4612 = vpop.f32.mrb[0].mxu0
        %v4613 = vpop.f32.mrb[0].mxu0
        %v4614 = vadd.f32 0.0, %v4613
        %v4615 = vpop.f32.mrb[0].mxu0
        %4616 = vmatprep.mubr.bf16.mxu0 0
        %4617 = vmatmul.mubr.bf16.gmra.mrb[0].mxu0 %v4489
        %v4618 = vpop.f32.mrb[0].mxu0
        %v4619 = vadd.f32 0.0, %v4618
        %v4620 = vpop.f32.mrb[0].mxu0
        %v4621 = vpop.f32.mrb[0].mxu0
        %v4622 = vadd.f32 0.0, %v4621
        %v4623 = vpop.f32.mrb[0].mxu0
        %4624 = vmatprep.mubr.bf16.mxu0 0
        %4625 = vmatmul.mubr.bf16.gmra.mrb[0].mxu0 %v4490
        %v4626 = vpop.f32.mrb[0].mxu0
        %v4627 = vadd.f32 0.0, %v4626
        %v4628 = vpop.f32.mrb[0].mxu0
        %v4629 = vpop.f32.mrb[0].mxu0
        %v4630 = vadd.f32 0.0, %v4629
        %v4631 = vpop.f32.mrb[0].mxu0
        %4632 = vmatprep.mubr.bf16.mxu0 0
        %4633 = vmatmul.mubr.bf16.gmra.mrb[0].mxu0 %v4491
        %v4634 = vpop.f32.mrb[0].mxu0
        %v4635 = vadd.f32 0.0, %v4634
        %v4636 = vpop.f32.mrb[0].mxu0
        %v4637 = vpop.f32.mrb[0].mxu0
        %v4638 = vadd.f32 0.0, %v4637
        %v4639 = vpop.f32.mrb[0].mxu0
        %4640 = vmatprep.mubr.bf16.mxu0 0
        %4641 = vmatmul.mubr.bf16.gmra.mrb[0].mxu0 %v4492
        %v4642 = vpop.f32.mrb[0].mxu0
        %v4643 = vadd.f32 0.0, %v4642
        %v4644 = vpop.f32.mrb[0].mxu0
        %v4645 = vpop.f32.mrb[0].mxu0
        %v4646 = vadd.f32 0.0, %v4645
        %v4647 = vpop.f32.mrb[0].mxu0
        %4648 = vmatprep.mubr.bf16.mxu0 0
        %4649 = vmatmul.mubr.bf16.gmra.mrb[0].mxu0 %v4493
        %v4650 = vpop.f32.mrb[0].mxu0
        %v4651 = vadd.f32 0.0, %v4650
        %v4652 = vpop.f32.mrb[0].mxu0
        %v4653 = vpop.f32.mrb[0].mxu0
        %v4654 = vadd.f32 0.0, %v4653
        %v4655 = vpop.f32.mrb[0].mxu0
        %4656 = vmatprep.mubr.bf16.mxu0 0
        %4657 = vmatmul.mubr.bf16.gmra.mrb[0].mxu0 %v4494
        %v4658 = vpop.f32.mrb[0].mxu0
        %v4659 = vadd.f32 0.0, %v4658
        %v4660 = vpop.f32.mrb[0].mxu0
        %v4661 = vpop.f32.mrb[0].mxu0
        %v4662 = vadd.f32 0.0, %v4661
        %v4663 = vpop.f32.mrb[0].mxu0
        %4664 = vmatprep.mubr.bf16.mxu0 0
        %4665 = vmatmul.mubr.bf16.gmra.mrb[0].mxu0 %v4495
        %v4666 = vpop.f32.mrb[0].mxu0
        %v4667 = vadd.f32 0.0, %v4666
        %v4668 = vpop.f32.mrb[0].mxu0
        %v4669 = vpop.f32.mrb[0].mxu0
        %v4670 = vadd.f32 0.0, %v4669
        %v4671 = vpop.f32.mrb[0].mxu0
        %4672 = vmatprep.mubr.bf16.mxu0 0
        %4673 = vmatmul.mubr.bf16.gmra.mrb[0].mxu0 %v4496
        %v4674 = vpop.f32.mrb[0].mxu0
        %v4675 = vadd.f32 0.0, %v4674
        %v4676 = vpop.f32.mrb[0].mxu0
        %v4677 = vpop.f32.mrb[0].mxu0
        %v4678 = vadd.f32 0.0, %v4677
        %v4679 = vpop.f32.mrb[0].mxu0
        %4680 = vmatprep.mubr.bf16.mxu0 0
        %4681 = vmatmul.mubr.bf16.gmra.mrb[0].mxu0 %v4497
        %v4682 = vpop.f32.mrb[0].mxu0
        %v4683 = vadd.f32 0.0, %v4682
        %v4684 = vpop.f32.mrb[0].mxu0
        %v4685 = vpop.f32.mrb[0].mxu0
        %v4686 = vadd.f32 0.0, %v4685
        %v4687 = vpop.f32.mrb[0].mxu0
        %4688 = vmatprep.mubr.bf16.mxu0 0
        %4689 = vmatmul.mubr.bf16.gmra.mrb[0].mxu0 %v4498
        %v4690 = vpop.f32.mrb[0].mxu0
        %v4691 = vadd.f32 0.0, %v4690
        %v4692 = vpop.f32.mrb[0].mxu0
        %v4693 = vpop.f32.mrb[0].mxu0
        %v4694 = vadd.f32 0.0, %v4693
        %v4695 = vpop.f32.mrb[0].mxu0
        %4696 = vmatprep.mubr.bf16.mxu0 0
        %4697 = vmatmul.mubr.bf16.gmra.mrb[0].mxu0 %v4499
        %v4698 = vpop.f32.mrb[0].mxu0
        %v4699 = vadd.f32 0.0, %v4698
        %v4700 = vpop.f32.mrb[0].mxu0
        %v4701 = vpop.f32.mrb[0].mxu0
        %v4702 = vadd.f32 0.0, %v4701
        %v4703 = vpop.f32.mrb[0].mxu0
        %4704 = vmatprep.mubr.bf16.mxu0 0
        %4705 = vmatmul.mubr.bf16.gmra.mrb[0].mxu0 %v4500
        %v4706 = vpop.f32.mrb[0].mxu0
        %v4707 = vadd.f32 0.0, %v4706
        %v4708 = vpop.f32.mrb[0].mxu0
        %v4709 = vpop.f32.mrb[0].mxu0
        %v4710 = vadd.f32 0.0, %v4709
        %v4711 = vpop.f32.mrb[0].mxu0
        %4712 = vmatprep.mubr.bf16.mxu0 0
        %4713 = vmatmul.mubr.bf16.gmra.mrb[0].mxu0 %v4501
        %v4714 = vpop.f32.mrb[0].mxu0
        %v4715 = vadd.f32 0.0, %v4714
        %v4716 = vpop.f32.mrb[0].mxu0
        %v4717 = vpop.f32.mrb[0].mxu0
        %v4718 = vadd.f32 0.0, %v4717
        %v4719 = vpop.f32.mrb[0].mxu0
        %4720 = vmatprep.mubr.bf16.mxu0 0
        %4721 = vmatmul.mubr.bf16.gmra.mrb[0].mxu0 %v4502
        %v4722 = vpop.f32.mrb[0].mxu0
        %v4723 = vadd.f32 0.0, %v4722
        %v4724 = vpop.f32.mrb[0].mxu0
        %v4725 = vpop.f32.mrb[0].mxu0
        %v4726 = vadd.f32 0.0, %v4725
        %v4727 = vpop.f32.mrb[0].mxu0
        %4728 = vdwg.mxu0
        %v4729 = vpack.c.bf16 %v4606, %v4603
        %v4730 = vpack.c.bf16 %v4614, %v4611
        %v4731 = vpack.c.bf16 %v4622, %v4619
        %v4732 = vpack.c.bf16 %v4630, %v4627
        %v4733 = vpack.c.bf16 %v4638, %v4635
        %v4734 = vpack.c.bf16 %v4646, %v4643
        %v4735 = vpack.c.bf16 %v4654, %v4651
        %v4736 = vpack.c.bf16 %v4662, %v4659
        %v4737 = vpack.c.bf16 %v4670, %v4667
        %v4738 = vpack.c.bf16 %v4678, %v4675
        %v4739 = vpack.c.bf16 %v4686, %v4683
        %v4740 = vpack.c.bf16 %v4694, %v4691
        %v4741 = vpack.c.bf16 %v4702, %v4699
        %v4742 = vpack.c.bf16 %v4710, %v4707
        %v4743 = vpack.c.bf16 %v4718, %v4715
        %v4744 = vpack.c.bf16 %v4726, %v4723
        %4745 = vmatprep.subr.bf16.mxu0 0
        %4746 = vmatpush1.bf16.msra.mxu0 %v4729
        %4747 = vmatprep.subr.bf16.mxu0 0
        %4748 = vmatpush1.bf16.msra.mxu0 0
        %4749 = vmatprep.subr.bf16.mxu0 0
        %4750 = vmatpush1.bf16.msra.mxu0 0
        %4751 = vmatprep.subr.bf16.mxu0 0
        %4752 = vmatpush1.bf16.msra.mxu0 0
        %4753 = vmatprep.subr.bf16.mxu0 0
        %4754 = vmatpush1.bf16.msra.mxu0 0
        %4755 = vmatprep.subr.bf16.mxu0 0
        %4756 = vmatpush1.bf16.msra.mxu0 0
        %4757 = vmatprep.subr.bf16.mxu0 0
        %4758 = vmatpush1.bf16.msra.mxu0 0
        %4759 = vmatprep.subr.bf16.mxu0 0
        %4760 = vmatpush1.bf16.msra.mxu0 0
        %4761 = vmatprep.subr.bf16.mxu0 0
        %4762 = vmatpush1.bf16.msra.mxu0 0
        %4763 = vmatprep.subr.bf16.mxu0 0
        %4764 = vmatpush1.bf16.msra.mxu0 0
        %4765 = vmatprep.subr.bf16.mxu0 0
        %4766 = vmatpush1.bf16.msra.mxu0 0
        %4767 = vmatprep.subr.bf16.mxu0 0
        %4768 = vmatpush1.bf16.msra.mxu0 0
        %4769 = vmatprep.subr.bf16.mxu0 0
        %4770 = vmatpush1.bf16.msra.mxu0 0
        %4771 = vmatprep.subr.bf16.mxu0 0
        %4772 = vmatpush1.bf16.msra.mxu0 0
        %4773 = vmatprep.subr.bf16.mxu0 0
        %4774 = vmatpush1.bf16.msra.mxu0 0
        %4775 = vmatprep.subr.bf16.mxu0 0
        %4776 = vmatpush1.bf16.msra.mxu0 0
        %4777 = vmatprep.mubr.bf16.mxu0 0
        %4778 = vmatmul.mubr.bf16.gmra.mrb[0].mxu0 %v1076
        %v4779 = vpop.f32.mrb[0].mxu0
        %v4780 = vadd.f32 0.0, %v4779
        %v4781 = vpop.f32.mrb[0].mxu0
        %v4782 = vpop.f32.mrb[0].mxu0
        %v4783 = vadd.f32 0.0, %v4782
        %v4784 = vpop.f32.mrb[0].mxu0
        %4785 = vdwg.mxu0
        %4786 = vmatprep.subr.bf16.mxu0 0
        %4787 = vmatpush1.bf16.msra.mxu0 %v4730
        %4788 = vmatprep.subr.bf16.mxu0 0
        %4789 = vmatpush1.bf16.msra.mxu0 0
        %4790 = vmatprep.subr.bf16.mxu0 0
        %4791 = vmatpush1.bf16.msra.mxu0 0
        %4792 = vmatprep.subr.bf16.mxu0 0
        %4793 = vmatpush1.bf16.msra.mxu0 0
        %4794 = vmatprep.subr.bf16.mxu0 0
        %4795 = vmatpush1.bf16.msra.mxu0 0
        %4796 = vmatprep.subr.bf16.mxu0 0
        %4797 = vmatpush1.bf16.msra.mxu0 0
        %4798 = vmatprep.subr.bf16.mxu0 0
        %4799 = vmatpush1.bf16.msra.mxu0 0
        %4800 = vmatprep.subr.bf16.mxu0 0
        %4801 = vmatpush1.bf16.msra.mxu0 0
        %4802 = vmatprep.subr.bf16.mxu0 0
        %4803 = vmatpush1.bf16.msra.mxu0 0
        %4804 = vmatprep.subr.bf16.mxu0 0
        %4805 = vmatpush1.bf16.msra.mxu0 0
        %4806 = vmatprep.subr.bf16.mxu0 0
        %4807 = vmatpush1.bf16.msra.mxu0 0
        %4808 = vmatprep.subr.bf16.mxu0 0
        %4809 = vmatpush1.bf16.msra.mxu0 0
        %4810 = vmatprep.subr.bf16.mxu0 0
        %4811 = vmatpush1.bf16.msra.mxu0 0
        %4812 = vmatprep.subr.bf16.mxu0 0
        %4813 = vmatpush1.bf16.msra.mxu0 0
        %4814 = vmatprep.subr.bf16.mxu0 0
        %4815 = vmatpush1.bf16.msra.mxu0 0
        %4816 = vmatprep.subr.bf16.mxu0 0
        %4817 = vmatpush1.bf16.msra.mxu0 0
        %4818 = vmatprep.mubr.bf16.mxu0 0
        %4819 = vmatmul.mubr.bf16.gmra.mrb[0].mxu0 %v1125
        %v4820 = vpop.f32.mrb[0].mxu0
        %v4821 = vadd.f32 0.0, %v4820
        %v4822 = vpop.f32.mrb[0].mxu0
        %v4823 = vpop.f32.mrb[0].mxu0
        %v4824 = vadd.f32 0.0, %v4823
        %v4825 = vpop.f32.mrb[0].mxu0
        %4826 = vdwg.mxu0
        %4827 = vmatprep.subr.bf16.mxu0 0
        %4828 = vmatpush1.bf16.msra.mxu0 %v4731
        %4829 = vmatprep.subr.bf16.mxu0 0
        %4830 = vmatpush1.bf16.msra.mxu0 0
        %4831 = vmatprep.subr.bf16.mxu0 0
        %4832 = vmatpush1.bf16.msra.mxu0 0
        %4833 = vmatprep.subr.bf16.mxu0 0
        %4834 = vmatpush1.bf16.msra.mxu0 0
        %4835 = vmatprep.subr.bf16.mxu0 0
        %4836 = vmatpush1.bf16.msra.mxu0 0
        %4837 = vmatprep.subr.bf16.mxu0 0
        %4838 = vmatpush1.bf16.msra.mxu0 0
        %4839 = vmatprep.subr.bf16.mxu0 0
        %4840 = vmatpush1.bf16.msra.mxu0 0
        %4841 = vmatprep.subr.bf16.mxu0 0
        %4842 = vmatpush1.bf16.msra.mxu0 0
        %4843 = vmatprep.subr.bf16.mxu0 0
        %4844 = vmatpush1.bf16.msra.mxu0 0
        %4845 = vmatprep.subr.bf16.mxu0 0
        %4846 = vmatpush1.bf16.msra.mxu0 0
        %4847 = vmatprep.subr.bf16.mxu0 0
        %4848 = vmatpush1.bf16.msra.mxu0 0
        %4849 = vmatprep.subr.bf16.mxu0 0
        %4850 = vmatpush1.bf16.msra.mxu0 0
        %4851 = vmatprep.subr.bf16.mxu0 0
        %4852 = vmatpush1.bf16.msra.mxu0 0
        %4853 = vmatprep.subr.bf16.mxu0 0
        %4854 = vmatpush1.bf16.msra.mxu0 0
        %4855 = vmatprep.subr.bf16.mxu0 0
        %4856 = vmatpush1.bf16.msra.mxu0 0
        %4857 = vmatprep.subr.bf16.mxu0 0
        %4858 = vmatpush1.bf16.msra.mxu0 0
        %4859 = vmatprep.mubr.bf16.mxu0 0
        %4860 = vmatmul.mubr.bf16.gmra.mrb[0].mxu0 %v1174
        %v4861 = vpop.f32.mrb[0].mxu0
        %v4862 = vadd.f32 0.0, %v4861
        %v4863 = vpop.f32.mrb[0].mxu0
        %v4864 = vpop.f32.mrb[0].mxu0
        %v4865 = vadd.f32 0.0, %v4864
        %v4866 = vpop.f32.mrb[0].mxu0
        %4867 = vdwg.mxu0
        %4868 = vmatprep.subr.bf16.mxu0 0
        %4869 = vmatpush1.bf16.msra.mxu0 %v4732
        %4870 = vmatprep.subr.bf16.mxu0 0
        %4871 = vmatpush1.bf16.msra.mxu0 0
        %4872 = vmatprep.subr.bf16.mxu0 0
        %4873 = vmatpush1.bf16.msra.mxu0 0
        %4874 = vmatprep.subr.bf16.mxu0 0
        %4875 = vmatpush1.bf16.msra.mxu0 0
        %4876 = vmatprep.subr.bf16.mxu0 0
        %4877 = vmatpush1.bf16.msra.mxu0 0
        %4878 = vmatprep.subr.bf16.mxu0 0
        %4879 = vmatpush1.bf16.msra.mxu0 0
        %4880 = vmatprep.subr.bf16.mxu0 0
        %4881 = vmatpush1.bf16.msra.mxu0 0
        %4882 = vmatprep.subr.bf16.mxu0 0
        %4883 = vmatpush1.bf16.msra.mxu0 0
        %4884 = vmatprep.subr.bf16.mxu0 0
        %4885 = vmatpush1.bf16.msra.mxu0 0
        %4886 = vmatprep.subr.bf16.mxu0 0
        %4887 = vmatpush1.bf16.msra.mxu0 0
        %4888 = vmatprep.subr.bf16.mxu0 0
        %4889 = vmatpush1.bf16.msra.mxu0 0
        %4890 = vmatprep.subr.bf16.mxu0 0
        %4891 = vmatpush1.bf16.msra.mxu0 0
        %4892 = vmatprep.subr.bf16.mxu0 0
        %4893 = vmatpush1.bf16.msra.mxu0 0
        %4894 = vmatprep.subr.bf16.mxu0 0
        %4895 = vmatpush1.bf16.msra.mxu0 0
        %4896 = vmatprep.subr.bf16.mxu0 0
        %4897 = vmatpush1.bf16.msra.mxu0 0
        %4898 = vmatprep.subr.bf16.mxu0 0
        %4899 = vmatpush1.bf16.msra.mxu0 0
        %4900 = vmatprep.mubr.bf16.mxu0 0
        %4901 = vmatmul.mubr.bf16.gmra.mrb[0].mxu0 %v1223
        %v4902 = vpop.f32.mrb[0].mxu0
        %v4903 = vadd.f32 0.0, %v4902
        %v4904 = vpop.f32.mrb[0].mxu0
        %v4905 = vpop.f32.mrb[0].mxu0
        %v4906 = vadd.f32 0.0, %v4905
        %v4907 = vpop.f32.mrb[0].mxu0
        %4908 = vdwg.mxu0
        %4909 = vmatprep.subr.bf16.mxu0 0
        %4910 = vmatpush1.bf16.msra.mxu0 %v4733
        %4911 = vmatprep.subr.bf16.mxu0 0
        %4912 = vmatpush1.bf16.msra.mxu0 0
        %4913 = vmatprep.subr.bf16.mxu0 0
        %4914 = vmatpush1.bf16.msra.mxu0 0
        %4915 = vmatprep.subr.bf16.mxu0 0
        %4916 = vmatpush1.bf16.msra.mxu0 0
        %4917 = vmatprep.subr.bf16.mxu0 0
        %4918 = vmatpush1.bf16.msra.mxu0 0
        %4919 = vmatprep.subr.bf16.mxu0 0
        %4920 = vmatpush1.bf16.msra.mxu0 0
        %4921 = vmatprep.subr.bf16.mxu0 0
        %4922 = vmatpush1.bf16.msra.mxu0 0
        %4923 = vmatprep.subr.bf16.mxu0 0
        %4924 = vmatpush1.bf16.msra.mxu0 0
        %4925 = vmatprep.subr.bf16.mxu0 0
        %4926 = vmatpush1.bf16.msra.mxu0 0
        %4927 = vmatprep.subr.bf16.mxu0 0
        %4928 = vmatpush1.bf16.msra.mxu0 0
        %4929 = vmatprep.subr.bf16.mxu0 0
        %4930 = vmatpush1.bf16.msra.mxu0 0
        %4931 = vmatprep.subr.bf16.mxu0 0
        %4932 = vmatpush1.bf16.msra.mxu0 0
        %4933 = vmatprep.subr.bf16.mxu0 0
        %4934 = vmatpush1.bf16.msra.mxu0 0
        %4935 = vmatprep.subr.bf16.mxu0 0
        %4936 = vmatpush1.bf16.msra.mxu0 0
        %4937 = vmatprep.subr.bf16.mxu0 0
        %4938 = vmatpush1.bf16.msra.mxu0 0
        %4939 = vmatprep.subr.bf16.mxu0 0
        %4940 = vmatpush1.bf16.msra.mxu0 0
        %4941 = vmatprep.mubr.bf16.mxu0 0
        %4942 = vmatmul.mubr.bf16.gmra.mrb[0].mxu0 %v1272
        %v4943 = vpop.f32.mrb[0].mxu0
        %v4944 = vadd.f32 0.0, %v4943
        %v4945 = vpop.f32.mrb[0].mxu0
        %v4946 = vpop.f32.mrb[0].mxu0
        %v4947 = vadd.f32 0.0, %v4946
        %v4948 = vpop.f32.mrb[0].mxu0
        %4949 = vdwg.mxu0
        %4950 = vmatprep.subr.bf16.mxu0 0
        %4951 = vmatpush1.bf16.msra.mxu0 %v4734
        %4952 = vmatprep.subr.bf16.mxu0 0
        %4953 = vmatpush1.bf16.msra.mxu0 0
        %4954 = vmatprep.subr.bf16.mxu0 0
        %4955 = vmatpush1.bf16.msra.mxu0 0
        %4956 = vmatprep.subr.bf16.mxu0 0
        %4957 = vmatpush1.bf16.msra.mxu0 0
        %4958 = vmatprep.subr.bf16.mxu0 0
        %4959 = vmatpush1.bf16.msra.mxu0 0
        %4960 = vmatprep.subr.bf16.mxu0 0
        %4961 = vmatpush1.bf16.msra.mxu0 0
        %4962 = vmatprep.subr.bf16.mxu0 0
        %4963 = vmatpush1.bf16.msra.mxu0 0
        %4964 = vmatprep.subr.bf16.mxu0 0
        %4965 = vmatpush1.bf16.msra.mxu0 0
        %4966 = vmatprep.subr.bf16.mxu0 0
        %4967 = vmatpush1.bf16.msra.mxu0 0
        %4968 = vmatprep.subr.bf16.mxu0 0
        %4969 = vmatpush1.bf16.msra.mxu0 0
        %4970 = vmatprep.subr.bf16.mxu0 0
        %4971 = vmatpush1.bf16.msra.mxu0 0
        %4972 = vmatprep.subr.bf16.mxu0 0
        %4973 = vmatpush1.bf16.msra.mxu0 0
        %4974 = vmatprep.subr.bf16.mxu0 0
        %4975 = vmatpush1.bf16.msra.mxu0 0
        %4976 = vmatprep.subr.bf16.mxu0 0
        %4977 = vmatpush1.bf16.msra.mxu0 0
        %4978 = vmatprep.subr.bf16.mxu0 0
        %4979 = vmatpush1.bf16.msra.mxu0 0
        %4980 = vmatprep.subr.bf16.mxu0 0
        %4981 = vmatpush1.bf16.msra.mxu0 0
        %4982 = vmatprep.mubr.bf16.mxu0 0
        %4983 = vmatmul.mubr.bf16.gmra.mrb[0].mxu0 %v1321
        %v4984 = vpop.f32.mrb[0].mxu0
        %v4985 = vadd.f32 0.0, %v4984
        %v4986 = vpop.f32.mrb[0].mxu0
        %v4987 = vpop.f32.mrb[0].mxu0
        %v4988 = vadd.f32 0.0, %v4987
        %v4989 = vpop.f32.mrb[0].mxu0
        %4990 = vdwg.mxu0
        %4991 = vmatprep.subr.bf16.mxu0 0
        %4992 = vmatpush1.bf16.msra.mxu0 %v4735
        %4993 = vmatprep.subr.bf16.mxu0 0
        %4994 = vmatpush1.bf16.msra.mxu0 0
        %4995 = vmatprep.subr.bf16.mxu0 0
        %4996 = vmatpush1.bf16.msra.mxu0 0
        %4997 = vmatprep.subr.bf16.mxu0 0
        %4998 = vmatpush1.bf16.msra.mxu0 0
        %4999 = vmatprep.subr.bf16.mxu0 0
        %5000 = vmatpush1.bf16.msra.mxu0 0
        %5001 = vmatprep.subr.bf16.mxu0 0
        %5002 = vmatpush1.bf16.msra.mxu0 0
        %5003 = vmatprep.subr.bf16.mxu0 0
        %5004 = vmatpush1.bf16.msra.mxu0 0
        %5005 = vmatprep.subr.bf16.mxu0 0
        %5006 = vmatpush1.bf16.msra.mxu0 0
        %5007 = vmatprep.subr.bf16.mxu0 0
        %5008 = vmatpush1.bf16.msra.mxu0 0
        %5009 = vmatprep.subr.bf16.mxu0 0
        %5010 = vmatpush1.bf16.msra.mxu0 0
        %5011 = vmatprep.subr.bf16.mxu0 0
        %5012 = vmatpush1.bf16.msra.mxu0 0
        %5013 = vmatprep.subr.bf16.mxu0 0
        %5014 = vmatpush1.bf16.msra.mxu0 0
        %5015 = vmatprep.subr.bf16.mxu0 0
        %5016 = vmatpush1.bf16.msra.mxu0 0
        %5017 = vmatprep.subr.bf16.mxu0 0
        %5018 = vmatpush1.bf16.msra.mxu0 0
        %5019 = vmatprep.subr.bf16.mxu0 0
        %5020 = vmatpush1.bf16.msra.mxu0 0
        %5021 = vmatprep.subr.bf16.mxu0 0
        %5022 = vmatpush1.bf16.msra.mxu0 0
        %5023 = vmatprep.mubr.bf16.mxu0 0
        %5024 = vmatmul.mubr.bf16.gmra.mrb[0].mxu0 %v1370
        %v5025 = vpop.f32.mrb[0].mxu0
        %v5026 = vadd.f32 0.0, %v5025
        %v5027 = vpop.f32.mrb[0].mxu0
        %v5028 = vpop.f32.mrb[0].mxu0
        %v5029 = vadd.f32 0.0, %v5028
        %v5030 = vpop.f32.mrb[0].mxu0
        %5031 = vdwg.mxu0
        %5032 = vmatprep.subr.bf16.mxu0 0
        %5033 = vmatpush1.bf16.msra.mxu0 %v4736
        %5034 = vmatprep.subr.bf16.mxu0 0
        %5035 = vmatpush1.bf16.msra.mxu0 0
        %5036 = vmatprep.subr.bf16.mxu0 0
        %5037 = vmatpush1.bf16.msra.mxu0 0
        %5038 = vmatprep.subr.bf16.mxu0 0
        %5039 = vmatpush1.bf16.msra.mxu0 0
        %5040 = vmatprep.subr.bf16.mxu0 0
        %5041 = vmatpush1.bf16.msra.mxu0 0
        %5042 = vmatprep.subr.bf16.mxu0 0
        %5043 = vmatpush1.bf16.msra.mxu0 0
        %5044 = vmatprep.subr.bf16.mxu0 0
        %5045 = vmatpush1.bf16.msra.mxu0 0
        %5046 = vmatprep.subr.bf16.mxu0 0
        %5047 = vmatpush1.bf16.msra.mxu0 0
        %5048 = vmatprep.subr.bf16.mxu0 0
        %5049 = vmatpush1.bf16.msra.mxu0 0
        %5050 = vmatprep.subr.bf16.mxu0 0
        %5051 = vmatpush1.bf16.msra.mxu0 0
        %5052 = vmatprep.subr.bf16.mxu0 0
        %5053 = vmatpush1.bf16.msra.mxu0 0
        %5054 = vmatprep.subr.bf16.mxu0 0
        %5055 = vmatpush1.bf16.msra.mxu0 0
        %5056 = vmatprep.subr.bf16.mxu0 0
        %5057 = vmatpush1.bf16.msra.mxu0 0
        %5058 = vmatprep.subr.bf16.mxu0 0
        %5059 = vmatpush1.bf16.msra.mxu0 0
        %5060 = vmatprep.subr.bf16.mxu0 0
        %5061 = vmatpush1.bf16.msra.mxu0 0
        %5062 = vmatprep.subr.bf16.mxu0 0
        %5063 = vmatpush1.bf16.msra.mxu0 0
        %5064 = vmatprep.mubr.bf16.mxu0 0
        %5065 = vmatmul.mubr.bf16.gmra.mrb[0].mxu0 %v1419
        %v5066 = vpop.f32.mrb[0].mxu0
        %v5067 = vadd.f32 0.0, %v5066
        %v5068 = vpop.f32.mrb[0].mxu0
        %v5069 = vpop.f32.mrb[0].mxu0
        %v5070 = vadd.f32 0.0, %v5069
        %v5071 = vpop.f32.mrb[0].mxu0
        %5072 = vdwg.mxu0
        %5073 = vmatprep.subr.bf16.mxu0 0
        %5074 = vmatpush1.bf16.msra.mxu0 %v4737
        %5075 = vmatprep.subr.bf16.mxu0 0
        %5076 = vmatpush1.bf16.msra.mxu0 0
        %5077 = vmatprep.subr.bf16.mxu0 0
        %5078 = vmatpush1.bf16.msra.mxu0 0
        %5079 = vmatprep.subr.bf16.mxu0 0
        %5080 = vmatpush1.bf16.msra.mxu0 0
        %5081 = vmatprep.subr.bf16.mxu0 0
        %5082 = vmatpush1.bf16.msra.mxu0 0
        %5083 = vmatprep.subr.bf16.mxu0 0
        %5084 = vmatpush1.bf16.msra.mxu0 0
        %5085 = vmatprep.subr.bf16.mxu0 0
        %5086 = vmatpush1.bf16.msra.mxu0 0
        %5087 = vmatprep.subr.bf16.mxu0 0
        %5088 = vmatpush1.bf16.msra.mxu0 0
        %5089 = vmatprep.subr.bf16.mxu0 0
        %5090 = vmatpush1.bf16.msra.mxu0 0
        %5091 = vmatprep.subr.bf16.mxu0 0
        %5092 = vmatpush1.bf16.msra.mxu0 0
        %5093 = vmatprep.subr.bf16.mxu0 0
        %5094 = vmatpush1.bf16.msra.mxu0 0
        %5095 = vmatprep.subr.bf16.mxu0 0
        %5096 = vmatpush1.bf16.msra.mxu0 0
        %5097 = vmatprep.subr.bf16.mxu0 0
        %5098 = vmatpush1.bf16.msra.mxu0 0
        %5099 = vmatprep.subr.bf16.mxu0 0
        %5100 = vmatpush1.bf16.msra.mxu0 0
        %5101 = vmatprep.subr.bf16.mxu0 0
        %5102 = vmatpush1.bf16.msra.mxu0 0
        %5103 = vmatprep.subr.bf16.mxu0 0
        %5104 = vmatpush1.bf16.msra.mxu0 0
        %5105 = vmatprep.mubr.bf16.mxu0 0
        %5106 = vmatmul.mubr.bf16.gmra.mrb[0].mxu0 %v1468
        %v5107 = vpop.f32.mrb[0].mxu0
        %v5108 = vadd.f32 0.0, %v5107
        %v5109 = vpop.f32.mrb[0].mxu0
        %v5110 = vpop.f32.mrb[0].mxu0
        %v5111 = vadd.f32 0.0, %v5110
        %v5112 = vpop.f32.mrb[0].mxu0
        %5113 = vdwg.mxu0
        %5114 = vmatprep.subr.bf16.mxu0 0
        %5115 = vmatpush1.bf16.msra.mxu0 %v4738
        %5116 = vmatprep.subr.bf16.mxu0 0
        %5117 = vmatpush1.bf16.msra.mxu0 0
        %5118 = vmatprep.subr.bf16.mxu0 0
        %5119 = vmatpush1.bf16.msra.mxu0 0
        %5120 = vmatprep.subr.bf16.mxu0 0
        %5121 = vmatpush1.bf16.msra.mxu0 0
        %5122 = vmatprep.subr.bf16.mxu0 0
        %5123 = vmatpush1.bf16.msra.mxu0 0
        %5124 = vmatprep.subr.bf16.mxu0 0
        %5125 = vmatpush1.bf16.msra.mxu0 0
        %5126 = vmatprep.subr.bf16.mxu0 0
        %5127 = vmatpush1.bf16.msra.mxu0 0
        %5128 = vmatprep.subr.bf16.mxu0 0
        %5129 = vmatpush1.bf16.msra.mxu0 0
        %5130 = vmatprep.subr.bf16.mxu0 0
        %5131 = vmatpush1.bf16.msra.mxu0 0
        %5132 = vmatprep.subr.bf16.mxu0 0
        %5133 = vmatpush1.bf16.msra.mxu0 0
        %5134 = vmatprep.subr.bf16.mxu0 0
        %5135 = vmatpush1.bf16.msra.mxu0 0
        %5136 = vmatprep.subr.bf16.mxu0 0
        %5137 = vmatpush1.bf16.msra.mxu0 0
        %5138 = vmatprep.subr.bf16.mxu0 0
        %5139 = vmatpush1.bf16.msra.mxu0 0
        %5140 = vmatprep.subr.bf16.mxu0 0
        %5141 = vmatpush1.bf16.msra.mxu0 0
        %5142 = vmatprep.subr.bf16.mxu0 0
        %5143 = vmatpush1.bf16.msra.mxu0 0
        %5144 = vmatprep.subr.bf16.mxu0 0
        %5145 = vmatpush1.bf16.msra.mxu0 0
        %5146 = vmatprep.mubr.bf16.mxu0 0
        %5147 = vmatmul.mubr.bf16.gmra.mrb[0].mxu0 %v1517
        %v5148 = vpop.f32.mrb[0].mxu0
        %v5149 = vadd.f32 0.0, %v5148
        %v5150 = vpop.f32.mrb[0].mxu0
        %v5151 = vpop.f32.mrb[0].mxu0
        %v5152 = vadd.f32 0.0, %v5151
        %v5153 = vpop.f32.mrb[0].mxu0
        %5154 = vdwg.mxu0
        %5155 = vmatprep.subr.bf16.mxu0 0
        %5156 = vmatpush1.bf16.msra.mxu0 %v4739
        %5157 = vmatprep.subr.bf16.mxu0 0
        %5158 = vmatpush1.bf16.msra.mxu0 0
        %5159 = vmatprep.subr.bf16.mxu0 0
        %5160 = vmatpush1.bf16.msra.mxu0 0
        %5161 = vmatprep.subr.bf16.mxu0 0
        %5162 = vmatpush1.bf16.msra.mxu0 0
        %5163 = vmatprep.subr.bf16.mxu0 0
        %5164 = vmatpush1.bf16.msra.mxu0 0
        %5165 = vmatprep.subr.bf16.mxu0 0
        %5166 = vmatpush1.bf16.msra.mxu0 0
        %5167 = vmatprep.subr.bf16.mxu0 0
        %5168 = vmatpush1.bf16.msra.mxu0 0
        %5169 = vmatprep.subr.bf16.mxu0 0
        %5170 = vmatpush1.bf16.msra.mxu0 0
        %5171 = vmatprep.subr.bf16.mxu0 0
        %5172 = vmatpush1.bf16.msra.mxu0 0
        %5173 = vmatprep.subr.bf16.mxu0 0
        %5174 = vmatpush1.bf16.msra.mxu0 0
        %5175 = vmatprep.subr.bf16.mxu0 0
        %5176 = vmatpush1.bf16.msra.mxu0 0
        %5177 = vmatprep.subr.bf16.mxu0 0
        %5178 = vmatpush1.bf16.msra.mxu0 0
        %5179 = vmatprep.subr.bf16.mxu0 0
        %5180 = vmatpush1.bf16.msra.mxu0 0
        %5181 = vmatprep.subr.bf16.mxu0 0
        %5182 = vmatpush1.bf16.msra.mxu0 0
        %5183 = vmatprep.subr.bf16.mxu0 0
        %5184 = vmatpush1.bf16.msra.mxu0 0
        %5185 = vmatprep.subr.bf16.mxu0 0
        %5186 = vmatpush1.bf16.msra.mxu0 0
        %5187 = vmatprep.mubr.bf16.mxu0 0
        %5188 = vmatmul.mubr.bf16.gmra.mrb[0].mxu0 %v1566
        %v5189 = vpop.f32.mrb[0].mxu0
        %v5190 = vadd.f32 0.0, %v5189
        %v5191 = vpop.f32.mrb[0].mxu0
        %v5192 = vpop.f32.mrb[0].mxu0
        %v5193 = vadd.f32 0.0, %v5192
        %v5194 = vpop.f32.mrb[0].mxu0
        %5195 = vdwg.mxu0
        %5196 = vmatprep.subr.bf16.mxu0 0
        %5197 = vmatpush1.bf16.msra.mxu0 %v4740
        %5198 = vmatprep.subr.bf16.mxu0 0
        %5199 = vmatpush1.bf16.msra.mxu0 0
        %5200 = vmatprep.subr.bf16.mxu0 0
        %5201 = vmatpush1.bf16.msra.mxu0 0
        %5202 = vmatprep.subr.bf16.mxu0 0
        %5203 = vmatpush1.bf16.msra.mxu0 0
        %5204 = vmatprep.subr.bf16.mxu0 0
        %5205 = vmatpush1.bf16.msra.mxu0 0
        %5206 = vmatprep.subr.bf16.mxu0 0
        %5207 = vmatpush1.bf16.msra.mxu0 0
        %5208 = vmatprep.subr.bf16.mxu0 0
        %5209 = vmatpush1.bf16.msra.mxu0 0
        %5210 = vmatprep.subr.bf16.mxu0 0
        %5211 = vmatpush1.bf16.msra.mxu0 0
        %5212 = vmatprep.subr.bf16.mxu0 0
        %5213 = vmatpush1.bf16.msra.mxu0 0
        %5214 = vmatprep.subr.bf16.mxu0 0
        %5215 = vmatpush1.bf16.msra.mxu0 0
        %5216 = vmatprep.subr.bf16.mxu0 0
        %5217 = vmatpush1.bf16.msra.mxu0 0
        %5218 = vmatprep.subr.bf16.mxu0 0
        %5219 = vmatpush1.bf16.msra.mxu0 0
        %5220 = vmatprep.subr.bf16.mxu0 0
        %5221 = vmatpush1.bf16.msra.mxu0 0
        %5222 = vmatprep.subr.bf16.mxu0 0
        %5223 = vmatpush1.bf16.msra.mxu0 0
        %5224 = vmatprep.subr.bf16.mxu0 0
        %5225 = vmatpush1.bf16.msra.mxu0 0
        %5226 = vmatprep.subr.bf16.mxu0 0
        %5227 = vmatpush1.bf16.msra.mxu0 0
        %5228 = vmatprep.mubr.bf16.mxu0 0
        %5229 = vmatmul.mubr.bf16.gmra.mrb[0].mxu0 %v1615
        %v5230 = vpop.f32.mrb[0].mxu0
        %v5231 = vadd.f32 0.0, %v5230
        %v5232 = vpop.f32.mrb[0].mxu0
        %v5233 = vpop.f32.mrb[0].mxu0
        %v5234 = vadd.f32 0.0, %v5233
        %v5235 = vpop.f32.mrb[0].mxu0
        %5236 = vdwg.mxu0
        %5237 = vmatprep.subr.bf16.mxu0 0
        %5238 = vmatpush1.bf16.msra.mxu0 %v4741
        %5239 = vmatprep.subr.bf16.mxu0 0
        %5240 = vmatpush1.bf16.msra.mxu0 0
        %5241 = vmatprep.subr.bf16.mxu0 0
        %5242 = vmatpush1.bf16.msra.mxu0 0
        %5243 = vmatprep.subr.bf16.mxu0 0
        %5244 = vmatpush1.bf16.msra.mxu0 0
        %5245 = vmatprep.subr.bf16.mxu0 0
        %5246 = vmatpush1.bf16.msra.mxu0 0
        %5247 = vmatprep.subr.bf16.mxu0 0
        %5248 = vmatpush1.bf16.msra.mxu0 0
        %5249 = vmatprep.subr.bf16.mxu0 0
        %5250 = vmatpush1.bf16.msra.mxu0 0
        %5251 = vmatprep.subr.bf16.mxu0 0
        %5252 = vmatpush1.bf16.msra.mxu0 0
        %5253 = vmatprep.subr.bf16.mxu0 0
        %5254 = vmatpush1.bf16.msra.mxu0 0
        %5255 = vmatprep.subr.bf16.mxu0 0
        %5256 = vmatpush1.bf16.msra.mxu0 0
        %5257 = vmatprep.subr.bf16.mxu0 0
        %5258 = vmatpush1.bf16.msra.mxu0 0
        %5259 = vmatprep.subr.bf16.mxu0 0
        %5260 = vmatpush1.bf16.msra.mxu0 0
        %5261 = vmatprep.subr.bf16.mxu0 0
        %5262 = vmatpush1.bf16.msra.mxu0 0
        %5263 = vmatprep.subr.bf16.mxu0 0
        %5264 = vmatpush1.bf16.msra.mxu0 0
        %5265 = vmatprep.subr.bf16.mxu0 0
        %5266 = vmatpush1.bf16.msra.mxu0 0
        %5267 = vmatprep.subr.bf16.mxu0 0
        %5268 = vmatpush1.bf16.msra.mxu0 0
        %5269 = vmatprep.mubr.bf16.mxu0 0
        %5270 = vmatmul.mubr.bf16.gmra.mrb[0].mxu0 %v1664
        %v5271 = vpop.f32.mrb[0].mxu0
        %v5272 = vadd.f32 0.0, %v5271
        %v5273 = vpop.f32.mrb[0].mxu0
        %v5274 = vpop.f32.mrb[0].mxu0
        %v5275 = vadd.f32 0.0, %v5274
        %v5276 = vpop.f32.mrb[0].mxu0
        %5277 = vdwg.mxu0
        %5278 = vmatprep.subr.bf16.mxu0 0
        %5279 = vmatpush1.bf16.msra.mxu0 %v4742
        %5280 = vmatprep.subr.bf16.mxu0 0
        %5281 = vmatpush1.bf16.msra.mxu0 0
        %5282 = vmatprep.subr.bf16.mxu0 0
        %5283 = vmatpush1.bf16.msra.mxu0 0
        %5284 = vmatprep.subr.bf16.mxu0 0
        %5285 = vmatpush1.bf16.msra.mxu0 0
        %5286 = vmatprep.subr.bf16.mxu0 0
        %5287 = vmatpush1.bf16.msra.mxu0 0
        %5288 = vmatprep.subr.bf16.mxu0 0
        %5289 = vmatpush1.bf16.msra.mxu0 0
        %5290 = vmatprep.subr.bf16.mxu0 0
        %5291 = vmatpush1.bf16.msra.mxu0 0
        %5292 = vmatprep.subr.bf16.mxu0 0
        %5293 = vmatpush1.bf16.msra.mxu0 0
        %5294 = vmatprep.subr.bf16.mxu0 0
        %5295 = vmatpush1.bf16.msra.mxu0 0
        %5296 = vmatprep.subr.bf16.mxu0 0
        %5297 = vmatpush1.bf16.msra.mxu0 0
        %5298 = vmatprep.subr.bf16.mxu0 0
        %5299 = vmatpush1.bf16.msra.mxu0 0
        %5300 = vmatprep.subr.bf16.mxu0 0
        %5301 = vmatpush1.bf16.msra.mxu0 0
        %5302 = vmatprep.subr.bf16.mxu0 0
        %5303 = vmatpush1.bf16.msra.mxu0 0
        %5304 = vmatprep.subr.bf16.mxu0 0
        %5305 = vmatpush1.bf16.msra.mxu0 0
        %5306 = vmatprep.subr.bf16.mxu0 0
        %5307 = vmatpush1.bf16.msra.mxu0 0
        %5308 = vmatprep.subr.bf16.mxu0 0
        %5309 = vmatpush1.bf16.msra.mxu0 0
        %5310 = vmatprep.mubr.bf16.mxu0 0
        %5311 = vmatmul.mubr.bf16.gmra.mrb[0].mxu0 %v1713
        %v5312 = vpop.f32.mrb[0].mxu0
        %v5313 = vadd.f32 0.0, %v5312
        %v5314 = vpop.f32.mrb[0].mxu0
        %v5315 = vpop.f32.mrb[0].mxu0
        %v5316 = vadd.f32 0.0, %v5315
        %v5317 = vpop.f32.mrb[0].mxu0
        %5318 = vdwg.mxu0
        %5319 = vmatprep.subr.bf16.mxu0 0
        %5320 = vmatpush1.bf16.msra.mxu0 %v4743
        %5321 = vmatprep.subr.bf16.mxu0 0
        %5322 = vmatpush1.bf16.msra.mxu0 0
        %5323 = vmatprep.subr.bf16.mxu0 0
        %5324 = vmatpush1.bf16.msra.mxu0 0
        %5325 = vmatprep.subr.bf16.mxu0 0
        %5326 = vmatpush1.bf16.msra.mxu0 0
        %5327 = vmatprep.subr.bf16.mxu0 0
        %5328 = vmatpush1.bf16.msra.mxu0 0
        %5329 = vmatprep.subr.bf16.mxu0 0
        %5330 = vmatpush1.bf16.msra.mxu0 0
        %5331 = vmatprep.subr.bf16.mxu0 0
        %5332 = vmatpush1.bf16.msra.mxu0 0
        %5333 = vmatprep.subr.bf16.mxu0 0
        %5334 = vmatpush1.bf16.msra.mxu0 0
        %5335 = vmatprep.subr.bf16.mxu0 0
        %5336 = vmatpush1.bf16.msra.mxu0 0
        %5337 = vmatprep.subr.bf16.mxu0 0
        %5338 = vmatpush1.bf16.msra.mxu0 0
        %5339 = vmatprep.subr.bf16.mxu0 0
        %5340 = vmatpush1.bf16.msra.mxu0 0
        %5341 = vmatprep.subr.bf16.mxu0 0
        %5342 = vmatpush1.bf16.msra.mxu0 0
        %5343 = vmatprep.subr.bf16.mxu0 0
        %5344 = vmatpush1.bf16.msra.mxu0 0
        %5345 = vmatprep.subr.bf16.mxu0 0
        %5346 = vmatpush1.bf16.msra.mxu0 0
        %5347 = vmatprep.subr.bf16.mxu0 0
        %5348 = vmatpush1.bf16.msra.mxu0 0
        %5349 = vmatprep.subr.bf16.mxu0 0
        %5350 = vmatpush1.bf16.msra.mxu0 0
        %5351 = vmatprep.mubr.bf16.mxu0 0
        %5352 = vmatmul.mubr.bf16.gmra.mrb[0].mxu0 %v1762
        %v5353 = vpop.f32.mrb[0].mxu0
        %v5354 = vadd.f32 0.0, %v5353
        %v5355 = vpop.f32.mrb[0].mxu0
        %v5356 = vpop.f32.mrb[0].mxu0
        %v5357 = vadd.f32 0.0, %v5356
        %v5358 = vpop.f32.mrb[0].mxu0
        %5359 = vdwg.mxu0
        %5360 = vmatprep.subr.bf16.mxu0 0
        %5361 = vmatpush1.bf16.msra.mxu0 %v4744
        %5362 = vmatprep.subr.bf16.mxu0 0
        %5363 = vmatpush1.bf16.msra.mxu0 0
        %5364 = vmatprep.subr.bf16.mxu0 0
        %5365 = vmatpush1.bf16.msra.mxu0 0
        %5366 = vmatprep.subr.bf16.mxu0 0
        %5367 = vmatpush1.bf16.msra.mxu0 0
        %5368 = vmatprep.subr.bf16.mxu0 0
        %5369 = vmatpush1.bf16.msra.mxu0 0
        %5370 = vmatprep.subr.bf16.mxu0 0
        %5371 = vmatpush1.bf16.msra.mxu0 0
        %5372 = vmatprep.subr.bf16.mxu0 0
        %5373 = vmatpush1.bf16.msra.mxu0 0
        %5374 = vmatprep.subr.bf16.mxu0 0
        %5375 = vmatpush1.bf16.msra.mxu0 0
        %5376 = vmatprep.subr.bf16.mxu0 0
        %5377 = vmatpush1.bf16.msra.mxu0 0
        %5378 = vmatprep.subr.bf16.mxu0 0
        %5379 = vmatpush1.bf16.msra.mxu0 0
        %5380 = vmatprep.subr.bf16.mxu0 0
        %5381 = vmatpush1.bf16.msra.mxu0 0
        %5382 = vmatprep.subr.bf16.mxu0 0
        %5383 = vmatpush1.bf16.msra.mxu0 0
        %5384 = vmatprep.subr.bf16.mxu0 0
        %5385 = vmatpush1.bf16.msra.mxu0 0
        %5386 = vmatprep.subr.bf16.mxu0 0
        %5387 = vmatpush1.bf16.msra.mxu0 0
        %5388 = vmatprep.subr.bf16.mxu0 0
        %5389 = vmatpush1.bf16.msra.mxu0 0
        %5390 = vmatprep.subr.bf16.mxu0 0
        %5391 = vmatpush1.bf16.msra.mxu0 0
        %5392 = vmatprep.mubr.bf16.mxu0 0
        %5393 = vmatmul.mubr.bf16.gmra.mrb[0].mxu0 %v1811
        %v5394 = vpop.f32.mrb[0].mxu0
        %v5395 = vadd.f32 0.0, %v5394
        %v5396 = vpop.f32.mrb[0].mxu0
        %v5397 = vpop.f32.mrb[0].mxu0
        %v5398 = vadd.f32 0.0, %v5397
        %v5399 = vpop.f32.mrb[0].mxu0
        %5400 = vdwg.mxu0
        %s5401 = scalar_lea.vmem %s6, 3
        %v5402 = vld [vmem:[%s5401] sm:$0x1]
        %v5404 = vlaneseq
        %v5405 = vshrl.u32 %v5404, 7
        %v5406 = vsub.s32 0, %v5405
        %v5407 = vrot.slane %v5402, %v5406
        %v5409 = vadd.f32 %v4780, %v5407
        %v5410 = vadd.f32 %v4783, %v5407
        %v5411 = vadd.f32 %v4821, %v5407
        %v5412 = vadd.f32 %v4824, %v5407
        %v5413 = vadd.f32 %v4862, %v5407
        %v5414 = vadd.f32 %v4865, %v5407
        %v5415 = vadd.f32 %v4903, %v5407
        %v5416 = vadd.f32 %v4906, %v5407
        %v5417 = vadd.f32 %v4944, %v5407
        %v5418 = vadd.f32 %v4947, %v5407
        %v5419 = vadd.f32 %v4985, %v5407
        %v5420 = vadd.f32 %v4988, %v5407
        %v5421 = vadd.f32 %v5026, %v5407
        %v5422 = vadd.f32 %v5029, %v5407
        %v5423 = vadd.f32 %v5067, %v5407
        %v5424 = vadd.f32 %v5070, %v5407
        %v5425 = vadd.f32 %v5108, %v5407
        %v5426 = vadd.f32 %v5111, %v5407
        %v5427 = vadd.f32 %v5149, %v5407
        %v5428 = vadd.f32 %v5152, %v5407
        %v5429 = vadd.f32 %v5190, %v5407
        %v5430 = vadd.f32 %v5193, %v5407
        %v5431 = vadd.f32 %v5231, %v5407
        %v5432 = vadd.f32 %v5234, %v5407
        %v5433 = vadd.f32 %v5272, %v5407
        %v5434 = vadd.f32 %v5275, %v5407
        %v5435 = vadd.f32 %v5313, %v5407
        %v5436 = vadd.f32 %v5316, %v5407
        %v5437 = vadd.f32 %v5354, %v5407
        %v5438 = vadd.f32 %v5357, %v5407
        %v5439 = vadd.f32 %v5395, %v5407
        %v5440 = vadd.f32 %v5398, %v5407
        %v5441 = vmul.f32 %v5409, %v1896
        %v5442 = vmul.f32 %v5410, %v1901
        %v5443 = vmul.f32 %v5411, %v1906
        %v5444 = vmul.f32 %v5412, %v1911
        %v5445 = vmul.f32 %v5413, %v1916
        %v5446 = vmul.f32 %v5414, %v1921
        %v5447 = vmul.f32 %v5415, %v1926
        %v5448 = vmul.f32 %v5416, %v1931
        %v5449 = vmul.f32 %v5417, %v1936
        %v5450 = vmul.f32 %v5418, %v1941
        %v5451 = vmul.f32 %v5419, %v1946
        %v5452 = vmul.f32 %v5420, %v1951
        %v5453 = vmul.f32 %v5421, %v1956
        %v5454 = vmul.f32 %v5422, %v1961
        %v5455 = vmul.f32 %v5423, %v1966
        %v5456 = vmul.f32 %v5424, %v1971
        %v5457 = vmul.f32 %v5425, %v1976
        %v5458 = vmul.f32 %v5426, %v1981
        %v5459 = vmul.f32 %v5427, %v1986
        %v5460 = vmul.f32 %v5428, %v1991
        %v5461 = vmul.f32 %v5429, %v1996
        %v5462 = vmul.f32 %v5430, %v2001
        %v5463 = vmul.f32 %v5431, %v2006
        %v5464 = vmul.f32 %v5432, %v2011
        %v5465 = vmul.f32 %v5433, %v2016
        %v5466 = vmul.f32 %v5434, %v2021
        %v5467 = vmul.f32 %v5435, %v2026
        %v5468 = vmul.f32 %v5436, %v2031
        %v5469 = vmul.f32 %v5437, %v2036
        %v5470 = vmul.f32 %v5438, %v2041
        %v5471 = vmul.f32 %v5439, %v2046
        %v5472 = vmul.f32 %v5440, %v2051
        %s5473 = scalar_lea.vmem %s7, 3
        %v5474 = vld [vmem:[%s5473] sm:$0x1]
        %v5476 = vlaneseq
        %v5477 = vshrl.u32 %v5476, 7
        %v5478 = vsub.s32 0, %v5477
        %v5479 = vrot.slane %v5474, %v5478
        %v5481 = vmul.f32 %v5441, %v5479
        %v5482 = vmul.f32 %v5442, %v5479
        %v5483 = vmul.f32 %v5443, %v5479
        %v5484 = vmul.f32 %v5444, %v5479
        %v5485 = vmul.f32 %v5445, %v5479
        %v5486 = vmul.f32 %v5446, %v5479
        %v5487 = vmul.f32 %v5447, %v5479
        %v5488 = vmul.f32 %v5448, %v5479
        %v5489 = vmul.f32 %v5449, %v5479
        %v5490 = vmul.f32 %v5450, %v5479
        %v5491 = vmul.f32 %v5451, %v5479
        %v5492 = vmul.f32 %v5452, %v5479
        %v5493 = vmul.f32 %v5453, %v5479
        %v5494 = vmul.f32 %v5454, %v5479
        %v5495 = vmul.f32 %v5455, %v5479
        %v5496 = vmul.f32 %v5456, %v5479
        %v5497 = vmul.f32 %v5457, %v5479
        %v5498 = vmul.f32 %v5458, %v5479
        %v5499 = vmul.f32 %v5459, %v5479
        %v5500 = vmul.f32 %v5460, %v5479
        %v5501 = vmul.f32 %v5461, %v5479
        %v5502 = vmul.f32 %v5462, %v5479
        %v5503 = vmul.f32 %v5463, %v5479
        %v5504 = vmul.f32 %v5464, %v5479
        %v5505 = vmul.f32 %v5465, %v5479
        %v5506 = vmul.f32 %v5466, %v5479
        %v5507 = vmul.f32 %v5467, %v5479
        %v5508 = vmul.f32 %v5468, %v5479
        %v5509 = vmul.f32 %v5469, %v5479
        %v5510 = vmul.f32 %v5470, %v5479
        %v5511 = vmul.f32 %v5471, %v5479
        %v5512 = vmul.f32 %v5472, %v5479
        %s5513 = scalar_lea.vmem %s8, 3
        %v5514 = vld [vmem:[%s5513] sm:$0x1]
        %v5516 = vlaneseq
        %v5517 = vshrl.u32 %v5516, 7
        %v5518 = vsub.s32 0, %v5517
        %v5519 = vrot.slane %v5514, %v5518
        %v5521 = vadd.f32 %v5481, %v5519
        %v5522 = vadd.f32 %v5482, %v5519
        %v5523 = vadd.f32 %v5483, %v5519
        %v5524 = vadd.f32 %v5484, %v5519
        %v5525 = vadd.f32 %v5485, %v5519
        %v5526 = vadd.f32 %v5486, %v5519
        %v5527 = vadd.f32 %v5487, %v5519
        %v5528 = vadd.f32 %v5488, %v5519
        %v5529 = vadd.f32 %v5489, %v5519
        %v5530 = vadd.f32 %v5490, %v5519
        %v5531 = vadd.f32 %v5491, %v5519
        %v5532 = vadd.f32 %v5492, %v5519
        %v5533 = vadd.f32 %v5493, %v5519
        %v5534 = vadd.f32 %v5494, %v5519
        %v5535 = vadd.f32 %v5495, %v5519
        %v5536 = vadd.f32 %v5496, %v5519
        %v5537 = vadd.f32 %v5497, %v5519
        %v5538 = vadd.f32 %v5498, %v5519
        %v5539 = vadd.f32 %v5499, %v5519
        %v5540 = vadd.f32 %v5500, %v5519
        %v5541 = vadd.f32 %v5501, %v5519
        %v5542 = vadd.f32 %v5502, %v5519
        %v5543 = vadd.f32 %v5503, %v5519
        %v5544 = vadd.f32 %v5504, %v5519
        %v5545 = vadd.f32 %v5505, %v5519
        %v5546 = vadd.f32 %v5506, %v5519
        %v5547 = vadd.f32 %v5507, %v5519
        %v5548 = vadd.f32 %v5508, %v5519
        %v5549 = vadd.f32 %v5509, %v5519
        %v5550 = vadd.f32 %v5510, %v5519
        %v5551 = vadd.f32 %v5511, %v5519
        %v5552 = vadd.f32 %v5512, %v5519
        %v5553 = vmax.f32 %v5521, 0.0
        %v5554 = vmax.f32 %v5522, 0.0
        %v5555 = vmax.f32 %v5523, 0.0
        %v5556 = vmax.f32 %v5524, 0.0
        %v5557 = vmax.f32 %v5525, 0.0
        %v5558 = vmax.f32 %v5526, 0.0
        %v5559 = vmax.f32 %v5527, 0.0
        %v5560 = vmax.f32 %v5528, 0.0
        %v5561 = vmax.f32 %v5529, 0.0
        %v5562 = vmax.f32 %v5530, 0.0
        %v5563 = vmax.f32 %v5531, 0.0
        %v5564 = vmax.f32 %v5532, 0.0
        %v5565 = vmax.f32 %v5533, 0.0
        %v5566 = vmax.f32 %v5534, 0.0
        %v5567 = vmax.f32 %v5535, 0.0
        %v5568 = vmax.f32 %v5536, 0.0
        %v5569 = vmax.f32 %v5537, 0.0
        %v5570 = vmax.f32 %v5538, 0.0
        %v5571 = vmax.f32 %v5539, 0.0
        %v5572 = vmax.f32 %v5540, 0.0
        %v5573 = vmax.f32 %v5541, 0.0
        %v5574 = vmax.f32 %v5542, 0.0
        %v5575 = vmax.f32 %v5543, 0.0
        %v5576 = vmax.f32 %v5544, 0.0
        %v5577 = vmax.f32 %v5545, 0.0
        %v5578 = vmax.f32 %v5546, 0.0
        %v5579 = vmax.f32 %v5547, 0.0
        %v5580 = vmax.f32 %v5548, 0.0
        %v5581 = vmax.f32 %v5549, 0.0
        %v5582 = vmax.f32 %v5550, 0.0
        %v5583 = vmax.f32 %v5551, 0.0
        %v5584 = vmax.f32 %v5552, 0.0
        %v5585 = vadd.f32 %v4455, %v5553
        %v5586 = vadd.f32 %v4456, %v5554
        %v5587 = vadd.f32 %v4457, %v5555
        %v5588 = vadd.f32 %v4458, %v5556
        %v5589 = vadd.f32 %v4459, %v5557
        %v5590 = vadd.f32 %v4460, %v5558
        %v5591 = vadd.f32 %v4461, %v5559
        %v5592 = vadd.f32 %v4462, %v5560
        %v5593 = vadd.f32 %v4463, %v5561
        %v5594 = vadd.f32 %v4464, %v5562
        %v5595 = vadd.f32 %v4465, %v5563
        %v5596 = vadd.f32 %v4466, %v5564
        %v5597 = vadd.f32 %v4467, %v5565
        %v5598 = vadd.f32 %v4468, %v5566
        %v5599 = vadd.f32 %v4469, %v5567
        %v5600 = vadd.f32 %v4470, %v5568
        %v5601 = vadd.f32 %v4471, %v5569
        %v5602 = vadd.f32 %v4472, %v5570
        %v5603 = vadd.f32 %v4473, %v5571
        %v5604 = vadd.f32 %v4474, %v5572
        %v5605 = vadd.f32 %v4475, %v5573
        %v5606 = vadd.f32 %v4476, %v5574
        %v5607 = vadd.f32 %v4477, %v5575
        %v5608 = vadd.f32 %v4478, %v5576
        %v5609 = vadd.f32 %v4479, %v5577
        %v5610 = vadd.f32 %v4480, %v5578
        %v5611 = vadd.f32 %v4481, %v5579
        %v5612 = vadd.f32 %v4482, %v5580
        %v5613 = vadd.f32 %v4483, %v5581
        %v5614 = vadd.f32 %v4484, %v5582
        %v5615 = vadd.f32 %v4485, %v5583
        %v5616 = vadd.f32 %v4486, %v5584
        %v5617 = vadd.f32 %v5585, %v5586
        %v5618 = vrot.slane %v5617, 4
        %v5619 = vadd.f32 %v5617, %v5618
        %v5620 = vrot.slane %v5619, 2
        %v5621 = vadd.f32 %v5619, %v5620
        %v5622 = vrot.slane %v5621, 1
        %v5623 = vadd.f32 %v5621, %v5622
        %v5624 = vadd.f32 %v5587, %v5588
        %v5625 = vrot.slane %v5624, 4
        %v5626 = vadd.f32 %v5624, %v5625
        %v5627 = vrot.slane %v5626, 2
        %v5628 = vadd.f32 %v5626, %v5627
        %v5629 = vrot.slane %v5628, 1
        %v5630 = vadd.f32 %v5628, %v5629
        %v5631 = vadd.f32 %v5589, %v5590
        %v5632 = vrot.slane %v5631, 4
        %v5633 = vadd.f32 %v5631, %v5632
        %v5634 = vrot.slane %v5633, 2
        %v5635 = vadd.f32 %v5633, %v5634
        %v5636 = vrot.slane %v5635, 1
        %v5637 = vadd.f32 %v5635, %v5636
        %v5638 = vadd.f32 %v5591, %v5592
        %v5639 = vrot.slane %v5638, 4
        %v5640 = vadd.f32 %v5638, %v5639
        %v5641 = vrot.slane %v5640, 2
        %v5642 = vadd.f32 %v5640, %v5641
        %v5643 = vrot.slane %v5642, 1
        %v5644 = vadd.f32 %v5642, %v5643
        %v5645 = vadd.f32 %v5593, %v5594
        %v5646 = vrot.slane %v5645, 4
        %v5647 = vadd.f32 %v5645, %v5646
        %v5648 = vrot.slane %v5647, 2
        %v5649 = vadd.f32 %v5647, %v5648
        %v5650 = vrot.slane %v5649, 1
        %v5651 = vadd.f32 %v5649, %v5650
        %v5652 = vadd.f32 %v5595, %v5596
        %v5653 = vrot.slane %v5652, 4
        %v5654 = vadd.f32 %v5652, %v5653
        %v5655 = vrot.slane %v5654, 2
        %v5656 = vadd.f32 %v5654, %v5655
        %v5657 = vrot.slane %v5656, 1
        %v5658 = vadd.f32 %v5656, %v5657
        %v5659 = vadd.f32 %v5597, %v5598
        %v5660 = vrot.slane %v5659, 4
        %v5661 = vadd.f32 %v5659, %v5660
        %v5662 = vrot.slane %v5661, 2
        %v5663 = vadd.f32 %v5661, %v5662
        %v5664 = vrot.slane %v5663, 1
        %v5665 = vadd.f32 %v5663, %v5664
        %v5666 = vadd.f32 %v5599, %v5600
        %v5667 = vrot.slane %v5666, 4
        %v5668 = vadd.f32 %v5666, %v5667
        %v5669 = vrot.slane %v5668, 2
        %v5670 = vadd.f32 %v5668, %v5669
        %v5671 = vrot.slane %v5670, 1
        %v5672 = vadd.f32 %v5670, %v5671
        %v5673 = vadd.f32 %v5601, %v5602
        %v5674 = vrot.slane %v5673, 4
        %v5675 = vadd.f32 %v5673, %v5674
        %v5676 = vrot.slane %v5675, 2
        %v5677 = vadd.f32 %v5675, %v5676
        %v5678 = vrot.slane %v5677, 1
        %v5679 = vadd.f32 %v5677, %v5678
        %v5680 = vadd.f32 %v5603, %v5604
        %v5681 = vrot.slane %v5680, 4
        %v5682 = vadd.f32 %v5680, %v5681
        %v5683 = vrot.slane %v5682, 2
        %v5684 = vadd.f32 %v5682, %v5683
        %v5685 = vrot.slane %v5684, 1
        %v5686 = vadd.f32 %v5684, %v5685
        %v5687 = vadd.f32 %v5605, %v5606
        %v5688 = vrot.slane %v5687, 4
        %v5689 = vadd.f32 %v5687, %v5688
        %v5690 = vrot.slane %v5689, 2
        %v5691 = vadd.f32 %v5689, %v5690
        %v5692 = vrot.slane %v5691, 1
        %v5693 = vadd.f32 %v5691, %v5692
        %v5694 = vadd.f32 %v5607, %v5608
        %v5695 = vrot.slane %v5694, 4
        %v5696 = vadd.f32 %v5694, %v5695
        %v5697 = vrot.slane %v5696, 2
        %v5698 = vadd.f32 %v5696, %v5697
        %v5699 = vrot.slane %v5698, 1
        %v5700 = vadd.f32 %v5698, %v5699
        %v5701 = vadd.f32 %v5609, %v5610
        %v5702 = vrot.slane %v5701, 4
        %v5703 = vadd.f32 %v5701, %v5702
        %v5704 = vrot.slane %v5703, 2
        %v5705 = vadd.f32 %v5703, %v5704
        %v5706 = vrot.slane %v5705, 1
        %v5707 = vadd.f32 %v5705, %v5706
        %v5708 = vadd.f32 %v5611, %v5612
        %v5709 = vrot.slane %v5708, 4
        %v5710 = vadd.f32 %v5708, %v5709
        %v5711 = vrot.slane %v5710, 2
        %v5712 = vadd.f32 %v5710, %v5711
        %v5713 = vrot.slane %v5712, 1
        %v5714 = vadd.f32 %v5712, %v5713
        %v5715 = vadd.f32 %v5613, %v5614
        %v5716 = vrot.slane %v5715, 4
        %v5717 = vadd.f32 %v5715, %v5716
        %v5718 = vrot.slane %v5717, 2
        %v5719 = vadd.f32 %v5717, %v5718
        %v5720 = vrot.slane %v5719, 1
        %v5721 = vadd.f32 %v5719, %v5720
        %v5722 = vadd.f32 %v5615, %v5616
        %v5723 = vrot.slane %v5722, 4
        %v5724 = vadd.f32 %v5722, %v5723
        %v5725 = vrot.slane %v5724, 2
        %v5726 = vadd.f32 %v5724, %v5725
        %v5727 = vrot.slane %v5726, 1
        %v5728 = vadd.f32 %v5726, %v5727
        %v5729 = vrcp.pop 16.0
        %v5730 = vmul.f32 %v5623, %v5729
        %v5731 = vmul.f32 %v5630, %v5729
        %v5732 = vmul.f32 %v5637, %v5729
        %v5733 = vmul.f32 %v5644, %v5729
        %v5734 = vmul.f32 %v5651, %v5729
        %v5735 = vmul.f32 %v5658, %v5729
        %v5736 = vmul.f32 %v5665, %v5729
        %v5737 = vmul.f32 %v5672, %v5729
        %v5738 = vmul.f32 %v5679, %v5729
        %v5739 = vmul.f32 %v5686, %v5729
        %v5740 = vmul.f32 %v5693, %v5729
        %v5741 = vmul.f32 %v5700, %v5729
        %v5742 = vmul.f32 %v5707, %v5729
        %v5743 = vmul.f32 %v5714, %v5729
        %v5744 = vmul.f32 %v5721, %v5729
        %v5745 = vmul.f32 %v5728, %v5729
        %vm5762 = vcmask 1041409
        %v5763 = vsel %vm5762, %v5731, %v5730
        %vm5764 = vcmask 1042434
        %v5765 = vsel %vm5764, %v5732, %v5763
        %vm5766 = vcmask 1043459
        %v5767 = vsel %vm5766, %v5733, %v5765
        %vm5768 = vcmask 1044484
        %v5769 = vsel %vm5768, %v5734, %v5767
        %vm5770 = vcmask 1045509
        %v5771 = vsel %vm5770, %v5735, %v5769
        %vm5772 = vcmask 1046534
        %v5773 = vsel %vm5772, %v5736, %v5771
        %vm5774 = vcmask 1047559
        %v5775 = vsel %vm5774, %v5737, %v5773
        %v5776 = vsel %vm5762, %v5739, %v5738
        %v5777 = vsel %vm5764, %v5740, %v5776
        %v5778 = vsel %vm5766, %v5741, %v5777
        %v5779 = vsel %vm5768, %v5742, %v5778
        %v5780 = vsel %vm5770, %v5743, %v5779
        %v5781 = vsel %vm5772, %v5744, %v5780
        %v5782 = vsel %vm5774, %v5745, %v5781
        %5785 = vst [vmem:[%s360] sm:$0xff] %v5775
        %5786 = vst [vmem:[%s360 + $0x8] sm:$0xff] %v5782
        %s5787 = sand.u32 %s235, 1
        %s5788 = scalar_lea.sflag [#allocation3], %s5787
        %s5789 = sand.u32 %s235, 1
        %s5790 = smul.addr %s5789, 16
        %s5791 = scalar_lea.vmem [#allocation2], %s5790
        // Predicated region
        $region57: #{tpu_custom_call.1} parent=55 // pred_check
          %p5792 = pneg %p245
        $region58: #{tpu_custom_call.1} parent=55 // pred_check_branch
          %5794 = sbr.rel (%p5792) target = $region60
        $region59: #{tpu_custom_call.1} parent=55 // pred_region
          %s5795 = smul.u32 2, %s23
          %s5797 = ssub.s32 256, 256
          %5798 = vsyncadd %s5788, %s5797
          %s5799 = smul.addr %s5795, 128
          %s5800 = scalar_lea.hbm %s9, %s5799
          %s5801 = sshll.u32 %s5791, 4
          %s5802 = int_to_ptr.vmem [resolvable:$true] %s5801
          %5807 = dma.vmem_to_hbm [thread:$0]  %s5802, 256, %s5800, %s5788, 128, 128, 8
        $region60: #{tpu_custom_call.1} parent=55 // pred_fallthru
          _
      $region56: #{tpu_custom_call.1} parent=5 // pred_fallthru
        _
      %p5808 = scmp.le.s32.totalorder 2, %s18
      // Predicated region
      $region61: #{tpu_custom_call.1} parent=5 // pred_check
        %p5809 = pneg %p5808
      $region62: #{tpu_custom_call.1} parent=5 // pred_check_branch
        %5811 = sbr.rel (%p5809) target = $region64
      $region63: #{tpu_custom_call.1} parent=5 // pred_region
        %s5812 = ssub.s32 %s18, 2
        // Predicated region
        $region65: #{tpu_custom_call.1} parent=63 // pred_check
          %p5813 = pneg %p251
        $region66: #{tpu_custom_call.1} parent=63 // pred_check_branch
          %5815 = sbr.rel (%p5813) target = $region68
        $region67: #{tpu_custom_call.1} parent=63 // pred_region
          %s5816 = sand.u32 %s236, 1
          %s5817 = scalar_lea.sflag [#allocation3], %s5816
          %s5818 = sand.u32 %s236, 1
          %s5819 = smul.addr %s5818, 16
          %s5820 = scalar_lea.vmem [#allocation2], %s5819
          %5821 = dma.done %s5817, 256
        $region68: #{tpu_custom_call.1} parent=63 // pred_fallthru
          _
      $region64: #{tpu_custom_call.1} parent=5 // pred_fallthru
        _
    $region6: #{tpu_custom_call.1} parent=1 // loop_footer
      %s22 = sadd.s32 1, %s18
    $region7: #{tpu_custom_call.1} parent=1 // loop_footer_branch
      %17 = sbr.rel target = $region3
    $region8: #{tpu_custom_call.1} parent=1 // loop_exit
      _
    %5822 = vsyncpa [#allocation3], 1
    %s5823 = scalar_lea.sflag [#allocation3], 1
    %5824 = vsyncpa %s5823, 1

</llo_original>
